<compile_context>
chip_gen: v7x
topology: tpu7x:2x2x1
jax: 0.10.0
libtpu: 0.0.40
codegen_flags: <defaults>
</compile_context>

<pallas_src>
import jax
import jax.numpy as jnp
from jax.experimental import pallas as pl
from jax.experimental.pallas import tpu as pltpu

H = 32          # hidden_size
V = 64          # output_size (vocab size)
L = 15          # MAX_LENGTH
LP = 16         # attention block padded to a clean 16-lane width
LANES = 128
FUSE = 2 * LANES  # 256: width of the fused hidden-side RHS / P1 precompute

# column layout of the fused 256-wide block (all sub-blocks vreg-friendly):
C_COMB = 0       # cols [  0, 32): comb_top  (embedded part of attention_combine)
C_ATT = 32       # cols [ 32, 47): attention logits; col 47 = -1e30 softmax pad
C_GATE = 128     # cols [128,160)=i, [160,192)=o, [192,224)=c  LSTM gate pre-acts


def _make_kernel(T):
    def kernel(e_ref, hid_ref, enc_ref, wh_ref, b1_ref, we_ref,
               wc_ref, wx_ref, wo_ref, bo_ref, out_ref):
        f32 = jnp.float32

        # one-time: token-dependent half of the fused matmul, all T steps at once
        p1 = jnp.dot(e_ref[...], we_ref[...],
                     preferred_element_type=f32) + b1_ref[...]        # (T, 256)

        enc = enc_ref[...]       # (16, H) padded encoder outputs (row 15 = 0)
        wh = wh_ref[...]         # (H, 256) hidden-side fused RHS
        wc = wc_ref[...]         # (H, H)   attention_combine bottom (attn_applied)
        wx = wx_ref[...]         # (H, 128) x-side LSTM gate RHS (i | o | c | 0)
        wo = wo_ref[...]         # (H, V)   output projection
        bo = bo_ref[...]         # (1, V)
        h = hid_ref[...]         # (1, H)   register loop-carry (never hits VMEM)

        logps, hss, aws = [], [], []
        for t in range(T):       # fully unrolled: T is small and static
            # fused matmul: attn logits + hidden part of LSTM gates (+ all biases)
            r = jnp.dot(h, wh, preferred_element_type=f32) + p1[t:t + 1, :]

            # softmax over the 16-lane attention block (pad col = -1e30 -> exp 0)
            al = r[:, C_ATT:C_ATT + LP]                               # (1, 16)
            m = jnp.max(al, axis=1, keepdims=True)
            ex = jnp.exp(al - m)
            aw = ex / jnp.sum(ex, axis=1, keepdims=True)              # exact

            # attn_applied = attn_weights @ encoder_outputs
            attn_applied = jnp.dot(aw, enc, preferred_element_type=f32)   # (1, H)

            # output = relu(attention_combine(cat(embedded, attn_applied)))
            comb = r[:, C_COMB:C_COMB + H] + jnp.dot(
                attn_applied, wc, preferred_element_type=f32)
            x = jnp.maximum(comb, 0.0)                                # (1, H)

            # custom LSTM cell; pre_cell == 0 so the forget gate is dead
            g = jnp.dot(x, wx, preferred_element_type=f32) + r[:, C_GATE:C_GATE + LANES]
            i_t = jax.nn.sigmoid(g[:, 0:H])
            o_t = jax.nn.sigmoid(g[:, H:2 * H])
            c_hat = jnp.tanh(g[:, 2 * H:3 * H])
            c_t = i_t * c_hat
            h = o_t * jnp.tanh(c_t)           # new hidden (LSTM dropout == identity)

            # log_softmax(out(h_t), dim=1)
            logits = jnp.dot(h, wo, preferred_element_type=f32) + bo  # (1, V)
            mo = jnp.max(logits, axis=1, keepdims=True)
            lse = jnp.log(jnp.sum(jnp.exp(logits - mo), axis=1, keepdims=True)) + mo

            logps.append(logits - lse)
            hss.append(h)
            aws.append(aw)

        # single lane-dense (T, 128) store: [logp | h | attn_w(16) | 0-pad]
        pad = jnp.zeros((T, LANES - V - H - LP), jnp.float32)
        out_ref[...] = jnp.concatenate(
            [jnp.concatenate(logps, axis=0),
             jnp.concatenate(hss, axis=0),
             jnp.concatenate(aws, axis=0),
             pad], axis=1)

    return kernel


def _whole(shape):
    return pl.BlockSpec(shape, lambda i: (0,) * len(shape))


def attn_decoder_decode(tokens, hidden, encoder_outputs, emb, packed):
    """Runs T chained AttnDecoderRNN.forward steps (T = tokens.shape[0]) inside
    one single-program pallas_call.  T == 1 reproduces the torch single forward.

    tokens: (T,) int32; hidden: (1,1,H) f32; encoder_outputs: (L,H) f32.
    Returns (log_softmax (T,V), hidden_states (T,H), attn_weights (T,L)).
    """
    T = int(tokens.shape[0])
    f32 = jnp.float32

    # embedding gather (dropout == identity in eval) done in the wrapper; the
    # embedded-side matmul itself runs inside the kernel as one batched push.
    e = jnp.take(emb.astype(f32), tokens.astype(jnp.int32), axis=0)       # (T, H)
    hid2d = hidden.reshape(1, H).astype(f32)
    enc = jnp.zeros((LP, H), f32).at[0:L, :].set(encoder_outputs.astype(f32))

    out = pl.pallas_call(
        _make_kernel(T),
        out_shape=jax.ShapeDtypeStruct((T, LANES), f32),
        grid_spec=pltpu.PrefetchScalarGridSpec(
            num_scalar_prefetch=0,
            grid=(1,),                         # single program; loop is in-kernel
            in_specs=[
                _whole((T, H)),        # gathered embeddings
                _whole((1, H)),        # initial hidden state
                _whole((LP, H)),       # padded encoder outputs
                _whole((H, FUSE)),     # hidden-side fused RHS (attn | gates)
                _whole((1, FUSE)),     # fused biases (+ -1e30 softmax pad column)
                _whole((H, FUSE)),     # embedded-side fused RHS (comb_top | attn)
                _whole((H, H)),        # attention_combine bottom (attn_applied part)
                _whole((H, LANES)),    # x-side LSTM gate weights (i | o | c | 0)
                _whole((H, V)),        # output projection
                _whole((1, V)),        # output bias
            ],
            out_specs=_whole((T, LANES)),
        ),
        compiler_params=pltpu.CompilerParams(
            dimension_semantics=("arbitrary",)),
    )(e, hid2d, enc, packed["WH"], packed["B1"], packed["WE"],
      packed["WC"], packed["WX"], packed["WO"], packed["BO"])

    logp = out[:, 0:V]
    hs = out[:, V:V + H]
    attn_w = out[:, V + H:V + H + L]
    return logp, hs, attn_w


def init_params(key):
    """Unpacked, torch-layout-equivalent parameters (weights stored (in, out))."""
    stdv = 1.0 / (H ** 0.5)
    s2 = 1.0 / ((2 * H) ** 0.5)
    ks = jax.random.split(key, 16)
    u = lambda k, shape, s: jax.random.uniform(k, shape, jnp.float32, -s, s)
    return {
        "emb":    jax.random.normal(ks[0], (V, H), jnp.float32),
        "w_attn": u(ks[1], (2 * H, L), s2),
        "b_attn": u(ks[2], (1, L), s2),
        "w_comb": u(ks[3], (2 * H, H), s2),     # 2H -> H (as the forward runs it)
        "b_comb": u(ks[4], (1, H), s2),
        # LSTM gates; forget-gate params omitted: pre_cell == 0 every forward,
        # so the f-gate never influences the output.
        "wx_i": u(ks[5], (H, H), stdv), "wh_i": u(ks[6], (H, H), stdv),
        "b_i": u(ks[7], (1, H), stdv),
        "wx_o": u(ks[8], (H, H), stdv), "wh_o": u(ks[9], (H, H), stdv),
        "b_o": u(ks[10], (1, H), stdv),
        "wx_c": u(ks[11], (H, H), stdv), "wh_c": u(ks[12], (H, H), stdv),
        "b_c": u(ks[13], (1, H), stdv),
        "w_out": u(ks[14], (H, V), stdv),
        "b_out": u(ks[15], (1, V), stdv),
    }


def pack_params(p):
    """Pack weights into lane-aligned VMEM-resident slabs for the kernel."""
    f32 = jnp.float32
    WE = jnp.zeros((H, FUSE), f32)   # embedded-side fused RHS (for P1 precompute)
    WH = jnp.zeros((H, FUSE), f32)   # hidden-side fused RHS
    B1 = jnp.zeros((1, FUSE), f32)   # fused biases

    # cols [0,32): comb_top = e @ w_comb[:H] + b_comb   (no hidden contribution)
    WE = WE.at[:, C_COMB:C_COMB + H].set(p["w_comb"][0:H])
    B1 = B1.at[:, C_COMB:C_COMB + H].set(p["b_comb"])
    # cols [32,47): attention logits; col 47 = -1e30 so a 16-lane softmax is exact
    WE = WE.at[:, C_ATT:C_ATT + L].set(p["w_attn"][0:H])
    WH = WH.at[:, C_ATT:C_ATT + L].set(p["w_attn"][H:2 * H])
    B1 = B1.at[:, C_ATT:C_ATT + L].set(p["b_attn"])
    B1 = B1.at[:, C_ATT + L].set(-1e30)
    # cols [128,224): hidden part of LSTM gates + gate biases
    WH = WH.at[:, C_GATE:C_GATE + H].set(p["wh_i"])
    WH = WH.at[:, C_GATE + H:C_GATE + 2 * H].set(p["wh_o"])
    WH = WH.at[:, C_GATE + 2 * H:C_GATE + 3 * H].set(p["wh_c"])
    B1 = B1.at[:, C_GATE:C_GATE + H].set(p["b_i"])
    B1 = B1.at[:, C_GATE + H:C_GATE + 2 * H].set(p["b_o"])
    B1 = B1.at[:, C_GATE + 2 * H:C_GATE + 3 * H].set(p["b_c"])

    # x-side LSTM gate weights, one 128-lane aligned RHS tile: [i | o | c | 0]
    WX = jnp.zeros((H, LANES), f32)
    WX = WX.at[:, 0:H].set(p["wx_i"])
    WX = WX.at[:, H:2 * H].set(p["wx_o"])
    WX = WX.at[:, 2 * H:3 * H].set(p["wx_c"])

    return {
        "WE": WE, "WH": WH, "B1": B1, "WX": WX,
        "WC": p["w_comb"][H:2 * H],      # attention_combine bottom (attn_applied)
        "WO": p["w_out"], "BO": p["b_out"],
    }


def ref_step(tok, h, enc, p):
    """Pure-JAX single-step reference (unfused, follows the torch forward)."""
    e = p["emb"][tok][None, :]
    attn_logits = jnp.concatenate([e, h], axis=1) @ p["w_attn"] + p["b_attn"]
    attn_w = jax.nn.softmax(attn_logits, axis=1)
    attn_applied = attn_w @ enc
    comb = jnp.concatenate([e, attn_applied], axis=1) @ p["w_comb"] + p["b_comb"]
    x = jax.nn.relu(comb)
    i_t = jax.nn.sigmoid(x @ p["wx_i"] + h @ p["wh_i"] + p["b_i"])
    o_t = jax.nn.sigmoid(x @ p["wx_o"] + h @ p["wh_o"] + p["b_o"])
    c_hat = jnp.tanh(x @ p["wx_c"] + h @ p["wh_c"] + p["b_c"])
    c_t = i_t * c_hat                                   # pre_cell == 0
    h_t = o_t * jnp.tanh(c_t)
    logp = jax.nn.log_softmax(h_t @ p["w_out"] + p["b_out"], axis=1)
    return logp, h_t, attn_w


if __name__ == "__main__":
    key = jax.random.PRNGKey(0)
    k_param, k_hid, k_enc = jax.random.split(key, 3)

    params = init_params(k_param)
    packed = pack_params(params)

    T = 8
    tokens = jnp.array([3, 17, 42, 0, 63, 9, 25, 7], dtype=jnp.int32)
    hidden0 = 0.1 * jax.random.normal(k_hid, (1, 1, H), jnp.float32)
    encoder_outputs = jax.random.normal(k_enc, (L, H), jnp.float32)

    logp, hs, attn_w = attn_decoder_decode(
        tokens, hidden0, encoder_outputs, params["emb"], packed)
    jax.block_until_ready((logp, hs, attn_w))

    # pure-JAX reference: chain T single-step forwards
    h = hidden0.reshape(1, H)
    ref_lp, ref_h, ref_aw = [], [], []
    for i in range(T):
        lp, h, aw = ref_step(int(tokens[i]), h, encoder_outputs, params)
        ref_lp.append(lp); ref_h.append(h); ref_aw.append(aw)
    ref_lp = jnp.concatenate(ref_lp, axis=0)
    ref_h = jnp.concatenate(ref_h, axis=0)
    ref_aw = jnp.concatenate(ref_aw, axis=0)

    assert logp.shape == (T, V) and hs.shape == (T, H) and attn_w.shape == (T, L)
    assert bool(jnp.all(jnp.abs(jnp.sum(jnp.exp(logp), axis=1) - 1.0) < 1e-3))
    assert bool(jnp.all(jnp.abs(jnp.sum(attn_w, axis=1) - 1.0) < 1e-3))
    assert bool(jnp.allclose(logp, ref_lp, rtol=1e-2, atol=1e-2))
    assert bool(jnp.allclose(hs, ref_h, rtol=1e-2, atol=1e-2))
    assert bool(jnp.allclose(attn_w, ref_aw, rtol=1e-2, atol=1e-2))

    # final hidden in the module's (1, 1, H) layout
    final_hidden = hs[T - 1].reshape(1, 1, H)
    assert final_hidden.shape == (1, 1, H)

    print("KERNEL_OK")
</pallas_src>

<mosaic_0001>
module attributes {stable_mosaic.version = 11 : i64} {
  func.func @kernel(%arg0: i32, %arg1: memref<8x32xf32, #tpu.memory_space<vmem>>, %arg2: memref<1x32xf32, #tpu.memory_space<vmem>>, %arg3: memref<16x32xf32, #tpu.memory_space<vmem>>, %arg4: memref<32x256xf32, #tpu.memory_space<vmem>>, %arg5: memref<1x256xf32, #tpu.memory_space<vmem>>, %arg6: memref<32x256xf32, #tpu.memory_space<vmem>>, %arg7: memref<32x32xf32, #tpu.memory_space<vmem>>, %arg8: memref<32x128xf32, #tpu.memory_space<vmem>>, %arg9: memref<32x64xf32, #tpu.memory_space<vmem>>, %arg10: memref<1x64xf32, #tpu.memory_space<vmem>>, %arg11: memref<8x128xf32, #tpu.memory_space<vmem>>) attributes {dimension_semantics = [#tpu.dimension_semantics<arbitrary>], iteration_bounds = array<i64: 1>, scalar_prefetch = 0 : i64, scratch_operands = 0 : i64, tpu.core_type = #tpu.core_type<tc>, window_params = [{pipeline_mode = #tpu.pipeline_mode<synchronous>, transform_indices = @transform_0, window_bounds = array<i64: 8, 32>}, {pipeline_mode = #tpu.pipeline_mode<synchronous>, transform_indices = @transform_1, window_bounds = array<i64: 1, 32>}, {pipeline_mode = #tpu.pipeline_mode<synchronous>, transform_indices = @transform_2, window_bounds = array<i64: 16, 32>}, {pipeline_mode = #tpu.pipeline_mode<synchronous>, transform_indices = @transform_3, window_bounds = array<i64: 32, 256>}, {pipeline_mode = #tpu.pipeline_mode<synchronous>, transform_indices = @transform_4, window_bounds = array<i64: 1, 256>}, {pipeline_mode = #tpu.pipeline_mode<synchronous>, transform_indices = @transform_5, window_bounds = array<i64: 32, 256>}, {pipeline_mode = #tpu.pipeline_mode<synchronous>, transform_indices = @transform_6, window_bounds = array<i64: 32, 32>}, {pipeline_mode = #tpu.pipeline_mode<synchronous>, transform_indices = @transform_7, window_bounds = array<i64: 32, 128>}, {pipeline_mode = #tpu.pipeline_mode<synchronous>, transform_indices = @transform_8, window_bounds = array<i64: 32, 64>}, {pipeline_mode = #tpu.pipeline_mode<synchronous>, transform_indices = @transform_9, window_bounds = array<i64: 1, 64>}, {pipeline_mode = #tpu.pipeline_mode<synchronous>, transform_indices = @transform_10, window_bounds = array<i64: 8, 128>}]} {
    %c0 = arith.constant 0 : index
    %c0_0 = arith.constant 0 : index
    %0 = vector.load %arg1[%c0, %c0_0] : memref<8x32xf32, #tpu.memory_space<vmem>>, vector<8x32xf32>
    %c0_1 = arith.constant 0 : index
    %c0_2 = arith.constant 0 : index
    %1 = vector.load %arg6[%c0_1, %c0_2] : memref<32x256xf32, #tpu.memory_space<vmem>>, vector<32x256xf32>
    %cst = arith.constant dense<0.000000e+00> : vector<8x256xf32>
    %2 = tpu.matmul %0, %1, %cst {dimension_numbers = #tpu.dot_dimension_numbers<[1], [0], [0], [1], [0, 0, 1, 1], [], []>} : vector<8x32xf32>, vector<32x256xf32>, vector<8x256xf32> -> vector<8x256xf32>
    %c0_3 = arith.constant 0 : index
    %c0_4 = arith.constant 0 : index
    %3 = vector.load %arg5[%c0_3, %c0_4] : memref<1x256xf32, #tpu.memory_space<vmem>>, vector<1x256xf32>
    %4 = vector.broadcast %3 : vector<1x256xf32> to vector<8x256xf32>
    %5 = arith.addf %2, %4 : vector<8x256xf32>
    %c0_5 = arith.constant 0 : index
    %c0_6 = arith.constant 0 : index
    %6 = vector.load %arg3[%c0_5, %c0_6] : memref<16x32xf32, #tpu.memory_space<vmem>>, vector<16x32xf32>
    %c0_7 = arith.constant 0 : index
    %c0_8 = arith.constant 0 : index
    %7 = vector.load %arg4[%c0_7, %c0_8] : memref<32x256xf32, #tpu.memory_space<vmem>>, vector<32x256xf32>
    %c0_9 = arith.constant 0 : index
    %c0_10 = arith.constant 0 : index
    %8 = vector.load %arg7[%c0_9, %c0_10] : memref<32x32xf32, #tpu.memory_space<vmem>>, vector<32x32xf32>
    %c0_11 = arith.constant 0 : index
    %c0_12 = arith.constant 0 : index
    %9 = vector.load %arg8[%c0_11, %c0_12] : memref<32x128xf32, #tpu.memory_space<vmem>>, vector<32x128xf32>
    %c0_13 = arith.constant 0 : index
    %c0_14 = arith.constant 0 : index
    %10 = vector.load %arg9[%c0_13, %c0_14] : memref<32x64xf32, #tpu.memory_space<vmem>>, vector<32x64xf32>
    %c0_15 = arith.constant 0 : index
    %c0_16 = arith.constant 0 : index
    %11 = vector.load %arg10[%c0_15, %c0_16] : memref<1x64xf32, #tpu.memory_space<vmem>>, vector<1x64xf32>
    %c0_17 = arith.constant 0 : index
    %c0_18 = arith.constant 0 : index
    %12 = vector.load %arg2[%c0_17, %c0_18] : memref<1x32xf32, #tpu.memory_space<vmem>>, vector<1x32xf32>
    %cst_19 = arith.constant dense<0.000000e+00> : vector<1x256xf32>
    %13 = tpu.matmul %12, %7, %cst_19 {dimension_numbers = #tpu.dot_dimension_numbers<[1], [0], [0], [1], [0, 0, 1, 1], [], []>} : vector<1x32xf32>, vector<32x256xf32>, vector<1x256xf32> -> vector<1x256xf32>
    %14 = vector.extract_strided_slice %5 {offsets = [0, 0], sizes = [1, 256], strides = [1, 1]} : vector<8x256xf32> to vector<1x256xf32>
    %15 = arith.addf %13, %14 : vector<1x256xf32>
    %16 = vector.extract_strided_slice %15 {offsets = [0, 32], sizes = [1, 16], strides = [1, 1]} : vector<1x256xf32> to vector<1x16xf32>
    %cst_20 = arith.constant dense<0xFF800000> : vector<1xf32>
    %17 = vector.multi_reduction <maximumf>, %16, %cst_20 [1] : vector<1x16xf32> to vector<1xf32>
    %18 = vector.shape_cast %17 : vector<1xf32> to vector<1x1xf32>
    %19 = vector.broadcast %18 : vector<1x1xf32> to vector<1x16xf32>
    %20 = arith.subf %16, %19 : vector<1x16xf32>
    %21 = math.exp %20 : vector<1x16xf32>
    %cst_21 = arith.constant dense<0.000000e+00> : vector<1xf32>
    %22 = vector.multi_reduction <add>, %21, %cst_21 [1] : vector<1x16xf32> to vector<1xf32>
    %23 = vector.shape_cast %22 : vector<1xf32> to vector<1x1xf32>
    %24 = vector.broadcast %23 : vector<1x1xf32> to vector<1x16xf32>
    %25 = arith.divf %21, %24 : vector<1x16xf32>
    %cst_22 = arith.constant dense<0.000000e+00> : vector<1x32xf32>
    %26 = tpu.matmul %25, %6, %cst_22 {dimension_numbers = #tpu.dot_dimension_numbers<[1], [0], [0], [1], [0, 0, 1, 1], [], []>} : vector<1x16xf32>, vector<16x32xf32>, vector<1x32xf32> -> vector<1x32xf32>
    %27 = vector.extract_strided_slice %15 {offsets = [0, 0], sizes = [1, 32], strides = [1, 1]} : vector<1x256xf32> to vector<1x32xf32>
    %cst_23 = arith.constant dense<0.000000e+00> : vector<1x32xf32>
    %28 = tpu.matmul %26, %8, %cst_23 {dimension_numbers = #tpu.dot_dimension_numbers<[1], [0], [0], [1], [0, 0, 1, 1], [], []>} : vector<1x32xf32>, vector<32x32xf32>, vector<1x32xf32> -> vector<1x32xf32>
    %29 = arith.addf %27, %28 : vector<1x32xf32>
    %cst_24 = arith.constant 0.000000e+00 : f32
    %30 = vector.broadcast %cst_24 : f32 to vector<1x32xf32>
    %31 = arith.maximumf %29, %30 : vector<1x32xf32>
    %cst_25 = arith.constant dense<0.000000e+00> : vector<1x128xf32>
    %32 = tpu.matmul %31, %9, %cst_25 {dimension_numbers = #tpu.dot_dimension_numbers<[1], [0], [0], [1], [0, 0, 1, 1], [], []>} : vector<1x32xf32>, vector<32x128xf32>, vector<1x128xf32> -> vector<1x128xf32>
    %33 = vector.extract_strided_slice %15 {offsets = [0, 128], sizes = [1, 128], strides = [1, 1]} : vector<1x256xf32> to vector<1x128xf32>
    %34 = arith.addf %32, %33 : vector<1x128xf32>
    %35 = vector.extract_strided_slice %34 {offsets = [0, 0], sizes = [1, 32], strides = [1, 1]} : vector<1x128xf32> to vector<1x32xf32>
    %36 = arith.negf %35 : vector<1x32xf32>
    %37 = math.exp %36 : vector<1x32xf32>
    %cst_26 = arith.constant 1.000000e+00 : f32
    %38 = vector.broadcast %cst_26 : f32 to vector<1x32xf32>
    %39 = arith.addf %38, %37 : vector<1x32xf32>
    %40 = arith.divf %38, %39 : vector<1x32xf32>
    %41 = vector.extract_strided_slice %34 {offsets = [0, 32], sizes = [1, 32], strides = [1, 1]} : vector<1x128xf32> to vector<1x32xf32>
    %42 = arith.negf %41 : vector<1x32xf32>
    %43 = math.exp %42 : vector<1x32xf32>
    %cst_27 = arith.constant 1.000000e+00 : f32
    %44 = vector.broadcast %cst_27 : f32 to vector<1x32xf32>
    %45 = arith.addf %44, %43 : vector<1x32xf32>
    %46 = arith.divf %44, %45 : vector<1x32xf32>
    %47 = vector.extract_strided_slice %34 {offsets = [0, 64], sizes = [1, 32], strides = [1, 1]} : vector<1x128xf32> to vector<1x32xf32>
    %48 = math.tanh %47 : vector<1x32xf32>
    %49 = arith.mulf %40, %48 : vector<1x32xf32>
    %50 = math.tanh %49 : vector<1x32xf32>
    %51 = arith.mulf %46, %50 : vector<1x32xf32>
    %cst_28 = arith.constant dense<0.000000e+00> : vector<1x64xf32>
    %52 = tpu.matmul %51, %10, %cst_28 {dimension_numbers = #tpu.dot_dimension_numbers<[1], [0], [0], [1], [0, 0, 1, 1], [], []>} : vector<1x32xf32>, vector<32x64xf32>, vector<1x64xf32> -> vector<1x64xf32>
    %53 = arith.addf %52, %11 : vector<1x64xf32>
    %cst_29 = arith.constant dense<0xFF800000> : vector<1xf32>
    %54 = vector.multi_reduction <maximumf>, %53, %cst_29 [1] : vector<1x64xf32> to vector<1xf32>
    %55 = vector.shape_cast %54 : vector<1xf32> to vector<1x1xf32>
    %56 = vector.broadcast %55 : vector<1x1xf32> to vector<1x64xf32>
    %57 = arith.subf %53, %56 : vector<1x64xf32>
    %58 = math.exp %57 : vector<1x64xf32>
    %cst_30 = arith.constant dense<0.000000e+00> : vector<1xf32>
    %59 = vector.multi_reduction <add>, %58, %cst_30 [1] : vector<1x64xf32> to vector<1xf32>
    %60 = vector.shape_cast %59 : vector<1xf32> to vector<1x1xf32>
    %61 = math.log %60 : vector<1x1xf32>
    %62 = arith.addf %61, %55 : vector<1x1xf32>
    %63 = vector.broadcast %62 : vector<1x1xf32> to vector<1x64xf32>
    %64 = arith.subf %53, %63 : vector<1x64xf32>
    %cst_31 = arith.constant dense<0.000000e+00> : vector<1x256xf32>
    %65 = tpu.matmul %51, %7, %cst_31 {dimension_numbers = #tpu.dot_dimension_numbers<[1], [0], [0], [1], [0, 0, 1, 1], [], []>} : vector<1x32xf32>, vector<32x256xf32>, vector<1x256xf32> -> vector<1x256xf32>
    %66 = vector.extract_strided_slice %5 {offsets = [1, 0], sizes = [1, 256], strides = [1, 1]} : vector<8x256xf32> to vector<1x256xf32>
    %67 = arith.addf %65, %66 : vector<1x256xf32>
    %68 = vector.extract_strided_slice %67 {offsets = [0, 32], sizes = [1, 16], strides = [1, 1]} : vector<1x256xf32> to vector<1x16xf32>
    %cst_32 = arith.constant dense<0xFF800000> : vector<1xf32>
    %69 = vector.multi_reduction <maximumf>, %68, %cst_32 [1] : vector<1x16xf32> to vector<1xf32>
    %70 = vector.shape_cast %69 : vector<1xf32> to vector<1x1xf32>
    %71 = vector.broadcast %70 : vector<1x1xf32> to vector<1x16xf32>
    %72 = arith.subf %68, %71 : vector<1x16xf32>
    %73 = math.exp %72 : vector<1x16xf32>
    %cst_33 = arith.constant dense<0.000000e+00> : vector<1xf32>
    %74 = vector.multi_reduction <add>, %73, %cst_33 [1] : vector<1x16xf32> to vector<1xf32>
    %75 = vector.shape_cast %74 : vector<1xf32> to vector<1x1xf32>
    %76 = vector.broadcast %75 : vector<1x1xf32> to vector<1x16xf32>
    %77 = arith.divf %73, %76 : vector<1x16xf32>
    %cst_34 = arith.constant dense<0.000000e+00> : vector<1x32xf32>
    %78 = tpu.matmul %77, %6, %cst_34 {dimension_numbers = #tpu.dot_dimension_numbers<[1], [0], [0], [1], [0, 0, 1, 1], [], []>} : vector<1x16xf32>, vector<16x32xf32>, vector<1x32xf32> -> vector<1x32xf32>
    %79 = vector.extract_strided_slice %67 {offsets = [0, 0], sizes = [1, 32], strides = [1, 1]} : vector<1x256xf32> to vector<1x32xf32>
    %cst_35 = arith.constant dense<0.000000e+00> : vector<1x32xf32>
    %80 = tpu.matmul %78, %8, %cst_35 {dimension_numbers = #tpu.dot_dimension_numbers<[1], [0], [0], [1], [0, 0, 1, 1], [], []>} : vector<1x32xf32>, vector<32x32xf32>, vector<1x32xf32> -> vector<1x32xf32>
    %81 = arith.addf %79, %80 : vector<1x32xf32>
    %cst_36 = arith.constant 0.000000e+00 : f32
    %82 = vector.broadcast %cst_36 : f32 to vector<1x32xf32>
    %83 = arith.maximumf %81, %82 : vector<1x32xf32>
    %cst_37 = arith.constant dense<0.000000e+00> : vector<1x128xf32>
    %84 = tpu.matmul %83, %9, %cst_37 {dimension_numbers = #tpu.dot_dimension_numbers<[1], [0], [0], [1], [0, 0, 1, 1], [], []>} : vector<1x32xf32>, vector<32x128xf32>, vector<1x128xf32> -> vector<1x128xf32>
    %85 = vector.extract_strided_slice %67 {offsets = [0, 128], sizes = [1, 128], strides = [1, 1]} : vector<1x256xf32> to vector<1x128xf32>
    %86 = arith.addf %84, %85 : vector<1x128xf32>
    %87 = vector.extract_strided_slice %86 {offsets = [0, 0], sizes = [1, 32], strides = [1, 1]} : vector<1x128xf32> to vector<1x32xf32>
    %88 = arith.negf %87 : vector<1x32xf32>
    %89 = math.exp %88 : vector<1x32xf32>
    %cst_38 = arith.constant 1.000000e+00 : f32
    %90 = vector.broadcast %cst_38 : f32 to vector<1x32xf32>
    %91 = arith.addf %90, %89 : vector<1x32xf32>
    %92 = arith.divf %90, %91 : vector<1x32xf32>
    %93 = vector.extract_strided_slice %86 {offsets = [0, 32], sizes = [1, 32], strides = [1, 1]} : vector<1x128xf32> to vector<1x32xf32>
    %94 = arith.negf %93 : vector<1x32xf32>
    %95 = math.exp %94 : vector<1x32xf32>
    %cst_39 = arith.constant 1.000000e+00 : f32
    %96 = vector.broadcast %cst_39 : f32 to vector<1x32xf32>
    %97 = arith.addf %96, %95 : vector<1x32xf32>
    %98 = arith.divf %96, %97 : vector<1x32xf32>
    %99 = vector.extract_strided_slice %86 {offsets = [0, 64], sizes = [1, 32], strides = [1, 1]} : vector<1x128xf32> to vector<1x32xf32>
    %100 = math.tanh %99 : vector<1x32xf32>
    %101 = arith.mulf %92, %100 : vector<1x32xf32>
    %102 = math.tanh %101 : vector<1x32xf32>
    %103 = arith.mulf %98, %102 : vector<1x32xf32>
    %cst_40 = arith.constant dense<0.000000e+00> : vector<1x64xf32>
    %104 = tpu.matmul %103, %10, %cst_40 {dimension_numbers = #tpu.dot_dimension_numbers<[1], [0], [0], [1], [0, 0, 1, 1], [], []>} : vector<1x32xf32>, vector<32x64xf32>, vector<1x64xf32> -> vector<1x64xf32>
    %105 = arith.addf %104, %11 : vector<1x64xf32>
    %cst_41 = arith.constant dense<0xFF800000> : vector<1xf32>
    %106 = vector.multi_reduction <maximumf>, %105, %cst_41 [1] : vector<1x64xf32> to vector<1xf32>
    %107 = vector.shape_cast %106 : vector<1xf32> to vector<1x1xf32>
    %108 = vector.broadcast %107 : vector<1x1xf32> to vector<1x64xf32>
    %109 = arith.subf %105, %108 : vector<1x64xf32>
    %110 = math.exp %109 : vector<1x64xf32>
    %cst_42 = arith.constant dense<0.000000e+00> : vector<1xf32>
    %111 = vector.multi_reduction <add>, %110, %cst_42 [1] : vector<1x64xf32> to vector<1xf32>
    %112 = vector.shape_cast %111 : vector<1xf32> to vector<1x1xf32>
    %113 = math.log %112 : vector<1x1xf32>
    %114 = arith.addf %113, %107 : vector<1x1xf32>
    %115 = vector.broadcast %114 : vector<1x1xf32> to vector<1x64xf32>
    %116 = arith.subf %105, %115 : vector<1x64xf32>
    %cst_43 = arith.constant dense<0.000000e+00> : vector<1x256xf32>
    %117 = tpu.matmul %103, %7, %cst_43 {dimension_numbers = #tpu.dot_dimension_numbers<[1], [0], [0], [1], [0, 0, 1, 1], [], []>} : vector<1x32xf32>, vector<32x256xf32>, vector<1x256xf32> -> vector<1x256xf32>
    %118 = vector.extract_strided_slice %5 {offsets = [2, 0], sizes = [1, 256], strides = [1, 1]} : vector<8x256xf32> to vector<1x256xf32>
    %119 = arith.addf %117, %118 : vector<1x256xf32>
    %120 = vector.extract_strided_slice %119 {offsets = [0, 32], sizes = [1, 16], strides = [1, 1]} : vector<1x256xf32> to vector<1x16xf32>
    %cst_44 = arith.constant dense<0xFF800000> : vector<1xf32>
    %121 = vector.multi_reduction <maximumf>, %120, %cst_44 [1] : vector<1x16xf32> to vector<1xf32>
    %122 = vector.shape_cast %121 : vector<1xf32> to vector<1x1xf32>
    %123 = vector.broadcast %122 : vector<1x1xf32> to vector<1x16xf32>
    %124 = arith.subf %120, %123 : vector<1x16xf32>
    %125 = math.exp %124 : vector<1x16xf32>
    %cst_45 = arith.constant dense<0.000000e+00> : vector<1xf32>
    %126 = vector.multi_reduction <add>, %125, %cst_45 [1] : vector<1x16xf32> to vector<1xf32>
    %127 = vector.shape_cast %126 : vector<1xf32> to vector<1x1xf32>
    %128 = vector.broadcast %127 : vector<1x1xf32> to vector<1x16xf32>
    %129 = arith.divf %125, %128 : vector<1x16xf32>
    %cst_46 = arith.constant dense<0.000000e+00> : vector<1x32xf32>
    %130 = tpu.matmul %129, %6, %cst_46 {dimension_numbers = #tpu.dot_dimension_numbers<[1], [0], [0], [1], [0, 0, 1, 1], [], []>} : vector<1x16xf32>, vector<16x32xf32>, vector<1x32xf32> -> vector<1x32xf32>
    %131 = vector.extract_strided_slice %119 {offsets = [0, 0], sizes = [1, 32], strides = [1, 1]} : vector<1x256xf32> to vector<1x32xf32>
    %cst_47 = arith.constant dense<0.000000e+00> : vector<1x32xf32>
    %132 = tpu.matmul %130, %8, %cst_47 {dimension_numbers = #tpu.dot_dimension_numbers<[1], [0], [0], [1], [0, 0, 1, 1], [], []>} : vector<1x32xf32>, vector<32x32xf32>, vector<1x32xf32> -> vector<1x32xf32>
    %133 = arith.addf %131, %132 : vector<1x32xf32>
    %cst_48 = arith.constant 0.000000e+00 : f32
    %134 = vector.broadcast %cst_48 : f32 to vector<1x32xf32>
    %135 = arith.maximumf %133, %134 : vector<1x32xf32>
    %cst_49 = arith.constant dense<0.000000e+00> : vector<1x128xf32>
    %136 = tpu.matmul %135, %9, %cst_49 {dimension_numbers = #tpu.dot_dimension_numbers<[1], [0], [0], [1], [0, 0, 1, 1], [], []>} : vector<1x32xf32>, vector<32x128xf32>, vector<1x128xf32> -> vector<1x128xf32>
    %137 = vector.extract_strided_slice %119 {offsets = [0, 128], sizes = [1, 128], strides = [1, 1]} : vector<1x256xf32> to vector<1x128xf32>
    %138 = arith.addf %136, %137 : vector<1x128xf32>
    %139 = vector.extract_strided_slice %138 {offsets = [0, 0], sizes = [1, 32], strides = [1, 1]} : vector<1x128xf32> to vector<1x32xf32>
    %140 = arith.negf %139 : vector<1x32xf32>
    %141 = math.exp %140 : vector<1x32xf32>
    %cst_50 = arith.constant 1.000000e+00 : f32
    %142 = vector.broadcast %cst_50 : f32 to vector<1x32xf32>
    %143 = arith.addf %142, %141 : vector<1x32xf32>
    %144 = arith.divf %142, %143 : vector<1x32xf32>
    %145 = vector.extract_strided_slice %138 {offsets = [0, 32], sizes = [1, 32], strides = [1, 1]} : vector<1x128xf32> to vector<1x32xf32>
    %146 = arith.negf %145 : vector<1x32xf32>
    %147 = math.exp %146 : vector<1x32xf32>
    %cst_51 = arith.constant 1.000000e+00 : f32
    %148 = vector.broadcast %cst_51 : f32 to vector<1x32xf32>
    %149 = arith.addf %148, %147 : vector<1x32xf32>
    %150 = arith.divf %148, %149 : vector<1x32xf32>
    %151 = vector.extract_strided_slice %138 {offsets = [0, 64], sizes = [1, 32], strides = [1, 1]} : vector<1x128xf32> to vector<1x32xf32>
    %152 = math.tanh %151 : vector<1x32xf32>
    %153 = arith.mulf %144, %152 : vector<1x32xf32>
    %154 = math.tanh %153 : vector<1x32xf32>
    %155 = arith.mulf %150, %154 : vector<1x32xf32>
    %cst_52 = arith.constant dense<0.000000e+00> : vector<1x64xf32>
    %156 = tpu.matmul %155, %10, %cst_52 {dimension_numbers = #tpu.dot_dimension_numbers<[1], [0], [0], [1], [0, 0, 1, 1], [], []>} : vector<1x32xf32>, vector<32x64xf32>, vector<1x64xf32> -> vector<1x64xf32>
    %157 = arith.addf %156, %11 : vector<1x64xf32>
    %cst_53 = arith.constant dense<0xFF800000> : vector<1xf32>
    %158 = vector.multi_reduction <maximumf>, %157, %cst_53 [1] : vector<1x64xf32> to vector<1xf32>
    %159 = vector.shape_cast %158 : vector<1xf32> to vector<1x1xf32>
    %160 = vector.broadcast %159 : vector<1x1xf32> to vector<1x64xf32>
    %161 = arith.subf %157, %160 : vector<1x64xf32>
    %162 = math.exp %161 : vector<1x64xf32>
    %cst_54 = arith.constant dense<0.000000e+00> : vector<1xf32>
    %163 = vector.multi_reduction <add>, %162, %cst_54 [1] : vector<1x64xf32> to vector<1xf32>
    %164 = vector.shape_cast %163 : vector<1xf32> to vector<1x1xf32>
    %165 = math.log %164 : vector<1x1xf32>
    %166 = arith.addf %165, %159 : vector<1x1xf32>
    %167 = vector.broadcast %166 : vector<1x1xf32> to vector<1x64xf32>
    %168 = arith.subf %157, %167 : vector<1x64xf32>
    %cst_55 = arith.constant dense<0.000000e+00> : vector<1x256xf32>
    %169 = tpu.matmul %155, %7, %cst_55 {dimension_numbers = #tpu.dot_dimension_numbers<[1], [0], [0], [1], [0, 0, 1, 1], [], []>} : vector<1x32xf32>, vector<32x256xf32>, vector<1x256xf32> -> vector<1x256xf32>
    %170 = vector.extract_strided_slice %5 {offsets = [3, 0], sizes = [1, 256], strides = [1, 1]} : vector<8x256xf32> to vector<1x256xf32>
    %171 = arith.addf %169, %170 : vector<1x256xf32>
    %172 = vector.extract_strided_slice %171 {offsets = [0, 32], sizes = [1, 16], strides = [1, 1]} : vector<1x256xf32> to vector<1x16xf32>
    %cst_56 = arith.constant dense<0xFF800000> : vector<1xf32>
    %173 = vector.multi_reduction <maximumf>, %172, %cst_56 [1] : vector<1x16xf32> to vector<1xf32>
    %174 = vector.shape_cast %173 : vector<1xf32> to vector<1x1xf32>
    %175 = vector.broadcast %174 : vector<1x1xf32> to vector<1x16xf32>
    %176 = arith.subf %172, %175 : vector<1x16xf32>
    %177 = math.exp %176 : vector<1x16xf32>
    %cst_57 = arith.constant dense<0.000000e+00> : vector<1xf32>
    %178 = vector.multi_reduction <add>, %177, %cst_57 [1] : vector<1x16xf32> to vector<1xf32>
    %179 = vector.shape_cast %178 : vector<1xf32> to vector<1x1xf32>
    %180 = vector.broadcast %179 : vector<1x1xf32> to vector<1x16xf32>
    %181 = arith.divf %177, %180 : vector<1x16xf32>
    %cst_58 = arith.constant dense<0.000000e+00> : vector<1x32xf32>
    %182 = tpu.matmul %181, %6, %cst_58 {dimension_numbers = #tpu.dot_dimension_numbers<[1], [0], [0], [1], [0, 0, 1, 1], [], []>} : vector<1x16xf32>, vector<16x32xf32>, vector<1x32xf32> -> vector<1x32xf32>
    %183 = vector.extract_strided_slice %171 {offsets = [0, 0], sizes = [1, 32], strides = [1, 1]} : vector<1x256xf32> to vector<1x32xf32>
    %cst_59 = arith.constant dense<0.000000e+00> : vector<1x32xf32>
    %184 = tpu.matmul %182, %8, %cst_59 {dimension_numbers = #tpu.dot_dimension_numbers<[1], [0], [0], [1], [0, 0, 1, 1], [], []>} : vector<1x32xf32>, vector<32x32xf32>, vector<1x32xf32> -> vector<1x32xf32>
    %185 = arith.addf %183, %184 : vector<1x32xf32>
    %cst_60 = arith.constant 0.000000e+00 : f32
    %186 = vector.broadcast %cst_60 : f32 to vector<1x32xf32>
    %187 = arith.maximumf %185, %186 : vector<1x32xf32>
    %cst_61 = arith.constant dense<0.000000e+00> : vector<1x128xf32>
    %188 = tpu.matmul %187, %9, %cst_61 {dimension_numbers = #tpu.dot_dimension_numbers<[1], [0], [0], [1], [0, 0, 1, 1], [], []>} : vector<1x32xf32>, vector<32x128xf32>, vector<1x128xf32> -> vector<1x128xf32>
    %189 = vector.extract_strided_slice %171 {offsets = [0, 128], sizes = [1, 128], strides = [1, 1]} : vector<1x256xf32> to vector<1x128xf32>
    %190 = arith.addf %188, %189 : vector<1x128xf32>
    %191 = vector.extract_strided_slice %190 {offsets = [0, 0], sizes = [1, 32], strides = [1, 1]} : vector<1x128xf32> to vector<1x32xf32>
    %192 = arith.negf %191 : vector<1x32xf32>
    %193 = math.exp %192 : vector<1x32xf32>
    %cst_62 = arith.constant 1.000000e+00 : f32
    %194 = vector.broadcast %cst_62 : f32 to vector<1x32xf32>
    %195 = arith.addf %194, %193 : vector<1x32xf32>
    %196 = arith.divf %194, %195 : vector<1x32xf32>
    %197 = vector.extract_strided_slice %190 {offsets = [0, 32], sizes = [1, 32], strides = [1, 1]} : vector<1x128xf32> to vector<1x32xf32>
    %198 = arith.negf %197 : vector<1x32xf32>
    %199 = math.exp %198 : vector<1x32xf32>
    %cst_63 = arith.constant 1.000000e+00 : f32
    %200 = vector.broadcast %cst_63 : f32 to vector<1x32xf32>
    %201 = arith.addf %200, %199 : vector<1x32xf32>
    %202 = arith.divf %200, %201 : vector<1x32xf32>
    %203 = vector.extract_strided_slice %190 {offsets = [0, 64], sizes = [1, 32], strides = [1, 1]} : vector<1x128xf32> to vector<1x32xf32>
    %204 = math.tanh %203 : vector<1x32xf32>
    %205 = arith.mulf %196, %204 : vector<1x32xf32>
    %206 = math.tanh %205 : vector<1x32xf32>
    %207 = arith.mulf %202, %206 : vector<1x32xf32>
    %cst_64 = arith.constant dense<0.000000e+00> : vector<1x64xf32>
    %208 = tpu.matmul %207, %10, %cst_64 {dimension_numbers = #tpu.dot_dimension_numbers<[1], [0], [0], [1], [0, 0, 1, 1], [], []>} : vector<1x32xf32>, vector<32x64xf32>, vector<1x64xf32> -> vector<1x64xf32>
    %209 = arith.addf %208, %11 : vector<1x64xf32>
    %cst_65 = arith.constant dense<0xFF800000> : vector<1xf32>
    %210 = vector.multi_reduction <maximumf>, %209, %cst_65 [1] : vector<1x64xf32> to vector<1xf32>
    %211 = vector.shape_cast %210 : vector<1xf32> to vector<1x1xf32>
    %212 = vector.broadcast %211 : vector<1x1xf32> to vector<1x64xf32>
    %213 = arith.subf %209, %212 : vector<1x64xf32>
    %214 = math.exp %213 : vector<1x64xf32>
    %cst_66 = arith.constant dense<0.000000e+00> : vector<1xf32>
    %215 = vector.multi_reduction <add>, %214, %cst_66 [1] : vector<1x64xf32> to vector<1xf32>
    %216 = vector.shape_cast %215 : vector<1xf32> to vector<1x1xf32>
    %217 = math.log %216 : vector<1x1xf32>
    %218 = arith.addf %217, %211 : vector<1x1xf32>
    %219 = vector.broadcast %218 : vector<1x1xf32> to vector<1x64xf32>
    %220 = arith.subf %209, %219 : vector<1x64xf32>
    %cst_67 = arith.constant dense<0.000000e+00> : vector<1x256xf32>
    %221 = tpu.matmul %207, %7, %cst_67 {dimension_numbers = #tpu.dot_dimension_numbers<[1], [0], [0], [1], [0, 0, 1, 1], [], []>} : vector<1x32xf32>, vector<32x256xf32>, vector<1x256xf32> -> vector<1x256xf32>
    %222 = vector.extract_strided_slice %5 {offsets = [4, 0], sizes = [1, 256], strides = [1, 1]} : vector<8x256xf32> to vector<1x256xf32>
    %223 = arith.addf %221, %222 : vector<1x256xf32>
    %224 = vector.extract_strided_slice %223 {offsets = [0, 32], sizes = [1, 16], strides = [1, 1]} : vector<1x256xf32> to vector<1x16xf32>
    %cst_68 = arith.constant dense<0xFF800000> : vector<1xf32>
    %225 = vector.multi_reduction <maximumf>, %224, %cst_68 [1] : vector<1x16xf32> to vector<1xf32>
    %226 = vector.shape_cast %225 : vector<1xf32> to vector<1x1xf32>
    %227 = vector.broadcast %226 : vector<1x1xf32> to vector<1x16xf32>
    %228 = arith.subf %224, %227 : vector<1x16xf32>
    %229 = math.exp %228 : vector<1x16xf32>
    %cst_69 = arith.constant dense<0.000000e+00> : vector<1xf32>
    %230 = vector.multi_reduction <add>, %229, %cst_69 [1] : vector<1x16xf32> to vector<1xf32>
    %231 = vector.shape_cast %230 : vector<1xf32> to vector<1x1xf32>
    %232 = vector.broadcast %231 : vector<1x1xf32> to vector<1x16xf32>
    %233 = arith.divf %229, %232 : vector<1x16xf32>
    %cst_70 = arith.constant dense<0.000000e+00> : vector<1x32xf32>
    %234 = tpu.matmul %233, %6, %cst_70 {dimension_numbers = #tpu.dot_dimension_numbers<[1], [0], [0], [1], [0, 0, 1, 1], [], []>} : vector<1x16xf32>, vector<16x32xf32>, vector<1x32xf32> -> vector<1x32xf32>
    %235 = vector.extract_strided_slice %223 {offsets = [0, 0], sizes = [1, 32], strides = [1, 1]} : vector<1x256xf32> to vector<1x32xf32>
    %cst_71 = arith.constant dense<0.000000e+00> : vector<1x32xf32>
    %236 = tpu.matmul %234, %8, %cst_71 {dimension_numbers = #tpu.dot_dimension_numbers<[1], [0], [0], [1], [0, 0, 1, 1], [], []>} : vector<1x32xf32>, vector<32x32xf32>, vector<1x32xf32> -> vector<1x32xf32>
    %237 = arith.addf %235, %236 : vector<1x32xf32>
    %cst_72 = arith.constant 0.000000e+00 : f32
    %238 = vector.broadcast %cst_72 : f32 to vector<1x32xf32>
    %239 = arith.maximumf %237, %238 : vector<1x32xf32>
    %cst_73 = arith.constant dense<0.000000e+00> : vector<1x128xf32>
    %240 = tpu.matmul %239, %9, %cst_73 {dimension_numbers = #tpu.dot_dimension_numbers<[1], [0], [0], [1], [0, 0, 1, 1], [], []>} : vector<1x32xf32>, vector<32x128xf32>, vector<1x128xf32> -> vector<1x128xf32>
    %241 = vector.extract_strided_slice %223 {offsets = [0, 128], sizes = [1, 128], strides = [1, 1]} : vector<1x256xf32> to vector<1x128xf32>
    %242 = arith.addf %240, %241 : vector<1x128xf32>
    %243 = vector.extract_strided_slice %242 {offsets = [0, 0], sizes = [1, 32], strides = [1, 1]} : vector<1x128xf32> to vector<1x32xf32>
    %244 = arith.negf %243 : vector<1x32xf32>
    %245 = math.exp %244 : vector<1x32xf32>
    %cst_74 = arith.constant 1.000000e+00 : f32
    %246 = vector.broadcast %cst_74 : f32 to vector<1x32xf32>
    %247 = arith.addf %246, %245 : vector<1x32xf32>
    %248 = arith.divf %246, %247 : vector<1x32xf32>
    %249 = vector.extract_strided_slice %242 {offsets = [0, 32], sizes = [1, 32], strides = [1, 1]} : vector<1x128xf32> to vector<1x32xf32>
    %250 = arith.negf %249 : vector<1x32xf32>
    %251 = math.exp %250 : vector<1x32xf32>
    %cst_75 = arith.constant 1.000000e+00 : f32
    %252 = vector.broadcast %cst_75 : f32 to vector<1x32xf32>
    %253 = arith.addf %252, %251 : vector<1x32xf32>
    %254 = arith.divf %252, %253 : vector<1x32xf32>
    %255 = vector.extract_strided_slice %242 {offsets = [0, 64], sizes = [1, 32], strides = [1, 1]} : vector<1x128xf32> to vector<1x32xf32>
    %256 = math.tanh %255 : vector<1x32xf32>
    %257 = arith.mulf %248, %256 : vector<1x32xf32>
    %258 = math.tanh %257 : vector<1x32xf32>
    %259 = arith.mulf %254, %258 : vector<1x32xf32>
    %cst_76 = arith.constant dense<0.000000e+00> : vector<1x64xf32>
    %260 = tpu.matmul %259, %10, %cst_76 {dimension_numbers = #tpu.dot_dimension_numbers<[1], [0], [0], [1], [0, 0, 1, 1], [], []>} : vector<1x32xf32>, vector<32x64xf32>, vector<1x64xf32> -> vector<1x64xf32>
    %261 = arith.addf %260, %11 : vector<1x64xf32>
    %cst_77 = arith.constant dense<0xFF800000> : vector<1xf32>
    %262 = vector.multi_reduction <maximumf>, %261, %cst_77 [1] : vector<1x64xf32> to vector<1xf32>
    %263 = vector.shape_cast %262 : vector<1xf32> to vector<1x1xf32>
    %264 = vector.broadcast %263 : vector<1x1xf32> to vector<1x64xf32>
    %265 = arith.subf %261, %264 : vector<1x64xf32>
    %266 = math.exp %265 : vector<1x64xf32>
    %cst_78 = arith.constant dense<0.000000e+00> : vector<1xf32>
    %267 = vector.multi_reduction <add>, %266, %cst_78 [1] : vector<1x64xf32> to vector<1xf32>
    %268 = vector.shape_cast %267 : vector<1xf32> to vector<1x1xf32>
    %269 = math.log %268 : vector<1x1xf32>
    %270 = arith.addf %269, %263 : vector<1x1xf32>
    %271 = vector.broadcast %270 : vector<1x1xf32> to vector<1x64xf32>
    %272 = arith.subf %261, %271 : vector<1x64xf32>
    %cst_79 = arith.constant dense<0.000000e+00> : vector<1x256xf32>
    %273 = tpu.matmul %259, %7, %cst_79 {dimension_numbers = #tpu.dot_dimension_numbers<[1], [0], [0], [1], [0, 0, 1, 1], [], []>} : vector<1x32xf32>, vector<32x256xf32>, vector<1x256xf32> -> vector<1x256xf32>
    %274 = vector.extract_strided_slice %5 {offsets = [5, 0], sizes = [1, 256], strides = [1, 1]} : vector<8x256xf32> to vector<1x256xf32>
    %275 = arith.addf %273, %274 : vector<1x256xf32>
    %276 = vector.extract_strided_slice %275 {offsets = [0, 32], sizes = [1, 16], strides = [1, 1]} : vector<1x256xf32> to vector<1x16xf32>
    %cst_80 = arith.constant dense<0xFF800000> : vector<1xf32>
    %277 = vector.multi_reduction <maximumf>, %276, %cst_80 [1] : vector<1x16xf32> to vector<1xf32>
    %278 = vector.shape_cast %277 : vector<1xf32> to vector<1x1xf32>
    %279 = vector.broadcast %278 : vector<1x1xf32> to vector<1x16xf32>
    %280 = arith.subf %276, %279 : vector<1x16xf32>
    %281 = math.exp %280 : vector<1x16xf32>
    %cst_81 = arith.constant dense<0.000000e+00> : vector<1xf32>
    %282 = vector.multi_reduction <add>, %281, %cst_81 [1] : vector<1x16xf32> to vector<1xf32>
    %283 = vector.shape_cast %282 : vector<1xf32> to vector<1x1xf32>
    %284 = vector.broadcast %283 : vector<1x1xf32> to vector<1x16xf32>
    %285 = arith.divf %281, %284 : vector<1x16xf32>
    %cst_82 = arith.constant dense<0.000000e+00> : vector<1x32xf32>
    %286 = tpu.matmul %285, %6, %cst_82 {dimension_numbers = #tpu.dot_dimension_numbers<[1], [0], [0], [1], [0, 0, 1, 1], [], []>} : vector<1x16xf32>, vector<16x32xf32>, vector<1x32xf32> -> vector<1x32xf32>
    %287 = vector.extract_strided_slice %275 {offsets = [0, 0], sizes = [1, 32], strides = [1, 1]} : vector<1x256xf32> to vector<1x32xf32>
    %cst_83 = arith.constant dense<0.000000e+00> : vector<1x32xf32>
    %288 = tpu.matmul %286, %8, %cst_83 {dimension_numbers = #tpu.dot_dimension_numbers<[1], [0], [0], [1], [0, 0, 1, 1], [], []>} : vector<1x32xf32>, vector<32x32xf32>, vector<1x32xf32> -> vector<1x32xf32>
    %289 = arith.addf %287, %288 : vector<1x32xf32>
    %cst_84 = arith.constant 0.000000e+00 : f32
    %290 = vector.broadcast %cst_84 : f32 to vector<1x32xf32>
    %291 = arith.maximumf %289, %290 : vector<1x32xf32>
    %cst_85 = arith.constant dense<0.000000e+00> : vector<1x128xf32>
    %292 = tpu.matmul %291, %9, %cst_85 {dimension_numbers = #tpu.dot_dimension_numbers<[1], [0], [0], [1], [0, 0, 1, 1], [], []>} : vector<1x32xf32>, vector<32x128xf32>, vector<1x128xf32> -> vector<1x128xf32>
    %293 = vector.extract_strided_slice %275 {offsets = [0, 128], sizes = [1, 128], strides = [1, 1]} : vector<1x256xf32> to vector<1x128xf32>
    %294 = arith.addf %292, %293 : vector<1x128xf32>
    %295 = vector.extract_strided_slice %294 {offsets = [0, 0], sizes = [1, 32], strides = [1, 1]} : vector<1x128xf32> to vector<1x32xf32>
    %296 = arith.negf %295 : vector<1x32xf32>
    %297 = math.exp %296 : vector<1x32xf32>
    %cst_86 = arith.constant 1.000000e+00 : f32
    %298 = vector.broadcast %cst_86 : f32 to vector<1x32xf32>
    %299 = arith.addf %298, %297 : vector<1x32xf32>
    %300 = arith.divf %298, %299 : vector<1x32xf32>
    %301 = vector.extract_strided_slice %294 {offsets = [0, 32], sizes = [1, 32], strides = [1, 1]} : vector<1x128xf32> to vector<1x32xf32>
    %302 = arith.negf %301 : vector<1x32xf32>
    %303 = math.exp %302 : vector<1x32xf32>
    %cst_87 = arith.constant 1.000000e+00 : f32
    %304 = vector.broadcast %cst_87 : f32 to vector<1x32xf32>
    %305 = arith.addf %304, %303 : vector<1x32xf32>
    %306 = arith.divf %304, %305 : vector<1x32xf32>
    %307 = vector.extract_strided_slice %294 {offsets = [0, 64], sizes = [1, 32], strides = [1, 1]} : vector<1x128xf32> to vector<1x32xf32>
    %308 = math.tanh %307 : vector<1x32xf32>
    %309 = arith.mulf %300, %308 : vector<1x32xf32>
    %310 = math.tanh %309 : vector<1x32xf32>
    %311 = arith.mulf %306, %310 : vector<1x32xf32>
    %cst_88 = arith.constant dense<0.000000e+00> : vector<1x64xf32>
    %312 = tpu.matmul %311, %10, %cst_88 {dimension_numbers = #tpu.dot_dimension_numbers<[1], [0], [0], [1], [0, 0, 1, 1], [], []>} : vector<1x32xf32>, vector<32x64xf32>, vector<1x64xf32> -> vector<1x64xf32>
    %313 = arith.addf %312, %11 : vector<1x64xf32>
    %cst_89 = arith.constant dense<0xFF800000> : vector<1xf32>
    %314 = vector.multi_reduction <maximumf>, %313, %cst_89 [1] : vector<1x64xf32> to vector<1xf32>
    %315 = vector.shape_cast %314 : vector<1xf32> to vector<1x1xf32>
    %316 = vector.broadcast %315 : vector<1x1xf32> to vector<1x64xf32>
    %317 = arith.subf %313, %316 : vector<1x64xf32>
    %318 = math.exp %317 : vector<1x64xf32>
    %cst_90 = arith.constant dense<0.000000e+00> : vector<1xf32>
    %319 = vector.multi_reduction <add>, %318, %cst_90 [1] : vector<1x64xf32> to vector<1xf32>
    %320 = vector.shape_cast %319 : vector<1xf32> to vector<1x1xf32>
    %321 = math.log %320 : vector<1x1xf32>
    %322 = arith.addf %321, %315 : vector<1x1xf32>
    %323 = vector.broadcast %322 : vector<1x1xf32> to vector<1x64xf32>
    %324 = arith.subf %313, %323 : vector<1x64xf32>
    %cst_91 = arith.constant dense<0.000000e+00> : vector<1x256xf32>
    %325 = tpu.matmul %311, %7, %cst_91 {dimension_numbers = #tpu.dot_dimension_numbers<[1], [0], [0], [1], [0, 0, 1, 1], [], []>} : vector<1x32xf32>, vector<32x256xf32>, vector<1x256xf32> -> vector<1x256xf32>
    %326 = vector.extract_strided_slice %5 {offsets = [6, 0], sizes = [1, 256], strides = [1, 1]} : vector<8x256xf32> to vector<1x256xf32>
    %327 = arith.addf %325, %326 : vector<1x256xf32>
    %328 = vector.extract_strided_slice %327 {offsets = [0, 32], sizes = [1, 16], strides = [1, 1]} : vector<1x256xf32> to vector<1x16xf32>
    %cst_92 = arith.constant dense<0xFF800000> : vector<1xf32>
    %329 = vector.multi_reduction <maximumf>, %328, %cst_92 [1] : vector<1x16xf32> to vector<1xf32>
    %330 = vector.shape_cast %329 : vector<1xf32> to vector<1x1xf32>
    %331 = vector.broadcast %330 : vector<1x1xf32> to vector<1x16xf32>
    %332 = arith.subf %328, %331 : vector<1x16xf32>
    %333 = math.exp %332 : vector<1x16xf32>
    %cst_93 = arith.constant dense<0.000000e+00> : vector<1xf32>
    %334 = vector.multi_reduction <add>, %333, %cst_93 [1] : vector<1x16xf32> to vector<1xf32>
    %335 = vector.shape_cast %334 : vector<1xf32> to vector<1x1xf32>
    %336 = vector.broadcast %335 : vector<1x1xf32> to vector<1x16xf32>
    %337 = arith.divf %333, %336 : vector<1x16xf32>
    %cst_94 = arith.constant dense<0.000000e+00> : vector<1x32xf32>
    %338 = tpu.matmul %337, %6, %cst_94 {dimension_numbers = #tpu.dot_dimension_numbers<[1], [0], [0], [1], [0, 0, 1, 1], [], []>} : vector<1x16xf32>, vector<16x32xf32>, vector<1x32xf32> -> vector<1x32xf32>
    %339 = vector.extract_strided_slice %327 {offsets = [0, 0], sizes = [1, 32], strides = [1, 1]} : vector<1x256xf32> to vector<1x32xf32>
    %cst_95 = arith.constant dense<0.000000e+00> : vector<1x32xf32>
    %340 = tpu.matmul %338, %8, %cst_95 {dimension_numbers = #tpu.dot_dimension_numbers<[1], [0], [0], [1], [0, 0, 1, 1], [], []>} : vector<1x32xf32>, vector<32x32xf32>, vector<1x32xf32> -> vector<1x32xf32>
    %341 = arith.addf %339, %340 : vector<1x32xf32>
    %cst_96 = arith.constant 0.000000e+00 : f32
    %342 = vector.broadcast %cst_96 : f32 to vector<1x32xf32>
    %343 = arith.maximumf %341, %342 : vector<1x32xf32>
    %cst_97 = arith.constant dense<0.000000e+00> : vector<1x128xf32>
    %344 = tpu.matmul %343, %9, %cst_97 {dimension_numbers = #tpu.dot_dimension_numbers<[1], [0], [0], [1], [0, 0, 1, 1], [], []>} : vector<1x32xf32>, vector<32x128xf32>, vector<1x128xf32> -> vector<1x128xf32>
    %345 = vector.extract_strided_slice %327 {offsets = [0, 128], sizes = [1, 128], strides = [1, 1]} : vector<1x256xf32> to vector<1x128xf32>
    %346 = arith.addf %344, %345 : vector<1x128xf32>
    %347 = vector.extract_strided_slice %346 {offsets = [0, 0], sizes = [1, 32], strides = [1, 1]} : vector<1x128xf32> to vector<1x32xf32>
    %348 = arith.negf %347 : vector<1x32xf32>
    %349 = math.exp %348 : vector<1x32xf32>
    %cst_98 = arith.constant 1.000000e+00 : f32
    %350 = vector.broadcast %cst_98 : f32 to vector<1x32xf32>
    %351 = arith.addf %350, %349 : vector<1x32xf32>
    %352 = arith.divf %350, %351 : vector<1x32xf32>
    %353 = vector.extract_strided_slice %346 {offsets = [0, 32], sizes = [1, 32], strides = [1, 1]} : vector<1x128xf32> to vector<1x32xf32>
    %354 = arith.negf %353 : vector<1x32xf32>
    %355 = math.exp %354 : vector<1x32xf32>
    %cst_99 = arith.constant 1.000000e+00 : f32
    %356 = vector.broadcast %cst_99 : f32 to vector<1x32xf32>
    %357 = arith.addf %356, %355 : vector<1x32xf32>
    %358 = arith.divf %356, %357 : vector<1x32xf32>
    %359 = vector.extract_strided_slice %346 {offsets = [0, 64], sizes = [1, 32], strides = [1, 1]} : vector<1x128xf32> to vector<1x32xf32>
    %360 = math.tanh %359 : vector<1x32xf32>
    %361 = arith.mulf %352, %360 : vector<1x32xf32>
    %362 = math.tanh %361 : vector<1x32xf32>
    %363 = arith.mulf %358, %362 : vector<1x32xf32>
    %cst_100 = arith.constant dense<0.000000e+00> : vector<1x64xf32>
    %364 = tpu.matmul %363, %10, %cst_100 {dimension_numbers = #tpu.dot_dimension_numbers<[1], [0], [0], [1], [0, 0, 1, 1], [], []>} : vector<1x32xf32>, vector<32x64xf32>, vector<1x64xf32> -> vector<1x64xf32>
    %365 = arith.addf %364, %11 : vector<1x64xf32>
    %cst_101 = arith.constant dense<0xFF800000> : vector<1xf32>
    %366 = vector.multi_reduction <maximumf>, %365, %cst_101 [1] : vector<1x64xf32> to vector<1xf32>
    %367 = vector.shape_cast %366 : vector<1xf32> to vector<1x1xf32>
    %368 = vector.broadcast %367 : vector<1x1xf32> to vector<1x64xf32>
    %369 = arith.subf %365, %368 : vector<1x64xf32>
    %370 = math.exp %369 : vector<1x64xf32>
    %cst_102 = arith.constant dense<0.000000e+00> : vector<1xf32>
    %371 = vector.multi_reduction <add>, %370, %cst_102 [1] : vector<1x64xf32> to vector<1xf32>
    %372 = vector.shape_cast %371 : vector<1xf32> to vector<1x1xf32>
    %373 = math.log %372 : vector<1x1xf32>
    %374 = arith.addf %373, %367 : vector<1x1xf32>
    %375 = vector.broadcast %374 : vector<1x1xf32> to vector<1x64xf32>
    %376 = arith.subf %365, %375 : vector<1x64xf32>
    %cst_103 = arith.constant dense<0.000000e+00> : vector<1x256xf32>
    %377 = tpu.matmul %363, %7, %cst_103 {dimension_numbers = #tpu.dot_dimension_numbers<[1], [0], [0], [1], [0, 0, 1, 1], [], []>} : vector<1x32xf32>, vector<32x256xf32>, vector<1x256xf32> -> vector<1x256xf32>
    %378 = vector.extract_strided_slice %5 {offsets = [7, 0], sizes = [1, 256], strides = [1, 1]} : vector<8x256xf32> to vector<1x256xf32>
    %379 = arith.addf %377, %378 : vector<1x256xf32>
    %380 = vector.extract_strided_slice %379 {offsets = [0, 32], sizes = [1, 16], strides = [1, 1]} : vector<1x256xf32> to vector<1x16xf32>
    %cst_104 = arith.constant dense<0xFF800000> : vector<1xf32>
    %381 = vector.multi_reduction <maximumf>, %380, %cst_104 [1] : vector<1x16xf32> to vector<1xf32>
    %382 = vector.shape_cast %381 : vector<1xf32> to vector<1x1xf32>
    %383 = vector.broadcast %382 : vector<1x1xf32> to vector<1x16xf32>
    %384 = arith.subf %380, %383 : vector<1x16xf32>
    %385 = math.exp %384 : vector<1x16xf32>
    %cst_105 = arith.constant dense<0.000000e+00> : vector<1xf32>
    %386 = vector.multi_reduction <add>, %385, %cst_105 [1] : vector<1x16xf32> to vector<1xf32>
    %387 = vector.shape_cast %386 : vector<1xf32> to vector<1x1xf32>
    %388 = vector.broadcast %387 : vector<1x1xf32> to vector<1x16xf32>
    %389 = arith.divf %385, %388 : vector<1x16xf32>
    %cst_106 = arith.constant dense<0.000000e+00> : vector<1x32xf32>
    %390 = tpu.matmul %389, %6, %cst_106 {dimension_numbers = #tpu.dot_dimension_numbers<[1], [0], [0], [1], [0, 0, 1, 1], [], []>} : vector<1x16xf32>, vector<16x32xf32>, vector<1x32xf32> -> vector<1x32xf32>
    %391 = vector.extract_strided_slice %379 {offsets = [0, 0], sizes = [1, 32], strides = [1, 1]} : vector<1x256xf32> to vector<1x32xf32>
    %cst_107 = arith.constant dense<0.000000e+00> : vector<1x32xf32>
    %392 = tpu.matmul %390, %8, %cst_107 {dimension_numbers = #tpu.dot_dimension_numbers<[1], [0], [0], [1], [0, 0, 1, 1], [], []>} : vector<1x32xf32>, vector<32x32xf32>, vector<1x32xf32> -> vector<1x32xf32>
    %393 = arith.addf %391, %392 : vector<1x32xf32>
    %cst_108 = arith.constant 0.000000e+00 : f32
    %394 = vector.broadcast %cst_108 : f32 to vector<1x32xf32>
    %395 = arith.maximumf %393, %394 : vector<1x32xf32>
    %cst_109 = arith.constant dense<0.000000e+00> : vector<1x128xf32>
    %396 = tpu.matmul %395, %9, %cst_109 {dimension_numbers = #tpu.dot_dimension_numbers<[1], [0], [0], [1], [0, 0, 1, 1], [], []>} : vector<1x32xf32>, vector<32x128xf32>, vector<1x128xf32> -> vector<1x128xf32>
    %397 = vector.extract_strided_slice %379 {offsets = [0, 128], sizes = [1, 128], strides = [1, 1]} : vector<1x256xf32> to vector<1x128xf32>
    %398 = arith.addf %396, %397 : vector<1x128xf32>
    %399 = vector.extract_strided_slice %398 {offsets = [0, 0], sizes = [1, 32], strides = [1, 1]} : vector<1x128xf32> to vector<1x32xf32>
    %400 = arith.negf %399 : vector<1x32xf32>
    %401 = math.exp %400 : vector<1x32xf32>
    %cst_110 = arith.constant 1.000000e+00 : f32
    %402 = vector.broadcast %cst_110 : f32 to vector<1x32xf32>
    %403 = arith.addf %402, %401 : vector<1x32xf32>
    %404 = arith.divf %402, %403 : vector<1x32xf32>
    %405 = vector.extract_strided_slice %398 {offsets = [0, 32], sizes = [1, 32], strides = [1, 1]} : vector<1x128xf32> to vector<1x32xf32>
    %406 = arith.negf %405 : vector<1x32xf32>
    %407 = math.exp %406 : vector<1x32xf32>
    %cst_111 = arith.constant 1.000000e+00 : f32
    %408 = vector.broadcast %cst_111 : f32 to vector<1x32xf32>
    %409 = arith.addf %408, %407 : vector<1x32xf32>
    %410 = arith.divf %408, %409 : vector<1x32xf32>
    %411 = vector.extract_strided_slice %398 {offsets = [0, 64], sizes = [1, 32], strides = [1, 1]} : vector<1x128xf32> to vector<1x32xf32>
    %412 = math.tanh %411 : vector<1x32xf32>
    %413 = arith.mulf %404, %412 : vector<1x32xf32>
    %414 = math.tanh %413 : vector<1x32xf32>
    %415 = arith.mulf %410, %414 : vector<1x32xf32>
    %cst_112 = arith.constant dense<0.000000e+00> : vector<1x64xf32>
    %416 = tpu.matmul %415, %10, %cst_112 {dimension_numbers = #tpu.dot_dimension_numbers<[1], [0], [0], [1], [0, 0, 1, 1], [], []>} : vector<1x32xf32>, vector<32x64xf32>, vector<1x64xf32> -> vector<1x64xf32>
    %417 = arith.addf %416, %11 : vector<1x64xf32>
    %cst_113 = arith.constant dense<0xFF800000> : vector<1xf32>
    %418 = vector.multi_reduction <maximumf>, %417, %cst_113 [1] : vector<1x64xf32> to vector<1xf32>
    %419 = vector.shape_cast %418 : vector<1xf32> to vector<1x1xf32>
    %420 = vector.broadcast %419 : vector<1x1xf32> to vector<1x64xf32>
    %421 = arith.subf %417, %420 : vector<1x64xf32>
    %422 = math.exp %421 : vector<1x64xf32>
    %cst_114 = arith.constant dense<0.000000e+00> : vector<1xf32>
    %423 = vector.multi_reduction <add>, %422, %cst_114 [1] : vector<1x64xf32> to vector<1xf32>
    %424 = vector.shape_cast %423 : vector<1xf32> to vector<1x1xf32>
    %425 = math.log %424 : vector<1x1xf32>
    %426 = arith.addf %425, %419 : vector<1x1xf32>
    %427 = vector.broadcast %426 : vector<1x1xf32> to vector<1x64xf32>
    %428 = arith.subf %417, %427 : vector<1x64xf32>
    %cst_115 = arith.constant 0.000000e+00 : f32
    %429 = vector.broadcast %cst_115 : f32 to vector<8x16xf32>
    %430 = tpu.concatenate %64, %116, %168, %220, %272, %324, %376, %428 in 0 : vector<1x64xf32>, vector<1x64xf32>, vector<1x64xf32>, vector<1x64xf32>, vector<1x64xf32>, vector<1x64xf32>, vector<1x64xf32>, vector<1x64xf32> -> vector<8x64xf32>
    %431 = tpu.concatenate %51, %103, %155, %207, %259, %311, %363, %415 in 0 : vector<1x32xf32>, vector<1x32xf32>, vector<1x32xf32>, vector<1x32xf32>, vector<1x32xf32>, vector<1x32xf32>, vector<1x32xf32>, vector<1x32xf32> -> vector<8x32xf32>
    %432 = tpu.concatenate %25, %77, %129, %181, %233, %285, %337, %389 in 0 : vector<1x16xf32>, vector<1x16xf32>, vector<1x16xf32>, vector<1x16xf32>, vector<1x16xf32>, vector<1x16xf32>, vector<1x16xf32>, vector<1x16xf32> -> vector<8x16xf32>
    %433 = tpu.concatenate %430, %431, %432, %429 in 1 : vector<8x64xf32>, vector<8x32xf32>, vector<8x16xf32>, vector<8x16xf32> -> vector<8x128xf32>
    %c0_116 = arith.constant 0 : index
    %c0_117 = arith.constant 0 : index
    %434 = vector.load %arg11[%c0_116, %c0_117] : memref<8x128xf32, #tpu.memory_space<vmem>>, vector<8x128xf32>
    tpu.vector_store %arg11[%c0_116, %c0_117], %433 {strides = array<i32>} : memref<8x128xf32, #tpu.memory_space<vmem>>, vector<8x128xf32>,
    return
  }
  func.func @transform_0(%arg0: i32) -> (i32, i32) {
    %c0_i32 = arith.constant 0 : i32
    %c0_i32_0 = arith.constant 0 : i32
    %c0_i32_1 = arith.constant 0 : i32
    return %c0_i32, %c0_i32_0 : i32, i32
  }
  func.func @transform_1(%arg0: i32) -> (i32, i32) {
    %c0_i32 = arith.constant 0 : i32
    %c0_i32_0 = arith.constant 0 : i32
    %c0_i32_1 = arith.constant 0 : i32
    return %c0_i32, %c0_i32_0 : i32, i32
  }
  func.func @transform_2(%arg0: i32) -> (i32, i32) {
    %c0_i32 = arith.constant 0 : i32
    %c0_i32_0 = arith.constant 0 : i32
    %c0_i32_1 = arith.constant 0 : i32
    return %c0_i32, %c0_i32_0 : i32, i32
  }
  func.func @transform_3(%arg0: i32) -> (i32, i32) {
    %c0_i32 = arith.constant 0 : i32
    %c0_i32_0 = arith.constant 0 : i32
    %c0_i32_1 = arith.constant 0 : i32
    return %c0_i32, %c0_i32_0 : i32, i32
  }
  func.func @transform_4(%arg0: i32) -> (i32, i32) {
    %c0_i32 = arith.constant 0 : i32
    %c0_i32_0 = arith.constant 0 : i32
    %c0_i32_1 = arith.constant 0 : i32
    return %c0_i32, %c0_i32_0 : i32, i32
  }
  func.func @transform_5(%arg0: i32) -> (i32, i32) {
    %c0_i32 = arith.constant 0 : i32
    %c0_i32_0 = arith.constant 0 : i32
    %c0_i32_1 = arith.constant 0 : i32
    return %c0_i32, %c0_i32_0 : i32, i32
  }
  func.func @transform_6(%arg0: i32) -> (i32, i32) {
    %c0_i32 = arith.constant 0 : i32
    %c0_i32_0 = arith.constant 0 : i32
    %c0_i32_1 = arith.constant 0 : i32
    return %c0_i32, %c0_i32_0 : i32, i32
  }
  func.func @transform_7(%arg0: i32) -> (i32, i32) {
    %c0_i32 = arith.constant 0 : i32
    %c0_i32_0 = arith.constant 0 : i32
    %c0_i32_1 = arith.constant 0 : i32
    return %c0_i32, %c0_i32_0 : i32, i32
  }
  func.func @transform_8(%arg0: i32) -> (i32, i32) {
    %c0_i32 = arith.constant 0 : i32
    %c0_i32_0 = arith.constant 0 : i32
    %c0_i32_1 = arith.constant 0 : i32
    return %c0_i32, %c0_i32_0 : i32, i32
  }
  func.func @transform_9(%arg0: i32) -> (i32, i32) {
    %c0_i32 = arith.constant 0 : i32
    %c0_i32_0 = arith.constant 0 : i32
    %c0_i32_1 = arith.constant 0 : i32
    return %c0_i32, %c0_i32_0 : i32, i32
  }
  func.func @transform_10(%arg0: i32) -> (i32, i32) {
    %c0_i32 = arith.constant 0 : i32
    %c0_i32_0 = arith.constant 0 : i32
    %c0_i32_1 = arith.constant 0 : i32
    return %c0_i32, %c0_i32_0 : i32, i32
  }
}

</mosaic_0001>

<llo_original>
// kernel: tpu_custom_call.1
$region0: #{tpu_custom_call.1}
  #allocation0 [shape = 'u32[]', space=smem, size = 0x4, offset = 0x4, fixed_abs, tag = 'smem constant byte address 0x4 - core index']
  #allocation1 [shape = 'u32[144,128]{1,0:T(1,128)}', space=vmem, size = 0x12000, scoped, tag = 'internal scratch']
  %s0 = inlined_call_operand.hbm [shape: f32[8,32], index: 0, kind: input, shape index: {}]
  %s1 = inlined_call_operand.vmem [shape: f32[1,32], index: 1, kind: input, shape index: {}]
  %s2 = inlined_call_operand.hbm [shape: f32[16,32], index: 2, kind: input, shape index: {}]
  %s3 = inlined_call_operand.hbm [shape: f32[32,256], index: 3, kind: input, shape index: {}]
  %s4 = inlined_call_operand.vmem [shape: f32[1,256], index: 4, kind: input, shape index: {}]
  %s5 = inlined_call_operand.hbm [shape: f32[32,256], index: 5, kind: input, shape index: {}]
  %s6 = inlined_call_operand.hbm [shape: f32[32,32], index: 6, kind: input, shape index: {}]
  %s7 = inlined_call_operand.hbm [shape: f32[32,128], index: 7, kind: input, shape index: {}]
  %s8 = inlined_call_operand.hbm [shape: f32[32,64], index: 8, kind: input, shape index: {}]
  %s9 = inlined_call_operand.vmem [shape: f32[1,64], index: 9, kind: input, shape index: {}]
  %s10 = inlined_call_operand.hbm [shape: f32[8,128], index: 10, kind: output, shape index: {}]
  %s11 = sld [smem:[#allocation0]]
  $region78: #{tpu_custom_call.1} parent=0
    _
  %s13 = ssub.s32 1, %s11
  %s14 = scalar_select 0, %s13, %s11
  $region1: #{tpu_custom_call.1} parent=0
    #allocation2 [shape = 'u8[4096]{0}', space=vmem, size = 0x1000, scoped, tag = 'input window, operand 0, single buffered']
    #allocation3 [shape = 's32[1]{0}', space=sflag, size = 0x4, scoped, tag = 'scoped memory for tpu_custom_call.1']
    #allocation4 [shape = 's32[1]{0}', space=sflag, size = 0x4, scoped, tag = 'scoped memory for tpu_custom_call.1']
    #allocation5 [shape = 'u8[8192]{0}', space=vmem, size = 0x2000, scoped, tag = 'input window, operand 2, single buffered']
    #allocation6 [shape = 's32[1]{0}', space=sflag, size = 0x4, scoped, tag = 'scoped memory for tpu_custom_call.1']
    #allocation7 [shape = 'u8[32768]{0}', space=vmem, size = 0x8000, scoped, tag = 'input window, operand 3, single buffered']
    #allocation8 [shape = 'u8[32768]{0}', space=vmem, size = 0x8000, scoped, tag = 'input window, operand 5, single buffered']
    #allocation9 [shape = 's32[1]{0}', space=sflag, size = 0x4, scoped, tag = 'scoped memory for tpu_custom_call.1']
    #allocation10 [shape = 'u8[16384]{0}', space=vmem, size = 0x4000, scoped, tag = 'input window, operand 6, single buffered']
    #allocation11 [shape = 'u8[16384]{0}', space=vmem, size = 0x4000, scoped, tag = 'input window, operand 7, single buffered']
    #allocation12 [shape = 's32[1]{0}', space=sflag, size = 0x4, scoped, tag = 'scoped memory for tpu_custom_call.1']
    #allocation13 [shape = 'u8[16384]{0}', space=vmem, size = 0x4000, scoped, tag = 'input window, operand 8, single buffered']
    #allocation14 [shape = 'u8[4096]{0}', space=vmem, size = 0x1000, scoped, tag = 'output window, operand 0, single buffered']
    %15 = vsyncpa [#allocation3], 0
    %16 = vsyncpa [#allocation6], 0
    %17 = vsyncpa [#allocation9], 0
    %18 = vsyncpa [#allocation12], 0
    %19 = vsyncpa [#allocation4], 0
    // Predicated region
    $region2: #{tpu_custom_call.1} parent=1 // pred_check
      _
    $region3: #{tpu_custom_call.1} parent=1 // pred_check_branch
      %21 = sbr.rel (0) target = $region5
    $region4: #{tpu_custom_call.1} parent=1 // pred_region
      %s23 = ssub.s32 128, 128
      %24 = vsyncadd [#allocation3], %s23
      %s26 = sshll.u32 [#allocation2], 4
      %s27 = int_to_ptr.vmem [resolvable:$true] %s26
      %29 = dma.hbm_to_vmem [thread:$0]  %s0, 128, %s27, [#allocation3]
    $region5: #{tpu_custom_call.1} parent=1 // pred_fallthru
      _
    // Predicated region
    $region6: #{tpu_custom_call.1} parent=1 // pred_check
      _
    $region7: #{tpu_custom_call.1} parent=1 // pred_check_branch
      %31 = sbr.rel (0) target = $region9
    $region8: #{tpu_custom_call.1} parent=1 // pred_region
      _
    $region9: #{tpu_custom_call.1} parent=1 // pred_fallthru
      _
    // Predicated region
    $region10: #{tpu_custom_call.1} parent=1 // pred_check
      _
    $region11: #{tpu_custom_call.1} parent=1 // pred_check_branch
      %33 = sbr.rel (0) target = $region13
    $region12: #{tpu_custom_call.1} parent=1 // pred_region
      %s35 = ssub.s32 256, 256
      %36 = vsyncadd [#allocation6], %s35
      %s37 = sshll.u32 [#allocation5], 4
      %s38 = int_to_ptr.vmem [resolvable:$true] %s37
      %43 = dma.hbm_to_vmem [thread:$0]  %s2, 256, %s38, [#allocation6], 128, 128, 8
    $region13: #{tpu_custom_call.1} parent=1 // pred_fallthru
      _
    // Predicated region
    $region14: #{tpu_custom_call.1} parent=1 // pred_check
      _
    $region15: #{tpu_custom_call.1} parent=1 // pred_check_branch
      %45 = sbr.rel (0) target = $region17
    $region16: #{tpu_custom_call.1} parent=1 // pred_region
      %s47 = ssub.s32 1024, 1024
      %48 = vsyncadd [#allocation6], %s47
      %s49 = sshll.u32 [#allocation7], 4
      %s50 = int_to_ptr.vmem [resolvable:$true] %s49
      %55 = dma.hbm_to_vmem [thread:$0]  %s3, 1024, %s50, [#allocation6], 256, 256, 16
    $region17: #{tpu_custom_call.1} parent=1 // pred_fallthru
      _
    // Predicated region
    $region18: #{tpu_custom_call.1} parent=1 // pred_check
      _
    $region19: #{tpu_custom_call.1} parent=1 // pred_check_branch
      %57 = sbr.rel (0) target = $region21
    $region20: #{tpu_custom_call.1} parent=1 // pred_region
      _
    $region21: #{tpu_custom_call.1} parent=1 // pred_fallthru
      _
    // Predicated region
    $region22: #{tpu_custom_call.1} parent=1 // pred_check
      _
    $region23: #{tpu_custom_call.1} parent=1 // pred_check_branch
      %59 = sbr.rel (0) target = $region25
    $region24: #{tpu_custom_call.1} parent=1 // pred_region
      %s61 = ssub.s32 1024, 1024
      %62 = vsyncadd [#allocation9], %s61
      %s63 = sshll.u32 [#allocation8], 4
      %s64 = int_to_ptr.vmem [resolvable:$true] %s63
      %69 = dma.hbm_to_vmem [thread:$0]  %s5, 1024, %s64, [#allocation9], 256, 256, 16
    $region25: #{tpu_custom_call.1} parent=1 // pred_fallthru
      _
    // Predicated region
    $region26: #{tpu_custom_call.1} parent=1 // pred_check
      _
    $region27: #{tpu_custom_call.1} parent=1 // pred_check_branch
      %71 = sbr.rel (0) target = $region29
    $region28: #{tpu_custom_call.1} parent=1 // pred_region
      %s73 = ssub.s32 512, 512
      %74 = vsyncadd [#allocation9], %s73
      %s75 = sshll.u32 [#allocation10], 4
      %s76 = int_to_ptr.vmem [resolvable:$true] %s75
      %81 = dma.hbm_to_vmem [thread:$0]  %s6, 512, %s76, [#allocation9], 128, 128, 8
    $region29: #{tpu_custom_call.1} parent=1 // pred_fallthru
      _
    // Predicated region
    $region30: #{tpu_custom_call.1} parent=1 // pred_check
      _
    $region31: #{tpu_custom_call.1} parent=1 // pred_check_branch
      %83 = sbr.rel (0) target = $region33
    $region32: #{tpu_custom_call.1} parent=1 // pred_region
      %s85 = ssub.s32 512, 512
      %86 = vsyncadd [#allocation12], %s85
      %s87 = sshll.u32 [#allocation11], 4
      %s88 = int_to_ptr.vmem [resolvable:$true] %s87
      %93 = dma.hbm_to_vmem [thread:$0]  %s7, 512, %s88, [#allocation12], 128, 128, 8
    $region33: #{tpu_custom_call.1} parent=1 // pred_fallthru
      _
    // Predicated region
    $region34: #{tpu_custom_call.1} parent=1 // pred_check
      _
    $region35: #{tpu_custom_call.1} parent=1 // pred_check_branch
      %95 = sbr.rel (0) target = $region37
    $region36: #{tpu_custom_call.1} parent=1 // pred_region
      %s97 = ssub.s32 512, 512
      %98 = vsyncadd [#allocation12], %s97
      %s99 = sshll.u32 [#allocation13], 4
      %s100 = int_to_ptr.vmem [resolvable:$true] %s99
      %105 = dma.hbm_to_vmem [thread:$0]  %s8, 512, %s100, [#allocation12], 128, 128, 8
    $region37: #{tpu_custom_call.1} parent=1 // pred_fallthru
      _
    // Predicated region
    $region38: #{tpu_custom_call.1} parent=1 // pred_check
      _
    $region39: #{tpu_custom_call.1} parent=1 // pred_check_branch
      %107 = sbr.rel (0) target = $region41
    $region40: #{tpu_custom_call.1} parent=1 // pred_region
      _
    $region41: #{tpu_custom_call.1} parent=1 // pred_fallthru
      _
    // Predicated region
    $region42: #{tpu_custom_call.1} parent=1 // pred_check
      _
    $region43: #{tpu_custom_call.1} parent=1 // pred_check_branch
      %109 = sbr.rel (0) target = $region45
    $region44: #{tpu_custom_call.1} parent=1 // pred_region
      %110 = dma.done [#allocation3], 128
    $region45: #{tpu_custom_call.1} parent=1 // pred_fallthru
      _
    // Predicated region
    $region46: #{tpu_custom_call.1} parent=1 // pred_check
      _
    $region47: #{tpu_custom_call.1} parent=1 // pred_check_branch
      %112 = sbr.rel (0) target = $region49
    $region48: #{tpu_custom_call.1} parent=1 // pred_region
      %113 = dma.done [#allocation6], 256
    $region49: #{tpu_custom_call.1} parent=1 // pred_fallthru
      _
    // Predicated region
    $region50: #{tpu_custom_call.1} parent=1 // pred_check
      _
    $region51: #{tpu_custom_call.1} parent=1 // pred_check_branch
      %115 = sbr.rel (0) target = $region53
    $region52: #{tpu_custom_call.1} parent=1 // pred_region
      %116 = dma.done [#allocation6], 1024
    $region53: #{tpu_custom_call.1} parent=1 // pred_fallthru
      _
    // Predicated region
    $region54: #{tpu_custom_call.1} parent=1 // pred_check
      _
    $region55: #{tpu_custom_call.1} parent=1 // pred_check_branch
      %118 = sbr.rel (0) target = $region57
    $region56: #{tpu_custom_call.1} parent=1 // pred_region
      %119 = dma.done [#allocation9], 1024
    $region57: #{tpu_custom_call.1} parent=1 // pred_fallthru
      _
    // Predicated region
    $region58: #{tpu_custom_call.1} parent=1 // pred_check
      _
    $region59: #{tpu_custom_call.1} parent=1 // pred_check_branch
      %121 = sbr.rel (0) target = $region61
    $region60: #{tpu_custom_call.1} parent=1 // pred_region
      %122 = dma.done [#allocation9], 512
    $region61: #{tpu_custom_call.1} parent=1 // pred_fallthru
      _
    // Predicated region
    $region62: #{tpu_custom_call.1} parent=1 // pred_check
      _
    $region63: #{tpu_custom_call.1} parent=1 // pred_check_branch
      %124 = sbr.rel (0) target = $region65
    $region64: #{tpu_custom_call.1} parent=1 // pred_region
      %125 = dma.done [#allocation12], 512
    $region65: #{tpu_custom_call.1} parent=1 // pred_fallthru
      _
    // Predicated region
    $region66: #{tpu_custom_call.1} parent=1 // pred_check
      _
    $region67: #{tpu_custom_call.1} parent=1 // pred_check_branch
      %127 = sbr.rel (0) target = $region69
    $region68: #{tpu_custom_call.1} parent=1 // pred_region
      %128 = dma.done [#allocation12], 512
    $region69: #{tpu_custom_call.1} parent=1 // pred_fallthru
      _
    %v129 = vld [vmem:[#allocation2] sm:$0xff]
    %v130 = vld [vmem:[#allocation8] sm:$0xff]
    %v131 = vld [vmem:[#allocation8 + $0x8] sm:$0xff]
    %v132 = vld [vmem:[#allocation8 + $0x10] sm:$0xff]
    %v133 = vld [vmem:[#allocation8 + $0x18] sm:$0xff]
    %v134 = vld [vmem:[#allocation8 + $0x20] sm:$0xff]
    %v135 = vld [vmem:[#allocation8 + $0x28] sm:$0xff]
    %v136 = vld [vmem:[#allocation8 + $0x30] sm:$0xff]
    %v137 = vld [vmem:[#allocation8 + $0x38] sm:$0xff]
    %v138 = vld [vmem:[%s4] sm:$0x3]
    %v140 = vlaneseq
    %v141 = vshrl.u32 %v140, 7
    %v142 = vsub.s32 0, %v141
    %v143 = vrot.slane %v138, %v142
    %v144 = vlaneseq
    %v145 = vshrl.u32 %v144, 7
    %v146 = vsub.s32 1, %v145
    %v147 = vrot.slane %v138, %v146
    %vm150 = vcmask 261120
    %v152 = vsel %vm150, %v129, 0
    %154 = vmatprep.subr.mxu0 %v131
    %155 = vmatpush1.msra.mxu0 %v130
    %156 = vmatprep.subr.mxu0 %v133
    %157 = vmatpush1.msra.mxu0 %v132
    %158 = vmatprep.subr.mxu0 %v135
    %159 = vmatpush1.msra.mxu0 %v134
    %160 = vmatprep.subr.mxu0 %v137
    %161 = vmatpush1.msra.mxu0 %v136
    %162 = vmatprep.subr.mxu0 0.0
    %163 = vmatpush1.msra.mxu0 0.0
    %164 = vmatprep.subr.mxu0 0.0
    %165 = vmatpush1.msra.mxu0 0.0
    %166 = vmatprep.subr.mxu0 0.0
    %167 = vmatpush1.msra.mxu0 0.0
    %168 = vmatprep.subr.mxu0 0.0
    %169 = vmatpush1.msra.mxu0 0.0
    %170 = vmatprep.subr.mxu0 0.0
    %171 = vmatpush1.msra.mxu0 0.0
    %172 = vmatprep.subr.mxu0 0.0
    %173 = vmatpush1.msra.mxu0 0.0
    %174 = vmatprep.subr.mxu0 0.0
    %175 = vmatpush1.msra.mxu0 0.0
    %176 = vmatprep.subr.mxu0 0.0
    %177 = vmatpush1.msra.mxu0 0.0
    %178 = vmatprep.subr.mxu0 0.0
    %179 = vmatpush1.msra.mxu0 0.0
    %180 = vmatprep.subr.mxu0 0.0
    %181 = vmatpush1.msra.mxu0 0.0
    %182 = vmatprep.subr.mxu0 0.0
    %183 = vmatpush1.msra.mxu0 0.0
    %184 = vmatprep.subr.mxu0 0.0
    %185 = vmatpush1.msra.mxu0 0.0
    %186 = vmatprep.subr.mxu0 0.0
    %187 = vmatpush1.msra.mxu0 0.0
    %188 = vmatprep.subr.mxu0 0.0
    %189 = vmatpush1.msra.mxu0 0.0
    %190 = vmatprep.subr.mxu0 0.0
    %191 = vmatpush1.msra.mxu0 0.0
    %192 = vmatprep.subr.mxu0 0.0
    %193 = vmatpush1.msra.mxu0 0.0
    %194 = vmatprep.subr.mxu0 0.0
    %195 = vmatpush1.msra.mxu0 0.0
    %196 = vmatprep.subr.mxu0 0.0
    %197 = vmatpush1.msra.mxu0 0.0
    %198 = vmatprep.subr.mxu0 0.0
    %199 = vmatpush1.msra.mxu0 0.0
    %200 = vmatprep.subr.mxu0 0.0
    %201 = vmatpush1.msra.mxu0 0.0
    %202 = vmatprep.subr.mxu0 0.0
    %203 = vmatpush1.msra.mxu0 0.0
    %204 = vmatprep.subr.mxu0 0.0
    %205 = vmatpush1.msra.mxu0 0.0
    %206 = vmatprep.subr.mxu0 0.0
    %207 = vmatpush1.msra.mxu0 0.0
    %208 = vmatprep.subr.mxu0 0.0
    %209 = vmatpush1.msra.mxu0 0.0
    %210 = vmatprep.subr.mxu0 0.0
    %211 = vmatpush1.msra.mxu0 0.0
    %212 = vmatprep.subr.mxu0 0.0
    %213 = vmatpush1.msra.mxu0 0.0
    %214 = vmatprep.subr.mxu0 0.0
    %215 = vmatpush1.msra.mxu0 0.0
    %216 = vmatprep.subr.mxu0 0.0
    %217 = vmatpush1.msra.mxu0 0.0
    %218 = vmatprep.mubr.f32.mxu0 0.0
    %219 = vmatmul.mubr.f32.gmra.mrb[0].mxu0 %v152
    %v220 = vpop.f32.mrb[0].mxu0
    %v221 = vadd.f32 %v143, %v220
    %v222 = vpop.f32.mrb[0].mxu0
    %v223 = vadd.f32 %v147, %v222
    %224 = vdwg.mxu0
    %v225 = vld [vmem:[#allocation5] sm:$0xff]
    %v226 = vld [vmem:[#allocation5 + $0x8] sm:$0xff]
    %v227 = vld [vmem:[#allocation7] sm:$0xff]
    %v228 = vld [vmem:[#allocation7 + $0x8] sm:$0xff]
    %v229 = vld [vmem:[#allocation7 + $0x10] sm:$0xff]
    %v230 = vld [vmem:[#allocation7 + $0x18] sm:$0xff]
    %v231 = vld [vmem:[#allocation7 + $0x20] sm:$0xff]
    %v232 = vld [vmem:[#allocation7 + $0x28] sm:$0xff]
    %v233 = vld [vmem:[#allocation7 + $0x30] sm:$0xff]
    %v234 = vld [vmem:[#allocation7 + $0x38] sm:$0xff]
    %v235 = vld [vmem:[#allocation10] sm:$0xff]
    %v236 = vld [vmem:[#allocation10 + $0x8] sm:$0xff]
    %v237 = vld [vmem:[#allocation10 + $0x10] sm:$0xff]
    %v238 = vld [vmem:[#allocation10 + $0x18] sm:$0xff]
    %v239 = vld [vmem:[#allocation11] sm:$0xff]
    %v240 = vld [vmem:[#allocation11 + $0x8] sm:$0xff]
    %v241 = vld [vmem:[#allocation11 + $0x10] sm:$0xff]
    %v242 = vld [vmem:[#allocation11 + $0x18] sm:$0xff]
    %v243 = vld [vmem:[#allocation13] sm:$0xff]
    %v244 = vld [vmem:[#allocation13 + $0x8] sm:$0xff]
    %v245 = vld [vmem:[#allocation13 + $0x10] sm:$0xff]
    %v246 = vld [vmem:[#allocation13 + $0x18] sm:$0xff]
    %v247 = vld [vmem:[%s9] sm:$0x1]
    %v248 = vld [vmem:[%s1] sm:$0x1]
    %v250 = vsel %vm150, %v248, 0
    %252 = vmatprep.subr.mxu0 %v228
    %253 = vmatpush1.msra.mxu0 %v227
    %254 = vmatprep.subr.mxu0 %v230
    %255 = vmatpush1.msra.mxu0 %v229
    %256 = vmatprep.subr.mxu0 %v232
    %257 = vmatpush1.msra.mxu0 %v231
    %258 = vmatprep.subr.mxu0 %v234
    %259 = vmatpush1.msra.mxu0 %v233
    %260 = vmatprep.subr.mxu0 0.0
    %261 = vmatpush1.msra.mxu0 0.0
    %262 = vmatprep.subr.mxu0 0.0
    %263 = vmatpush1.msra.mxu0 0.0
    %264 = vmatprep.subr.mxu0 0.0
    %265 = vmatpush1.msra.mxu0 0.0
    %266 = vmatprep.subr.mxu0 0.0
    %267 = vmatpush1.msra.mxu0 0.0
    %268 = vmatprep.subr.mxu0 0.0
    %269 = vmatpush1.msra.mxu0 0.0
    %270 = vmatprep.subr.mxu0 0.0
    %271 = vmatpush1.msra.mxu0 0.0
    %272 = vmatprep.subr.mxu0 0.0
    %273 = vmatpush1.msra.mxu0 0.0
    %274 = vmatprep.subr.mxu0 0.0
    %275 = vmatpush1.msra.mxu0 0.0
    %276 = vmatprep.subr.mxu0 0.0
    %277 = vmatpush1.msra.mxu0 0.0
    %278 = vmatprep.subr.mxu0 0.0
    %279 = vmatpush1.msra.mxu0 0.0
    %280 = vmatprep.subr.mxu0 0.0
    %281 = vmatpush1.msra.mxu0 0.0
    %282 = vmatprep.subr.mxu0 0.0
    %283 = vmatpush1.msra.mxu0 0.0
    %284 = vmatprep.subr.mxu0 0.0
    %285 = vmatpush1.msra.mxu0 0.0
    %286 = vmatprep.subr.mxu0 0.0
    %287 = vmatpush1.msra.mxu0 0.0
    %288 = vmatprep.subr.mxu0 0.0
    %289 = vmatpush1.msra.mxu0 0.0
    %290 = vmatprep.subr.mxu0 0.0
    %291 = vmatpush1.msra.mxu0 0.0
    %292 = vmatprep.subr.mxu0 0.0
    %293 = vmatpush1.msra.mxu0 0.0
    %294 = vmatprep.subr.mxu0 0.0
    %295 = vmatpush1.msra.mxu0 0.0
    %296 = vmatprep.subr.mxu0 0.0
    %297 = vmatpush1.msra.mxu0 0.0
    %298 = vmatprep.subr.mxu0 0.0
    %299 = vmatpush1.msra.mxu0 0.0
    %300 = vmatprep.subr.mxu0 0.0
    %301 = vmatpush1.msra.mxu0 0.0
    %302 = vmatprep.subr.mxu0 0.0
    %303 = vmatpush1.msra.mxu0 0.0
    %304 = vmatprep.subr.mxu0 0.0
    %305 = vmatpush1.msra.mxu0 0.0
    %306 = vmatprep.subr.mxu0 0.0
    %307 = vmatpush1.msra.mxu0 0.0
    %308 = vmatprep.subr.mxu0 0.0
    %309 = vmatpush1.msra.mxu0 0.0
    %310 = vmatprep.subr.mxu0 0.0
    %311 = vmatpush1.msra.mxu0 0.0
    %312 = vmatprep.subr.mxu0 0.0
    %313 = vmatpush1.msra.mxu0 0.0
    %314 = vmatprep.subr.mxu0 0.0
    %315 = vmatpush1.msra.mxu0 0.0
    %316 = vmatprep.mubr.f32.mxu0 0.0
    %317 = vmatmul.mubr.f32.gmra.mrb[0].mxu0 %v250
    %v318 = vpop.f32.mrb[0].mxu0
    %v319 = vadd.f32 %v221, %v318
    %v320 = vpop.f32.mrb[0].mxu0
    %v321 = vadd.f32 %v223, %v320
    %322 = vdwg.mxu0
    %vm323 = vcmask 385280
    %v324 = vsel %vm323, %v319, -inf
    %325 = vmax.xlane.f32.xlu0 %v324
    %v326 = vpop.xlane.xlu0 %325
    %v327 = vsub.f32 %v319, %v326
    %v328 = vmul.f32 %v327, 1.442695
    %v329 = vpow.pop %v328
    %331 = vrot.lane.b32.xlu0 %v329, 96
    %v332 = vpop.permute.xlu0 %331
    %vm334 = vcmask 122880
    %v335 = vsel %vm334, %v332, 0.0
    %336 = vadd.xlane.f32.xlu0 %v335
    %v337 = vpop.xlane.xlu0 %336
    %v338 = vrcp.pop %v337
    %v339 = vmul.f32 %v329, %v338
    %341 = vrot.lane.b32.xlu0 %v339, 96
    %v342 = vpop.permute.xlu0 %341
    %vm343 = vcmask 130048
    %v344 = vsel %vm343, %v342, 0
    %346 = vmatprep.subr.mxu0 0.0
    %347 = vmatpush1.msra.mxu0 %v225
    %348 = vmatprep.subr.mxu0 0.0
    %349 = vmatpush1.msra.mxu0 %v226
    %350 = vmatprep.subr.mxu0 0.0
    %351 = vmatpush1.msra.mxu0 0.0
    %352 = vmatprep.subr.mxu0 0.0
    %353 = vmatpush1.msra.mxu0 0.0
    %354 = vmatprep.subr.mxu0 0.0
    %355 = vmatpush1.msra.mxu0 0.0
    %356 = vmatprep.subr.mxu0 0.0
    %357 = vmatpush1.msra.mxu0 0.0
    %358 = vmatprep.subr.mxu0 0.0
    %359 = vmatpush1.msra.mxu0 0.0
    %360 = vmatprep.subr.mxu0 0.0
    %361 = vmatpush1.msra.mxu0 0.0
    %362 = vmatprep.subr.mxu0 0.0
    %363 = vmatpush1.msra.mxu0 0.0
    %364 = vmatprep.subr.mxu0 0.0
    %365 = vmatpush1.msra.mxu0 0.0
    %366 = vmatprep.subr.mxu0 0.0
    %367 = vmatpush1.msra.mxu0 0.0
    %368 = vmatprep.subr.mxu0 0.0
    %369 = vmatpush1.msra.mxu0 0.0
    %370 = vmatprep.subr.mxu0 0.0
    %371 = vmatpush1.msra.mxu0 0.0
    %372 = vmatprep.subr.mxu0 0.0
    %373 = vmatpush1.msra.mxu0 0.0
    %374 = vmatprep.subr.mxu0 0.0
    %375 = vmatpush1.msra.mxu0 0.0
    %376 = vmatprep.subr.mxu0 0.0
    %377 = vmatpush1.msra.mxu0 0.0
    %378 = vmatprep.subr.mxu0 0.0
    %379 = vmatpush1.msra.mxu0 0.0
    %380 = vmatprep.subr.mxu0 0.0
    %381 = vmatpush1.msra.mxu0 0.0
    %382 = vmatprep.subr.mxu0 0.0
    %383 = vmatpush1.msra.mxu0 0.0
    %384 = vmatprep.subr.mxu0 0.0
    %385 = vmatpush1.msra.mxu0 0.0
    %386 = vmatprep.subr.mxu0 0.0
    %387 = vmatpush1.msra.mxu0 0.0
    %388 = vmatprep.subr.mxu0 0.0
    %389 = vmatpush1.msra.mxu0 0.0
    %390 = vmatprep.subr.mxu0 0.0
    %391 = vmatpush1.msra.mxu0 0.0
    %392 = vmatprep.subr.mxu0 0.0
    %393 = vmatpush1.msra.mxu0 0.0
    %394 = vmatprep.subr.mxu0 0.0
    %395 = vmatpush1.msra.mxu0 0.0
    %396 = vmatprep.subr.mxu0 0.0
    %397 = vmatpush1.msra.mxu0 0.0
    %398 = vmatprep.subr.mxu0 0.0
    %399 = vmatpush1.msra.mxu0 0.0
    %400 = vmatprep.subr.mxu0 0.0
    %401 = vmatpush1.msra.mxu0 0.0
    %402 = vmatprep.subr.mxu0 0.0
    %403 = vmatpush1.msra.mxu0 0.0
    %404 = vmatprep.subr.mxu0 0.0
    %405 = vmatpush1.msra.mxu0 0.0
    %406 = vmatprep.subr.mxu0 0.0
    %407 = vmatpush1.msra.mxu0 0.0
    %408 = vmatprep.subr.mxu0 0.0
    %409 = vmatpush1.msra.mxu0 0.0
    %410 = vmatprep.mubr.f32.mxu0 0.0
    %411 = vmatmul.mubr.f32.gmra.mrb[0].mxu0 %v344
    %v412 = vpop.f32.mrb[0].mxu0
    %v413 = vadd.f32 0.0, %v412
    %v414 = vpop.f32.mrb[0].mxu0
    %415 = vdwg.mxu0
    %v417 = vsel %vm150, %v413, 0
    %419 = vmatprep.subr.mxu0 0.0
    %420 = vmatpush1.msra.mxu0 %v235
    %421 = vmatprep.subr.mxu0 0.0
    %422 = vmatpush1.msra.mxu0 %v236
    %423 = vmatprep.subr.mxu0 0.0
    %424 = vmatpush1.msra.mxu0 %v237
    %425 = vmatprep.subr.mxu0 0.0
    %426 = vmatpush1.msra.mxu0 %v238
    %427 = vmatprep.subr.mxu0 0.0
    %428 = vmatpush1.msra.mxu0 0.0
    %429 = vmatprep.subr.mxu0 0.0
    %430 = vmatpush1.msra.mxu0 0.0
    %431 = vmatprep.subr.mxu0 0.0
    %432 = vmatpush1.msra.mxu0 0.0
    %433 = vmatprep.subr.mxu0 0.0
    %434 = vmatpush1.msra.mxu0 0.0
    %435 = vmatprep.subr.mxu0 0.0
    %436 = vmatpush1.msra.mxu0 0.0
    %437 = vmatprep.subr.mxu0 0.0
    %438 = vmatpush1.msra.mxu0 0.0
    %439 = vmatprep.subr.mxu0 0.0
    %440 = vmatpush1.msra.mxu0 0.0
    %441 = vmatprep.subr.mxu0 0.0
    %442 = vmatpush1.msra.mxu0 0.0
    %443 = vmatprep.subr.mxu0 0.0
    %444 = vmatpush1.msra.mxu0 0.0
    %445 = vmatprep.subr.mxu0 0.0
    %446 = vmatpush1.msra.mxu0 0.0
    %447 = vmatprep.subr.mxu0 0.0
    %448 = vmatpush1.msra.mxu0 0.0
    %449 = vmatprep.subr.mxu0 0.0
    %450 = vmatpush1.msra.mxu0 0.0
    %451 = vmatprep.subr.mxu0 0.0
    %452 = vmatpush1.msra.mxu0 0.0
    %453 = vmatprep.subr.mxu0 0.0
    %454 = vmatpush1.msra.mxu0 0.0
    %455 = vmatprep.subr.mxu0 0.0
    %456 = vmatpush1.msra.mxu0 0.0
    %457 = vmatprep.subr.mxu0 0.0
    %458 = vmatpush1.msra.mxu0 0.0
    %459 = vmatprep.subr.mxu0 0.0
    %460 = vmatpush1.msra.mxu0 0.0
    %461 = vmatprep.subr.mxu0 0.0
    %462 = vmatpush1.msra.mxu0 0.0
    %463 = vmatprep.subr.mxu0 0.0
    %464 = vmatpush1.msra.mxu0 0.0
    %465 = vmatprep.subr.mxu0 0.0
    %466 = vmatpush1.msra.mxu0 0.0
    %467 = vmatprep.subr.mxu0 0.0
    %468 = vmatpush1.msra.mxu0 0.0
    %469 = vmatprep.subr.mxu0 0.0
    %470 = vmatpush1.msra.mxu0 0.0
    %471 = vmatprep.subr.mxu0 0.0
    %472 = vmatpush1.msra.mxu0 0.0
    %473 = vmatprep.subr.mxu0 0.0
    %474 = vmatpush1.msra.mxu0 0.0
    %475 = vmatprep.subr.mxu0 0.0
    %476 = vmatpush1.msra.mxu0 0.0
    %477 = vmatprep.subr.mxu0 0.0
    %478 = vmatpush1.msra.mxu0 0.0
    %479 = vmatprep.subr.mxu0 0.0
    %480 = vmatpush1.msra.mxu0 0.0
    %481 = vmatprep.subr.mxu0 0.0
    %482 = vmatpush1.msra.mxu0 0.0
    %483 = vmatprep.mubr.f32.mxu0 0.0
    %484 = vmatmul.mubr.f32.gmra.mrb[0].mxu0 %v417
    %v485 = vpop.f32.mrb[0].mxu0
    %v486 = vadd.f32 0.0, %v485
    %v487 = vpop.f32.mrb[0].mxu0
    %488 = vdwg.mxu0
    %v489 = vadd.f32 %v319, %v486
    %v490 = vmax.f32 %v489, 0.0
    %v492 = vsel %vm150, %v490, 0
    %494 = vmatprep.subr.mxu0 0.0
    %495 = vmatpush1.msra.mxu0 %v239
    %496 = vmatprep.subr.mxu0 0.0
    %497 = vmatpush1.msra.mxu0 %v240
    %498 = vmatprep.subr.mxu0 0.0
    %499 = vmatpush1.msra.mxu0 %v241
    %500 = vmatprep.subr.mxu0 0.0
    %501 = vmatpush1.msra.mxu0 %v242
    %502 = vmatprep.subr.mxu0 0.0
    %503 = vmatpush1.msra.mxu0 0.0
    %504 = vmatprep.subr.mxu0 0.0
    %505 = vmatpush1.msra.mxu0 0.0
    %506 = vmatprep.subr.mxu0 0.0
    %507 = vmatpush1.msra.mxu0 0.0
    %508 = vmatprep.subr.mxu0 0.0
    %509 = vmatpush1.msra.mxu0 0.0
    %510 = vmatprep.subr.mxu0 0.0
    %511 = vmatpush1.msra.mxu0 0.0
    %512 = vmatprep.subr.mxu0 0.0
    %513 = vmatpush1.msra.mxu0 0.0
    %514 = vmatprep.subr.mxu0 0.0
    %515 = vmatpush1.msra.mxu0 0.0
    %516 = vmatprep.subr.mxu0 0.0
    %517 = vmatpush1.msra.mxu0 0.0
    %518 = vmatprep.subr.mxu0 0.0
    %519 = vmatpush1.msra.mxu0 0.0
    %520 = vmatprep.subr.mxu0 0.0
    %521 = vmatpush1.msra.mxu0 0.0
    %522 = vmatprep.subr.mxu0 0.0
    %523 = vmatpush1.msra.mxu0 0.0
    %524 = vmatprep.subr.mxu0 0.0
    %525 = vmatpush1.msra.mxu0 0.0
    %526 = vmatprep.subr.mxu0 0.0
    %527 = vmatpush1.msra.mxu0 0.0
    %528 = vmatprep.subr.mxu0 0.0
    %529 = vmatpush1.msra.mxu0 0.0
    %530 = vmatprep.subr.mxu0 0.0
    %531 = vmatpush1.msra.mxu0 0.0
    %532 = vmatprep.subr.mxu0 0.0
    %533 = vmatpush1.msra.mxu0 0.0
    %534 = vmatprep.subr.mxu0 0.0
    %535 = vmatpush1.msra.mxu0 0.0
    %536 = vmatprep.subr.mxu0 0.0
    %537 = vmatpush1.msra.mxu0 0.0
    %538 = vmatprep.subr.mxu0 0.0
    %539 = vmatpush1.msra.mxu0 0.0
    %540 = vmatprep.subr.mxu0 0.0
    %541 = vmatpush1.msra.mxu0 0.0
    %542 = vmatprep.subr.mxu0 0.0
    %543 = vmatpush1.msra.mxu0 0.0
    %544 = vmatprep.subr.mxu0 0.0
    %545 = vmatpush1.msra.mxu0 0.0
    %546 = vmatprep.subr.mxu0 0.0
    %547 = vmatpush1.msra.mxu0 0.0
    %548 = vmatprep.subr.mxu0 0.0
    %549 = vmatpush1.msra.mxu0 0.0
    %550 = vmatprep.subr.mxu0 0.0
    %551 = vmatpush1.msra.mxu0 0.0
    %552 = vmatprep.subr.mxu0 0.0
    %553 = vmatpush1.msra.mxu0 0.0
    %554 = vmatprep.subr.mxu0 0.0
    %555 = vmatpush1.msra.mxu0 0.0
    %556 = vmatprep.subr.mxu0 0.0
    %557 = vmatpush1.msra.mxu0 0.0
    %558 = vmatprep.mubr.f32.mxu0 0.0
    %559 = vmatmul.mubr.f32.gmra.mrb[0].mxu0 %v492
    %v560 = vpop.f32.mrb[0].mxu0
    %v561 = vadd.f32 %v321, %v560
    %v562 = vpop.f32.mrb[0].mxu0
    %563 = vdwg.mxu0
    %v564 = vxor.u32 %v561, 2147483648
    %v565 = vmul.f32 %v564, 1.442695
    %v566 = vpow.pop %v565
    %v567 = vadd.f32 %v566, 1.0
    %v568 = vrcp.pop %v567
    %v569 = vmul.f32 1.0, %v568
    %v570 = vtanh.pop %v561
    %572 = vrot.lane.b32.xlu0 %v570, 64
    %v573 = vpop.permute.xlu0 %572
    %v575 = vmul.f32 %v569, %v573
    %v576 = vtanh.pop %v575
    %578 = vrot.lane.b32.xlu0 %v576, 32
    %v579 = vpop.permute.xlu0 %578
    %v581 = vmul.f32 %v569, %v579
    %583 = vrot.lane.b32.xlu0 %v581, 96
    %v584 = vpop.permute.xlu0 %583
    %v585 = vsel %vm150, %v584, 0
    %587 = vmatprep.subr.mxu0 0.0
    %588 = vmatpush1.msra.mxu0 %v243
    %589 = vmatprep.subr.mxu0 0.0
    %590 = vmatpush1.msra.mxu0 %v244
    %591 = vmatprep.subr.mxu0 0.0
    %592 = vmatpush1.msra.mxu0 %v245
    %593 = vmatprep.subr.mxu0 0.0
    %594 = vmatpush1.msra.mxu0 %v246
    %595 = vmatprep.subr.mxu0 0.0
    %596 = vmatpush1.msra.mxu0 0.0
    %597 = vmatprep.subr.mxu0 0.0
    %598 = vmatpush1.msra.mxu0 0.0
    %599 = vmatprep.subr.mxu0 0.0
    %600 = vmatpush1.msra.mxu0 0.0
    %601 = vmatprep.subr.mxu0 0.0
    %602 = vmatpush1.msra.mxu0 0.0
    %603 = vmatprep.subr.mxu0 0.0
    %604 = vmatpush1.msra.mxu0 0.0
    %605 = vmatprep.subr.mxu0 0.0
    %606 = vmatpush1.msra.mxu0 0.0
    %607 = vmatprep.subr.mxu0 0.0
    %608 = vmatpush1.msra.mxu0 0.0
    %609 = vmatprep.subr.mxu0 0.0
    %610 = vmatpush1.msra.mxu0 0.0
    %611 = vmatprep.subr.mxu0 0.0
    %612 = vmatpush1.msra.mxu0 0.0
    %613 = vmatprep.subr.mxu0 0.0
    %614 = vmatpush1.msra.mxu0 0.0
    %615 = vmatprep.subr.mxu0 0.0
    %616 = vmatpush1.msra.mxu0 0.0
    %617 = vmatprep.subr.mxu0 0.0
    %618 = vmatpush1.msra.mxu0 0.0
    %619 = vmatprep.subr.mxu0 0.0
    %620 = vmatpush1.msra.mxu0 0.0
    %621 = vmatprep.subr.mxu0 0.0
    %622 = vmatpush1.msra.mxu0 0.0
    %623 = vmatprep.subr.mxu0 0.0
    %624 = vmatpush1.msra.mxu0 0.0
    %625 = vmatprep.subr.mxu0 0.0
    %626 = vmatpush1.msra.mxu0 0.0
    %627 = vmatprep.subr.mxu0 0.0
    %628 = vmatpush1.msra.mxu0 0.0
    %629 = vmatprep.subr.mxu0 0.0
    %630 = vmatpush1.msra.mxu0 0.0
    %631 = vmatprep.subr.mxu0 0.0
    %632 = vmatpush1.msra.mxu0 0.0
    %633 = vmatprep.subr.mxu0 0.0
    %634 = vmatpush1.msra.mxu0 0.0
    %635 = vmatprep.subr.mxu0 0.0
    %636 = vmatpush1.msra.mxu0 0.0
    %637 = vmatprep.subr.mxu0 0.0
    %638 = vmatpush1.msra.mxu0 0.0
    %639 = vmatprep.subr.mxu0 0.0
    %640 = vmatpush1.msra.mxu0 0.0
    %641 = vmatprep.subr.mxu0 0.0
    %642 = vmatpush1.msra.mxu0 0.0
    %643 = vmatprep.subr.mxu0 0.0
    %644 = vmatpush1.msra.mxu0 0.0
    %645 = vmatprep.subr.mxu0 0.0
    %646 = vmatpush1.msra.mxu0 0.0
    %647 = vmatprep.subr.mxu0 0.0
    %648 = vmatpush1.msra.mxu0 0.0
    %649 = vmatprep.subr.mxu0 0.0
    %650 = vmatpush1.msra.mxu0 0.0
    %651 = vmatprep.mubr.f32.mxu0 0.0
    %652 = vmatmul.mubr.f32.gmra.mrb[0].mxu0 %v585
    %v653 = vpop.f32.mrb[0].mxu0
    %v654 = vadd.f32 %v247, %v653
    %v655 = vpop.f32.mrb[0].mxu0
    %656 = vdwg.mxu0
    %vm657 = vcmask 516096
    %v658 = vsel %vm657, %v654, -inf
    %659 = vmax.xlane.f32.xlu0 %v658
    %v660 = vpop.xlane.xlu0 %659
    %v661 = vsub.f32 %v654, %v660
    %v662 = vmul.f32 %v661, 1.442695
    %v663 = vpow.pop %v662
    %v664 = vsel %vm657, %v663, 0.0
    %665 = vadd.xlane.f32.xlu0 %v664
    %v666 = vpop.xlane.xlu0 %665
    %v667 = vlog2.pop %v666
    %v668 = vmul.f32 %v667, 0.6931472
    %v669 = vadd.f32 %v668, %v660
    %v670 = vsub.f32 %v654, %v669
    %v673 = vrot.slane %v221, 1
    %v674 = vrot.slane %v223, 1
    %677 = vmatprep.subr.mxu0 %v228
    %678 = vmatpush1.msra.mxu0 %v227
    %679 = vmatprep.subr.mxu0 %v230
    %680 = vmatpush1.msra.mxu0 %v229
    %681 = vmatprep.subr.mxu0 %v232
    %682 = vmatpush1.msra.mxu0 %v231
    %683 = vmatprep.subr.mxu0 %v234
    %684 = vmatpush1.msra.mxu0 %v233
    %685 = vmatprep.subr.mxu0 0.0
    %686 = vmatpush1.msra.mxu0 0.0
    %687 = vmatprep.subr.mxu0 0.0
    %688 = vmatpush1.msra.mxu0 0.0
    %689 = vmatprep.subr.mxu0 0.0
    %690 = vmatpush1.msra.mxu0 0.0
    %691 = vmatprep.subr.mxu0 0.0
    %692 = vmatpush1.msra.mxu0 0.0
    %693 = vmatprep.subr.mxu0 0.0
    %694 = vmatpush1.msra.mxu0 0.0
    %695 = vmatprep.subr.mxu0 0.0
    %696 = vmatpush1.msra.mxu0 0.0
    %697 = vmatprep.subr.mxu0 0.0
    %698 = vmatpush1.msra.mxu0 0.0
    %699 = vmatprep.subr.mxu0 0.0
    %700 = vmatpush1.msra.mxu0 0.0
    %701 = vmatprep.subr.mxu0 0.0
    %702 = vmatpush1.msra.mxu0 0.0
    %703 = vmatprep.subr.mxu0 0.0
    %704 = vmatpush1.msra.mxu0 0.0
    %705 = vmatprep.subr.mxu0 0.0
    %706 = vmatpush1.msra.mxu0 0.0
    %707 = vmatprep.subr.mxu0 0.0
    %708 = vmatpush1.msra.mxu0 0.0
    %709 = vmatprep.subr.mxu0 0.0
    %710 = vmatpush1.msra.mxu0 0.0
    %711 = vmatprep.subr.mxu0 0.0
    %712 = vmatpush1.msra.mxu0 0.0
    %713 = vmatprep.subr.mxu0 0.0
    %714 = vmatpush1.msra.mxu0 0.0
    %715 = vmatprep.subr.mxu0 0.0
    %716 = vmatpush1.msra.mxu0 0.0
    %717 = vmatprep.subr.mxu0 0.0
    %718 = vmatpush1.msra.mxu0 0.0
    %719 = vmatprep.subr.mxu0 0.0
    %720 = vmatpush1.msra.mxu0 0.0
    %721 = vmatprep.subr.mxu0 0.0
    %722 = vmatpush1.msra.mxu0 0.0
    %723 = vmatprep.subr.mxu0 0.0
    %724 = vmatpush1.msra.mxu0 0.0
    %725 = vmatprep.subr.mxu0 0.0
    %726 = vmatpush1.msra.mxu0 0.0
    %727 = vmatprep.subr.mxu0 0.0
    %728 = vmatpush1.msra.mxu0 0.0
    %729 = vmatprep.subr.mxu0 0.0
    %730 = vmatpush1.msra.mxu0 0.0
    %731 = vmatprep.subr.mxu0 0.0
    %732 = vmatpush1.msra.mxu0 0.0
    %733 = vmatprep.subr.mxu0 0.0
    %734 = vmatpush1.msra.mxu0 0.0
    %735 = vmatprep.subr.mxu0 0.0
    %736 = vmatpush1.msra.mxu0 0.0
    %737 = vmatprep.subr.mxu0 0.0
    %738 = vmatpush1.msra.mxu0 0.0
    %739 = vmatprep.subr.mxu0 0.0
    %740 = vmatpush1.msra.mxu0 0.0
    %741 = vmatprep.mubr.f32.mxu0 0.0
    %742 = vmatmul.mubr.f32.gmra.mrb[0].mxu0 %v585
    %v743 = vpop.f32.mrb[0].mxu0
    %v744 = vadd.f32 %v673, %v743
    %v745 = vpop.f32.mrb[0].mxu0
    %v746 = vadd.f32 %v674, %v745
    %747 = vdwg.mxu0
    %v748 = vsel %vm323, %v744, -inf
    %749 = vmax.xlane.f32.xlu0 %v748
    %v750 = vpop.xlane.xlu0 %749
    %v751 = vsub.f32 %v744, %v750
    %v752 = vmul.f32 %v751, 1.442695
    %v753 = vpow.pop %v752
    %755 = vrot.lane.b32.xlu0 %v753, 96
    %v756 = vpop.permute.xlu0 %755
    %v758 = vsel %vm334, %v756, 0.0
    %759 = vadd.xlane.f32.xlu0 %v758
    %v760 = vpop.xlane.xlu0 %759
    %v761 = vrcp.pop %v760
    %v762 = vmul.f32 %v753, %v761
    %764 = vrot.lane.b32.xlu0 %v762, 96
    %v765 = vpop.permute.xlu0 %764
    %v766 = vsel %vm343, %v765, 0
    %768 = vmatprep.subr.mxu0 0.0
    %769 = vmatpush1.msra.mxu0 %v225
    %770 = vmatprep.subr.mxu0 0.0
    %771 = vmatpush1.msra.mxu0 %v226
    %772 = vmatprep.subr.mxu0 0.0
    %773 = vmatpush1.msra.mxu0 0.0
    %774 = vmatprep.subr.mxu0 0.0
    %775 = vmatpush1.msra.mxu0 0.0
    %776 = vmatprep.subr.mxu0 0.0
    %777 = vmatpush1.msra.mxu0 0.0
    %778 = vmatprep.subr.mxu0 0.0
    %779 = vmatpush1.msra.mxu0 0.0
    %780 = vmatprep.subr.mxu0 0.0
    %781 = vmatpush1.msra.mxu0 0.0
    %782 = vmatprep.subr.mxu0 0.0
    %783 = vmatpush1.msra.mxu0 0.0
    %784 = vmatprep.subr.mxu0 0.0
    %785 = vmatpush1.msra.mxu0 0.0
    %786 = vmatprep.subr.mxu0 0.0
    %787 = vmatpush1.msra.mxu0 0.0
    %788 = vmatprep.subr.mxu0 0.0
    %789 = vmatpush1.msra.mxu0 0.0
    %790 = vmatprep.subr.mxu0 0.0
    %791 = vmatpush1.msra.mxu0 0.0
    %792 = vmatprep.subr.mxu0 0.0
    %793 = vmatpush1.msra.mxu0 0.0
    %794 = vmatprep.subr.mxu0 0.0
    %795 = vmatpush1.msra.mxu0 0.0
    %796 = vmatprep.subr.mxu0 0.0
    %797 = vmatpush1.msra.mxu0 0.0
    %798 = vmatprep.subr.mxu0 0.0
    %799 = vmatpush1.msra.mxu0 0.0
    %800 = vmatprep.subr.mxu0 0.0
    %801 = vmatpush1.msra.mxu0 0.0
    %802 = vmatprep.subr.mxu0 0.0
    %803 = vmatpush1.msra.mxu0 0.0
    %804 = vmatprep.subr.mxu0 0.0
    %805 = vmatpush1.msra.mxu0 0.0
    %806 = vmatprep.subr.mxu0 0.0
    %807 = vmatpush1.msra.mxu0 0.0
    %808 = vmatprep.subr.mxu0 0.0
    %809 = vmatpush1.msra.mxu0 0.0
    %810 = vmatprep.subr.mxu0 0.0
    %811 = vmatpush1.msra.mxu0 0.0
    %812 = vmatprep.subr.mxu0 0.0
    %813 = vmatpush1.msra.mxu0 0.0
    %814 = vmatprep.subr.mxu0 0.0
    %815 = vmatpush1.msra.mxu0 0.0
    %816 = vmatprep.subr.mxu0 0.0
    %817 = vmatpush1.msra.mxu0 0.0
    %818 = vmatprep.subr.mxu0 0.0
    %819 = vmatpush1.msra.mxu0 0.0
    %820 = vmatprep.subr.mxu0 0.0
    %821 = vmatpush1.msra.mxu0 0.0
    %822 = vmatprep.subr.mxu0 0.0
    %823 = vmatpush1.msra.mxu0 0.0
    %824 = vmatprep.subr.mxu0 0.0
    %825 = vmatpush1.msra.mxu0 0.0
    %826 = vmatprep.subr.mxu0 0.0
    %827 = vmatpush1.msra.mxu0 0.0
    %828 = vmatprep.subr.mxu0 0.0
    %829 = vmatpush1.msra.mxu0 0.0
    %830 = vmatprep.subr.mxu0 0.0
    %831 = vmatpush1.msra.mxu0 0.0
    %832 = vmatprep.mubr.f32.mxu0 0.0
    %833 = vmatmul.mubr.f32.gmra.mrb[0].mxu0 %v766
    %v834 = vpop.f32.mrb[0].mxu0
    %v835 = vadd.f32 0.0, %v834
    %v836 = vpop.f32.mrb[0].mxu0
    %837 = vdwg.mxu0
    %v839 = vsel %vm150, %v835, 0
    %841 = vmatprep.subr.mxu0 0.0
    %842 = vmatpush1.msra.mxu0 %v235
    %843 = vmatprep.subr.mxu0 0.0
    %844 = vmatpush1.msra.mxu0 %v236
    %845 = vmatprep.subr.mxu0 0.0
    %846 = vmatpush1.msra.mxu0 %v237
    %847 = vmatprep.subr.mxu0 0.0
    %848 = vmatpush1.msra.mxu0 %v238
    %849 = vmatprep.subr.mxu0 0.0
    %850 = vmatpush1.msra.mxu0 0.0
    %851 = vmatprep.subr.mxu0 0.0
    %852 = vmatpush1.msra.mxu0 0.0
    %853 = vmatprep.subr.mxu0 0.0
    %854 = vmatpush1.msra.mxu0 0.0
    %855 = vmatprep.subr.mxu0 0.0
    %856 = vmatpush1.msra.mxu0 0.0
    %857 = vmatprep.subr.mxu0 0.0
    %858 = vmatpush1.msra.mxu0 0.0
    %859 = vmatprep.subr.mxu0 0.0
    %860 = vmatpush1.msra.mxu0 0.0
    %861 = vmatprep.subr.mxu0 0.0
    %862 = vmatpush1.msra.mxu0 0.0
    %863 = vmatprep.subr.mxu0 0.0
    %864 = vmatpush1.msra.mxu0 0.0
    %865 = vmatprep.subr.mxu0 0.0
    %866 = vmatpush1.msra.mxu0 0.0
    %867 = vmatprep.subr.mxu0 0.0
    %868 = vmatpush1.msra.mxu0 0.0
    %869 = vmatprep.subr.mxu0 0.0
    %870 = vmatpush1.msra.mxu0 0.0
    %871 = vmatprep.subr.mxu0 0.0
    %872 = vmatpush1.msra.mxu0 0.0
    %873 = vmatprep.subr.mxu0 0.0
    %874 = vmatpush1.msra.mxu0 0.0
    %875 = vmatprep.subr.mxu0 0.0
    %876 = vmatpush1.msra.mxu0 0.0
    %877 = vmatprep.subr.mxu0 0.0
    %878 = vmatpush1.msra.mxu0 0.0
    %879 = vmatprep.subr.mxu0 0.0
    %880 = vmatpush1.msra.mxu0 0.0
    %881 = vmatprep.subr.mxu0 0.0
    %882 = vmatpush1.msra.mxu0 0.0
    %883 = vmatprep.subr.mxu0 0.0
    %884 = vmatpush1.msra.mxu0 0.0
    %885 = vmatprep.subr.mxu0 0.0
    %886 = vmatpush1.msra.mxu0 0.0
    %887 = vmatprep.subr.mxu0 0.0
    %888 = vmatpush1.msra.mxu0 0.0
    %889 = vmatprep.subr.mxu0 0.0
    %890 = vmatpush1.msra.mxu0 0.0
    %891 = vmatprep.subr.mxu0 0.0
    %892 = vmatpush1.msra.mxu0 0.0
    %893 = vmatprep.subr.mxu0 0.0
    %894 = vmatpush1.msra.mxu0 0.0
    %895 = vmatprep.subr.mxu0 0.0
    %896 = vmatpush1.msra.mxu0 0.0
    %897 = vmatprep.subr.mxu0 0.0
    %898 = vmatpush1.msra.mxu0 0.0
    %899 = vmatprep.subr.mxu0 0.0
    %900 = vmatpush1.msra.mxu0 0.0
    %901 = vmatprep.subr.mxu0 0.0
    %902 = vmatpush1.msra.mxu0 0.0
    %903 = vmatprep.subr.mxu0 0.0
    %904 = vmatpush1.msra.mxu0 0.0
    %905 = vmatprep.mubr.f32.mxu0 0.0
    %906 = vmatmul.mubr.f32.gmra.mrb[0].mxu0 %v839
    %v907 = vpop.f32.mrb[0].mxu0
    %v908 = vadd.f32 0.0, %v907
    %v909 = vpop.f32.mrb[0].mxu0
    %910 = vdwg.mxu0
    %v911 = vadd.f32 %v744, %v908
    %v912 = vmax.f32 %v911, 0.0
    %v914 = vsel %vm150, %v912, 0
    %916 = vmatprep.subr.mxu0 0.0
    %917 = vmatpush1.msra.mxu0 %v239
    %918 = vmatprep.subr.mxu0 0.0
    %919 = vmatpush1.msra.mxu0 %v240
    %920 = vmatprep.subr.mxu0 0.0
    %921 = vmatpush1.msra.mxu0 %v241
    %922 = vmatprep.subr.mxu0 0.0
    %923 = vmatpush1.msra.mxu0 %v242
    %924 = vmatprep.subr.mxu0 0.0
    %925 = vmatpush1.msra.mxu0 0.0
    %926 = vmatprep.subr.mxu0 0.0
    %927 = vmatpush1.msra.mxu0 0.0
    %928 = vmatprep.subr.mxu0 0.0
    %929 = vmatpush1.msra.mxu0 0.0
    %930 = vmatprep.subr.mxu0 0.0
    %931 = vmatpush1.msra.mxu0 0.0
    %932 = vmatprep.subr.mxu0 0.0
    %933 = vmatpush1.msra.mxu0 0.0
    %934 = vmatprep.subr.mxu0 0.0
    %935 = vmatpush1.msra.mxu0 0.0
    %936 = vmatprep.subr.mxu0 0.0
    %937 = vmatpush1.msra.mxu0 0.0
    %938 = vmatprep.subr.mxu0 0.0
    %939 = vmatpush1.msra.mxu0 0.0
    %940 = vmatprep.subr.mxu0 0.0
    %941 = vmatpush1.msra.mxu0 0.0
    %942 = vmatprep.subr.mxu0 0.0
    %943 = vmatpush1.msra.mxu0 0.0
    %944 = vmatprep.subr.mxu0 0.0
    %945 = vmatpush1.msra.mxu0 0.0
    %946 = vmatprep.subr.mxu0 0.0
    %947 = vmatpush1.msra.mxu0 0.0
    %948 = vmatprep.subr.mxu0 0.0
    %949 = vmatpush1.msra.mxu0 0.0
    %950 = vmatprep.subr.mxu0 0.0
    %951 = vmatpush1.msra.mxu0 0.0
    %952 = vmatprep.subr.mxu0 0.0
    %953 = vmatpush1.msra.mxu0 0.0
    %954 = vmatprep.subr.mxu0 0.0
    %955 = vmatpush1.msra.mxu0 0.0
    %956 = vmatprep.subr.mxu0 0.0
    %957 = vmatpush1.msra.mxu0 0.0
    %958 = vmatprep.subr.mxu0 0.0
    %959 = vmatpush1.msra.mxu0 0.0
    %960 = vmatprep.subr.mxu0 0.0
    %961 = vmatpush1.msra.mxu0 0.0
    %962 = vmatprep.subr.mxu0 0.0
    %963 = vmatpush1.msra.mxu0 0.0
    %964 = vmatprep.subr.mxu0 0.0
    %965 = vmatpush1.msra.mxu0 0.0
    %966 = vmatprep.subr.mxu0 0.0
    %967 = vmatpush1.msra.mxu0 0.0
    %968 = vmatprep.subr.mxu0 0.0
    %969 = vmatpush1.msra.mxu0 0.0
    %970 = vmatprep.subr.mxu0 0.0
    %971 = vmatpush1.msra.mxu0 0.0
    %972 = vmatprep.subr.mxu0 0.0
    %973 = vmatpush1.msra.mxu0 0.0
    %974 = vmatprep.subr.mxu0 0.0
    %975 = vmatpush1.msra.mxu0 0.0
    %976 = vmatprep.subr.mxu0 0.0
    %977 = vmatpush1.msra.mxu0 0.0
    %978 = vmatprep.subr.mxu0 0.0
    %979 = vmatpush1.msra.mxu0 0.0
    %980 = vmatprep.mubr.f32.mxu0 0.0
    %981 = vmatmul.mubr.f32.gmra.mrb[0].mxu0 %v914
    %v982 = vpop.f32.mrb[0].mxu0
    %v983 = vadd.f32 %v746, %v982
    %v984 = vpop.f32.mrb[0].mxu0
    %985 = vdwg.mxu0
    %v986 = vxor.u32 %v983, 2147483648
    %v987 = vmul.f32 %v986, 1.442695
    %v988 = vpow.pop %v987
    %v989 = vadd.f32 %v988, 1.0
    %v990 = vrcp.pop %v989
    %v991 = vmul.f32 1.0, %v990
    %v992 = vtanh.pop %v983
    %994 = vrot.lane.b32.xlu0 %v992, 64
    %v995 = vpop.permute.xlu0 %994
    %v997 = vmul.f32 %v991, %v995
    %v998 = vtanh.pop %v997
    %1000 = vrot.lane.b32.xlu0 %v998, 32
    %v1001 = vpop.permute.xlu0 %1000
    %v1003 = vmul.f32 %v991, %v1001
    %1005 = vrot.lane.b32.xlu0 %v1003, 96
    %v1006 = vpop.permute.xlu0 %1005
    %v1007 = vsel %vm150, %v1006, 0
    %1009 = vmatprep.subr.mxu0 0.0
    %1010 = vmatpush1.msra.mxu0 %v243
    %1011 = vmatprep.subr.mxu0 0.0
    %1012 = vmatpush1.msra.mxu0 %v244
    %1013 = vmatprep.subr.mxu0 0.0
    %1014 = vmatpush1.msra.mxu0 %v245
    %1015 = vmatprep.subr.mxu0 0.0
    %1016 = vmatpush1.msra.mxu0 %v246
    %1017 = vmatprep.subr.mxu0 0.0
    %1018 = vmatpush1.msra.mxu0 0.0
    %1019 = vmatprep.subr.mxu0 0.0
    %1020 = vmatpush1.msra.mxu0 0.0
    %1021 = vmatprep.subr.mxu0 0.0
    %1022 = vmatpush1.msra.mxu0 0.0
    %1023 = vmatprep.subr.mxu0 0.0
    %1024 = vmatpush1.msra.mxu0 0.0
    %1025 = vmatprep.subr.mxu0 0.0
    %1026 = vmatpush1.msra.mxu0 0.0
    %1027 = vmatprep.subr.mxu0 0.0
    %1028 = vmatpush1.msra.mxu0 0.0
    %1029 = vmatprep.subr.mxu0 0.0
    %1030 = vmatpush1.msra.mxu0 0.0
    %1031 = vmatprep.subr.mxu0 0.0
    %1032 = vmatpush1.msra.mxu0 0.0
    %1033 = vmatprep.subr.mxu0 0.0
    %1034 = vmatpush1.msra.mxu0 0.0
    %1035 = vmatprep.subr.mxu0 0.0
    %1036 = vmatpush1.msra.mxu0 0.0
    %1037 = vmatprep.subr.mxu0 0.0
    %1038 = vmatpush1.msra.mxu0 0.0
    %1039 = vmatprep.subr.mxu0 0.0
    %1040 = vmatpush1.msra.mxu0 0.0
    %1041 = vmatprep.subr.mxu0 0.0
    %1042 = vmatpush1.msra.mxu0 0.0
    %1043 = vmatprep.subr.mxu0 0.0
    %1044 = vmatpush1.msra.mxu0 0.0
    %1045 = vmatprep.subr.mxu0 0.0
    %1046 = vmatpush1.msra.mxu0 0.0
    %1047 = vmatprep.subr.mxu0 0.0
    %1048 = vmatpush1.msra.mxu0 0.0
    %1049 = vmatprep.subr.mxu0 0.0
    %1050 = vmatpush1.msra.mxu0 0.0
    %1051 = vmatprep.subr.mxu0 0.0
    %1052 = vmatpush1.msra.mxu0 0.0
    %1053 = vmatprep.subr.mxu0 0.0
    %1054 = vmatpush1.msra.mxu0 0.0
    %1055 = vmatprep.subr.mxu0 0.0
    %1056 = vmatpush1.msra.mxu0 0.0
    %1057 = vmatprep.subr.mxu0 0.0
    %1058 = vmatpush1.msra.mxu0 0.0
    %1059 = vmatprep.subr.mxu0 0.0
    %1060 = vmatpush1.msra.mxu0 0.0
    %1061 = vmatprep.subr.mxu0 0.0
    %1062 = vmatpush1.msra.mxu0 0.0
    %1063 = vmatprep.subr.mxu0 0.0
    %1064 = vmatpush1.msra.mxu0 0.0
    %1065 = vmatprep.subr.mxu0 0.0
    %1066 = vmatpush1.msra.mxu0 0.0
    %1067 = vmatprep.subr.mxu0 0.0
    %1068 = vmatpush1.msra.mxu0 0.0
    %1069 = vmatprep.subr.mxu0 0.0
    %1070 = vmatpush1.msra.mxu0 0.0
    %1071 = vmatprep.subr.mxu0 0.0
    %1072 = vmatpush1.msra.mxu0 0.0
    %1073 = vmatprep.mubr.f32.mxu0 0.0
    %1074 = vmatmul.mubr.f32.gmra.mrb[0].mxu0 %v1007
    %v1075 = vpop.f32.mrb[0].mxu0
    %v1076 = vadd.f32 %v247, %v1075
    %v1077 = vpop.f32.mrb[0].mxu0
    %1078 = vdwg.mxu0
    %v1079 = vsel %vm657, %v1076, -inf
    %1080 = vmax.xlane.f32.xlu0 %v1079
    %v1081 = vpop.xlane.xlu0 %1080
    %v1082 = vsub.f32 %v1076, %v1081
    %v1083 = vmul.f32 %v1082, 1.442695
    %v1084 = vpow.pop %v1083
    %v1085 = vsel %vm657, %v1084, 0.0
    %1086 = vadd.xlane.f32.xlu0 %v1085
    %v1087 = vpop.xlane.xlu0 %1086
    %v1088 = vlog2.pop %v1087
    %v1089 = vmul.f32 %v1088, 0.6931472
    %v1090 = vadd.f32 %v1089, %v1081
    %v1091 = vsub.f32 %v1076, %v1090
    %v1092 = vrot.slane %v221, 2
    %v1093 = vrot.slane %v223, 2
    %1096 = vmatprep.subr.mxu0 %v228
    %1097 = vmatpush1.msra.mxu0 %v227
    %1098 = vmatprep.subr.mxu0 %v230
    %1099 = vmatpush1.msra.mxu0 %v229
    %1100 = vmatprep.subr.mxu0 %v232
    %1101 = vmatpush1.msra.mxu0 %v231
    %1102 = vmatprep.subr.mxu0 %v234
    %1103 = vmatpush1.msra.mxu0 %v233
    %1104 = vmatprep.subr.mxu0 0.0
    %1105 = vmatpush1.msra.mxu0 0.0
    %1106 = vmatprep.subr.mxu0 0.0
    %1107 = vmatpush1.msra.mxu0 0.0
    %1108 = vmatprep.subr.mxu0 0.0
    %1109 = vmatpush1.msra.mxu0 0.0
    %1110 = vmatprep.subr.mxu0 0.0
    %1111 = vmatpush1.msra.mxu0 0.0
    %1112 = vmatprep.subr.mxu0 0.0
    %1113 = vmatpush1.msra.mxu0 0.0
    %1114 = vmatprep.subr.mxu0 0.0
    %1115 = vmatpush1.msra.mxu0 0.0
    %1116 = vmatprep.subr.mxu0 0.0
    %1117 = vmatpush1.msra.mxu0 0.0
    %1118 = vmatprep.subr.mxu0 0.0
    %1119 = vmatpush1.msra.mxu0 0.0
    %1120 = vmatprep.subr.mxu0 0.0
    %1121 = vmatpush1.msra.mxu0 0.0
    %1122 = vmatprep.subr.mxu0 0.0
    %1123 = vmatpush1.msra.mxu0 0.0
    %1124 = vmatprep.subr.mxu0 0.0
    %1125 = vmatpush1.msra.mxu0 0.0
    %1126 = vmatprep.subr.mxu0 0.0
    %1127 = vmatpush1.msra.mxu0 0.0
    %1128 = vmatprep.subr.mxu0 0.0
    %1129 = vmatpush1.msra.mxu0 0.0
    %1130 = vmatprep.subr.mxu0 0.0
    %1131 = vmatpush1.msra.mxu0 0.0
    %1132 = vmatprep.subr.mxu0 0.0
    %1133 = vmatpush1.msra.mxu0 0.0
    %1134 = vmatprep.subr.mxu0 0.0
    %1135 = vmatpush1.msra.mxu0 0.0
    %1136 = vmatprep.subr.mxu0 0.0
    %1137 = vmatpush1.msra.mxu0 0.0
    %1138 = vmatprep.subr.mxu0 0.0
    %1139 = vmatpush1.msra.mxu0 0.0
    %1140 = vmatprep.subr.mxu0 0.0
    %1141 = vmatpush1.msra.mxu0 0.0
    %1142 = vmatprep.subr.mxu0 0.0
    %1143 = vmatpush1.msra.mxu0 0.0
    %1144 = vmatprep.subr.mxu0 0.0
    %1145 = vmatpush1.msra.mxu0 0.0
    %1146 = vmatprep.subr.mxu0 0.0
    %1147 = vmatpush1.msra.mxu0 0.0
    %1148 = vmatprep.subr.mxu0 0.0
    %1149 = vmatpush1.msra.mxu0 0.0
    %1150 = vmatprep.subr.mxu0 0.0
    %1151 = vmatpush1.msra.mxu0 0.0
    %1152 = vmatprep.subr.mxu0 0.0
    %1153 = vmatpush1.msra.mxu0 0.0
    %1154 = vmatprep.subr.mxu0 0.0
    %1155 = vmatpush1.msra.mxu0 0.0
    %1156 = vmatprep.subr.mxu0 0.0
    %1157 = vmatpush1.msra.mxu0 0.0
    %1158 = vmatprep.subr.mxu0 0.0
    %1159 = vmatpush1.msra.mxu0 0.0
    %1160 = vmatprep.mubr.f32.mxu0 0.0
    %1161 = vmatmul.mubr.f32.gmra.mrb[0].mxu0 %v1007
    %v1162 = vpop.f32.mrb[0].mxu0
    %v1163 = vadd.f32 %v1092, %v1162
    %v1164 = vpop.f32.mrb[0].mxu0
    %v1165 = vadd.f32 %v1093, %v1164
    %1166 = vdwg.mxu0
    %v1167 = vsel %vm323, %v1163, -inf
    %1168 = vmax.xlane.f32.xlu0 %v1167
    %v1169 = vpop.xlane.xlu0 %1168
    %v1170 = vsub.f32 %v1163, %v1169
    %v1171 = vmul.f32 %v1170, 1.442695
    %v1172 = vpow.pop %v1171
    %1174 = vrot.lane.b32.xlu0 %v1172, 96
    %v1175 = vpop.permute.xlu0 %1174
    %v1177 = vsel %vm334, %v1175, 0.0
    %1178 = vadd.xlane.f32.xlu0 %v1177
    %v1179 = vpop.xlane.xlu0 %1178
    %v1180 = vrcp.pop %v1179
    %v1181 = vmul.f32 %v1172, %v1180
    %1183 = vrot.lane.b32.xlu0 %v1181, 96
    %v1184 = vpop.permute.xlu0 %1183
    %v1185 = vsel %vm343, %v1184, 0
    %1187 = vmatprep.subr.mxu0 0.0
    %1188 = vmatpush1.msra.mxu0 %v225
    %1189 = vmatprep.subr.mxu0 0.0
    %1190 = vmatpush1.msra.mxu0 %v226
    %1191 = vmatprep.subr.mxu0 0.0
    %1192 = vmatpush1.msra.mxu0 0.0
    %1193 = vmatprep.subr.mxu0 0.0
    %1194 = vmatpush1.msra.mxu0 0.0
    %1195 = vmatprep.subr.mxu0 0.0
    %1196 = vmatpush1.msra.mxu0 0.0
    %1197 = vmatprep.subr.mxu0 0.0
    %1198 = vmatpush1.msra.mxu0 0.0
    %1199 = vmatprep.subr.mxu0 0.0
    %1200 = vmatpush1.msra.mxu0 0.0
    %1201 = vmatprep.subr.mxu0 0.0
    %1202 = vmatpush1.msra.mxu0 0.0
    %1203 = vmatprep.subr.mxu0 0.0
    %1204 = vmatpush1.msra.mxu0 0.0
    %1205 = vmatprep.subr.mxu0 0.0
    %1206 = vmatpush1.msra.mxu0 0.0
    %1207 = vmatprep.subr.mxu0 0.0
    %1208 = vmatpush1.msra.mxu0 0.0
    %1209 = vmatprep.subr.mxu0 0.0
    %1210 = vmatpush1.msra.mxu0 0.0
    %1211 = vmatprep.subr.mxu0 0.0
    %1212 = vmatpush1.msra.mxu0 0.0
    %1213 = vmatprep.subr.mxu0 0.0
    %1214 = vmatpush1.msra.mxu0 0.0
    %1215 = vmatprep.subr.mxu0 0.0
    %1216 = vmatpush1.msra.mxu0 0.0
    %1217 = vmatprep.subr.mxu0 0.0
    %1218 = vmatpush1.msra.mxu0 0.0
    %1219 = vmatprep.subr.mxu0 0.0
    %1220 = vmatpush1.msra.mxu0 0.0
    %1221 = vmatprep.subr.mxu0 0.0
    %1222 = vmatpush1.msra.mxu0 0.0
    %1223 = vmatprep.subr.mxu0 0.0
    %1224 = vmatpush1.msra.mxu0 0.0
    %1225 = vmatprep.subr.mxu0 0.0
    %1226 = vmatpush1.msra.mxu0 0.0
    %1227 = vmatprep.subr.mxu0 0.0
    %1228 = vmatpush1.msra.mxu0 0.0
    %1229 = vmatprep.subr.mxu0 0.0
    %1230 = vmatpush1.msra.mxu0 0.0
    %1231 = vmatprep.subr.mxu0 0.0
    %1232 = vmatpush1.msra.mxu0 0.0
    %1233 = vmatprep.subr.mxu0 0.0
    %1234 = vmatpush1.msra.mxu0 0.0
    %1235 = vmatprep.subr.mxu0 0.0
    %1236 = vmatpush1.msra.mxu0 0.0
    %1237 = vmatprep.subr.mxu0 0.0
    %1238 = vmatpush1.msra.mxu0 0.0
    %1239 = vmatprep.subr.mxu0 0.0
    %1240 = vmatpush1.msra.mxu0 0.0
    %1241 = vmatprep.subr.mxu0 0.0
    %1242 = vmatpush1.msra.mxu0 0.0
    %1243 = vmatprep.subr.mxu0 0.0
    %1244 = vmatpush1.msra.mxu0 0.0
    %1245 = vmatprep.subr.mxu0 0.0
    %1246 = vmatpush1.msra.mxu0 0.0
    %1247 = vmatprep.subr.mxu0 0.0
    %1248 = vmatpush1.msra.mxu0 0.0
    %1249 = vmatprep.subr.mxu0 0.0
    %1250 = vmatpush1.msra.mxu0 0.0
    %1251 = vmatprep.mubr.f32.mxu0 0.0
    %1252 = vmatmul.mubr.f32.gmra.mrb[0].mxu0 %v1185
    %v1253 = vpop.f32.mrb[0].mxu0
    %v1254 = vadd.f32 0.0, %v1253
    %v1255 = vpop.f32.mrb[0].mxu0
    %1256 = vdwg.mxu0
    %v1258 = vsel %vm150, %v1254, 0
    %1260 = vmatprep.subr.mxu0 0.0
    %1261 = vmatpush1.msra.mxu0 %v235
    %1262 = vmatprep.subr.mxu0 0.0
    %1263 = vmatpush1.msra.mxu0 %v236
    %1264 = vmatprep.subr.mxu0 0.0
    %1265 = vmatpush1.msra.mxu0 %v237
    %1266 = vmatprep.subr.mxu0 0.0
    %1267 = vmatpush1.msra.mxu0 %v238
    %1268 = vmatprep.subr.mxu0 0.0
    %1269 = vmatpush1.msra.mxu0 0.0
    %1270 = vmatprep.subr.mxu0 0.0
    %1271 = vmatpush1.msra.mxu0 0.0
    %1272 = vmatprep.subr.mxu0 0.0
    %1273 = vmatpush1.msra.mxu0 0.0
    %1274 = vmatprep.subr.mxu0 0.0
    %1275 = vmatpush1.msra.mxu0 0.0
    %1276 = vmatprep.subr.mxu0 0.0
    %1277 = vmatpush1.msra.mxu0 0.0
    %1278 = vmatprep.subr.mxu0 0.0
    %1279 = vmatpush1.msra.mxu0 0.0
    %1280 = vmatprep.subr.mxu0 0.0
    %1281 = vmatpush1.msra.mxu0 0.0
    %1282 = vmatprep.subr.mxu0 0.0
    %1283 = vmatpush1.msra.mxu0 0.0
    %1284 = vmatprep.subr.mxu0 0.0
    %1285 = vmatpush1.msra.mxu0 0.0
    %1286 = vmatprep.subr.mxu0 0.0
    %1287 = vmatpush1.msra.mxu0 0.0
    %1288 = vmatprep.subr.mxu0 0.0
    %1289 = vmatpush1.msra.mxu0 0.0
    %1290 = vmatprep.subr.mxu0 0.0
    %1291 = vmatpush1.msra.mxu0 0.0
    %1292 = vmatprep.subr.mxu0 0.0
    %1293 = vmatpush1.msra.mxu0 0.0
    %1294 = vmatprep.subr.mxu0 0.0
    %1295 = vmatpush1.msra.mxu0 0.0
    %1296 = vmatprep.subr.mxu0 0.0
    %1297 = vmatpush1.msra.mxu0 0.0
    %1298 = vmatprep.subr.mxu0 0.0
    %1299 = vmatpush1.msra.mxu0 0.0
    %1300 = vmatprep.subr.mxu0 0.0
    %1301 = vmatpush1.msra.mxu0 0.0
    %1302 = vmatprep.subr.mxu0 0.0
    %1303 = vmatpush1.msra.mxu0 0.0
    %1304 = vmatprep.subr.mxu0 0.0
    %1305 = vmatpush1.msra.mxu0 0.0
    %1306 = vmatprep.subr.mxu0 0.0
    %1307 = vmatpush1.msra.mxu0 0.0
    %1308 = vmatprep.subr.mxu0 0.0
    %1309 = vmatpush1.msra.mxu0 0.0
    %1310 = vmatprep.subr.mxu0 0.0
    %1311 = vmatpush1.msra.mxu0 0.0
    %1312 = vmatprep.subr.mxu0 0.0
    %1313 = vmatpush1.msra.mxu0 0.0
    %1314 = vmatprep.subr.mxu0 0.0
    %1315 = vmatpush1.msra.mxu0 0.0
    %1316 = vmatprep.subr.mxu0 0.0
    %1317 = vmatpush1.msra.mxu0 0.0
    %1318 = vmatprep.subr.mxu0 0.0
    %1319 = vmatpush1.msra.mxu0 0.0
    %1320 = vmatprep.subr.mxu0 0.0
    %1321 = vmatpush1.msra.mxu0 0.0
    %1322 = vmatprep.subr.mxu0 0.0
    %1323 = vmatpush1.msra.mxu0 0.0
    %1324 = vmatprep.mubr.f32.mxu0 0.0
    %1325 = vmatmul.mubr.f32.gmra.mrb[0].mxu0 %v1258
    %v1326 = vpop.f32.mrb[0].mxu0
    %v1327 = vadd.f32 0.0, %v1326
    %v1328 = vpop.f32.mrb[0].mxu0
    %1329 = vdwg.mxu0
    %v1330 = vadd.f32 %v1163, %v1327
    %v1331 = vmax.f32 %v1330, 0.0
    %v1333 = vsel %vm150, %v1331, 0
    %1335 = vmatprep.subr.mxu0 0.0
    %1336 = vmatpush1.msra.mxu0 %v239
    %1337 = vmatprep.subr.mxu0 0.0
    %1338 = vmatpush1.msra.mxu0 %v240
    %1339 = vmatprep.subr.mxu0 0.0
    %1340 = vmatpush1.msra.mxu0 %v241
    %1341 = vmatprep.subr.mxu0 0.0
    %1342 = vmatpush1.msra.mxu0 %v242
    %1343 = vmatprep.subr.mxu0 0.0
    %1344 = vmatpush1.msra.mxu0 0.0
    %1345 = vmatprep.subr.mxu0 0.0
    %1346 = vmatpush1.msra.mxu0 0.0
    %1347 = vmatprep.subr.mxu0 0.0
    %1348 = vmatpush1.msra.mxu0 0.0
    %1349 = vmatprep.subr.mxu0 0.0
    %1350 = vmatpush1.msra.mxu0 0.0
    %1351 = vmatprep.subr.mxu0 0.0
    %1352 = vmatpush1.msra.mxu0 0.0
    %1353 = vmatprep.subr.mxu0 0.0
    %1354 = vmatpush1.msra.mxu0 0.0
    %1355 = vmatprep.subr.mxu0 0.0
    %1356 = vmatpush1.msra.mxu0 0.0
    %1357 = vmatprep.subr.mxu0 0.0
    %1358 = vmatpush1.msra.mxu0 0.0
    %1359 = vmatprep.subr.mxu0 0.0
    %1360 = vmatpush1.msra.mxu0 0.0
    %1361 = vmatprep.subr.mxu0 0.0
    %1362 = vmatpush1.msra.mxu0 0.0
    %1363 = vmatprep.subr.mxu0 0.0
    %1364 = vmatpush1.msra.mxu0 0.0
    %1365 = vmatprep.subr.mxu0 0.0
    %1366 = vmatpush1.msra.mxu0 0.0
    %1367 = vmatprep.subr.mxu0 0.0
    %1368 = vmatpush1.msra.mxu0 0.0
    %1369 = vmatprep.subr.mxu0 0.0
    %1370 = vmatpush1.msra.mxu0 0.0
    %1371 = vmatprep.subr.mxu0 0.0
    %1372 = vmatpush1.msra.mxu0 0.0
    %1373 = vmatprep.subr.mxu0 0.0
    %1374 = vmatpush1.msra.mxu0 0.0
    %1375 = vmatprep.subr.mxu0 0.0
    %1376 = vmatpush1.msra.mxu0 0.0
    %1377 = vmatprep.subr.mxu0 0.0
    %1378 = vmatpush1.msra.mxu0 0.0
    %1379 = vmatprep.subr.mxu0 0.0
    %1380 = vmatpush1.msra.mxu0 0.0
    %1381 = vmatprep.subr.mxu0 0.0
    %1382 = vmatpush1.msra.mxu0 0.0
    %1383 = vmatprep.subr.mxu0 0.0
    %1384 = vmatpush1.msra.mxu0 0.0
    %1385 = vmatprep.subr.mxu0 0.0
    %1386 = vmatpush1.msra.mxu0 0.0
    %1387 = vmatprep.subr.mxu0 0.0
    %1388 = vmatpush1.msra.mxu0 0.0
    %1389 = vmatprep.subr.mxu0 0.0
    %1390 = vmatpush1.msra.mxu0 0.0
    %1391 = vmatprep.subr.mxu0 0.0
    %1392 = vmatpush1.msra.mxu0 0.0
    %1393 = vmatprep.subr.mxu0 0.0
    %1394 = vmatpush1.msra.mxu0 0.0
    %1395 = vmatprep.subr.mxu0 0.0
    %1396 = vmatpush1.msra.mxu0 0.0
    %1397 = vmatprep.subr.mxu0 0.0
    %1398 = vmatpush1.msra.mxu0 0.0
    %1399 = vmatprep.mubr.f32.mxu0 0.0
    %1400 = vmatmul.mubr.f32.gmra.mrb[0].mxu0 %v1333
    %v1401 = vpop.f32.mrb[0].mxu0
    %v1402 = vadd.f32 %v1165, %v1401
    %v1403 = vpop.f32.mrb[0].mxu0
    %1404 = vdwg.mxu0
    %v1405 = vxor.u32 %v1402, 2147483648
    %v1406 = vmul.f32 %v1405, 1.442695
    %v1407 = vpow.pop %v1406
    %v1408 = vadd.f32 %v1407, 1.0
    %v1409 = vrcp.pop %v1408
    %v1410 = vmul.f32 1.0, %v1409
    %v1411 = vtanh.pop %v1402
    %1413 = vrot.lane.b32.xlu0 %v1411, 64
    %v1414 = vpop.permute.xlu0 %1413
    %v1416 = vmul.f32 %v1410, %v1414
    %v1417 = vtanh.pop %v1416
    %1419 = vrot.lane.b32.xlu0 %v1417, 32
    %v1420 = vpop.permute.xlu0 %1419
    %v1422 = vmul.f32 %v1410, %v1420
    %1424 = vrot.lane.b32.xlu0 %v1422, 96
    %v1425 = vpop.permute.xlu0 %1424
    %v1426 = vsel %vm150, %v1425, 0
    %1428 = vmatprep.subr.mxu0 0.0
    %1429 = vmatpush1.msra.mxu0 %v243
    %1430 = vmatprep.subr.mxu0 0.0
    %1431 = vmatpush1.msra.mxu0 %v244
    %1432 = vmatprep.subr.mxu0 0.0
    %1433 = vmatpush1.msra.mxu0 %v245
    %1434 = vmatprep.subr.mxu0 0.0
    %1435 = vmatpush1.msra.mxu0 %v246
    %1436 = vmatprep.subr.mxu0 0.0
    %1437 = vmatpush1.msra.mxu0 0.0
    %1438 = vmatprep.subr.mxu0 0.0
    %1439 = vmatpush1.msra.mxu0 0.0
    %1440 = vmatprep.subr.mxu0 0.0
    %1441 = vmatpush1.msra.mxu0 0.0
    %1442 = vmatprep.subr.mxu0 0.0
    %1443 = vmatpush1.msra.mxu0 0.0
    %1444 = vmatprep.subr.mxu0 0.0
    %1445 = vmatpush1.msra.mxu0 0.0
    %1446 = vmatprep.subr.mxu0 0.0
    %1447 = vmatpush1.msra.mxu0 0.0
    %1448 = vmatprep.subr.mxu0 0.0
    %1449 = vmatpush1.msra.mxu0 0.0
    %1450 = vmatprep.subr.mxu0 0.0
    %1451 = vmatpush1.msra.mxu0 0.0
    %1452 = vmatprep.subr.mxu0 0.0
    %1453 = vmatpush1.msra.mxu0 0.0
    %1454 = vmatprep.subr.mxu0 0.0
    %1455 = vmatpush1.msra.mxu0 0.0
    %1456 = vmatprep.subr.mxu0 0.0
    %1457 = vmatpush1.msra.mxu0 0.0
    %1458 = vmatprep.subr.mxu0 0.0
    %1459 = vmatpush1.msra.mxu0 0.0
    %1460 = vmatprep.subr.mxu0 0.0
    %1461 = vmatpush1.msra.mxu0 0.0
    %1462 = vmatprep.subr.mxu0 0.0
    %1463 = vmatpush1.msra.mxu0 0.0
    %1464 = vmatprep.subr.mxu0 0.0
    %1465 = vmatpush1.msra.mxu0 0.0
    %1466 = vmatprep.subr.mxu0 0.0
    %1467 = vmatpush1.msra.mxu0 0.0
    %1468 = vmatprep.subr.mxu0 0.0
    %1469 = vmatpush1.msra.mxu0 0.0
    %1470 = vmatprep.subr.mxu0 0.0
    %1471 = vmatpush1.msra.mxu0 0.0
    %1472 = vmatprep.subr.mxu0 0.0
    %1473 = vmatpush1.msra.mxu0 0.0
    %1474 = vmatprep.subr.mxu0 0.0
    %1475 = vmatpush1.msra.mxu0 0.0
    %1476 = vmatprep.subr.mxu0 0.0
    %1477 = vmatpush1.msra.mxu0 0.0
    %1478 = vmatprep.subr.mxu0 0.0
    %1479 = vmatpush1.msra.mxu0 0.0
    %1480 = vmatprep.subr.mxu0 0.0
    %1481 = vmatpush1.msra.mxu0 0.0
    %1482 = vmatprep.subr.mxu0 0.0
    %1483 = vmatpush1.msra.mxu0 0.0
    %1484 = vmatprep.subr.mxu0 0.0
    %1485 = vmatpush1.msra.mxu0 0.0
    %1486 = vmatprep.subr.mxu0 0.0
    %1487 = vmatpush1.msra.mxu0 0.0
    %1488 = vmatprep.subr.mxu0 0.0
    %1489 = vmatpush1.msra.mxu0 0.0
    %1490 = vmatprep.subr.mxu0 0.0
    %1491 = vmatpush1.msra.mxu0 0.0
    %1492 = vmatprep.mubr.f32.mxu0 0.0
    %1493 = vmatmul.mubr.f32.gmra.mrb[0].mxu0 %v1426
    %v1494 = vpop.f32.mrb[0].mxu0
    %v1495 = vadd.f32 %v247, %v1494
    %v1496 = vpop.f32.mrb[0].mxu0
    %1497 = vdwg.mxu0
    %v1498 = vsel %vm657, %v1495, -inf
    %1499 = vmax.xlane.f32.xlu0 %v1498
    %v1500 = vpop.xlane.xlu0 %1499
    %v1501 = vsub.f32 %v1495, %v1500
    %v1502 = vmul.f32 %v1501, 1.442695
    %v1503 = vpow.pop %v1502
    %v1504 = vsel %vm657, %v1503, 0.0
    %1505 = vadd.xlane.f32.xlu0 %v1504
    %v1506 = vpop.xlane.xlu0 %1505
    %v1507 = vlog2.pop %v1506
    %v1508 = vmul.f32 %v1507, 0.6931472
    %v1509 = vadd.f32 %v1508, %v1500
    %v1510 = vsub.f32 %v1495, %v1509
    %v1511 = vrot.slane %v221, 3
    %v1512 = vrot.slane %v223, 3
    %1515 = vmatprep.subr.mxu0 %v228
    %1516 = vmatpush1.msra.mxu0 %v227
    %1517 = vmatprep.subr.mxu0 %v230
    %1518 = vmatpush1.msra.mxu0 %v229
    %1519 = vmatprep.subr.mxu0 %v232
    %1520 = vmatpush1.msra.mxu0 %v231
    %1521 = vmatprep.subr.mxu0 %v234
    %1522 = vmatpush1.msra.mxu0 %v233
    %1523 = vmatprep.subr.mxu0 0.0
    %1524 = vmatpush1.msra.mxu0 0.0
    %1525 = vmatprep.subr.mxu0 0.0
    %1526 = vmatpush1.msra.mxu0 0.0
    %1527 = vmatprep.subr.mxu0 0.0
    %1528 = vmatpush1.msra.mxu0 0.0
    %1529 = vmatprep.subr.mxu0 0.0
    %1530 = vmatpush1.msra.mxu0 0.0
    %1531 = vmatprep.subr.mxu0 0.0
    %1532 = vmatpush1.msra.mxu0 0.0
    %1533 = vmatprep.subr.mxu0 0.0
    %1534 = vmatpush1.msra.mxu0 0.0
    %1535 = vmatprep.subr.mxu0 0.0
    %1536 = vmatpush1.msra.mxu0 0.0
    %1537 = vmatprep.subr.mxu0 0.0
    %1538 = vmatpush1.msra.mxu0 0.0
    %1539 = vmatprep.subr.mxu0 0.0
    %1540 = vmatpush1.msra.mxu0 0.0
    %1541 = vmatprep.subr.mxu0 0.0
    %1542 = vmatpush1.msra.mxu0 0.0
    %1543 = vmatprep.subr.mxu0 0.0
    %1544 = vmatpush1.msra.mxu0 0.0
    %1545 = vmatprep.subr.mxu0 0.0
    %1546 = vmatpush1.msra.mxu0 0.0
    %1547 = vmatprep.subr.mxu0 0.0
    %1548 = vmatpush1.msra.mxu0 0.0
    %1549 = vmatprep.subr.mxu0 0.0
    %1550 = vmatpush1.msra.mxu0 0.0
    %1551 = vmatprep.subr.mxu0 0.0
    %1552 = vmatpush1.msra.mxu0 0.0
    %1553 = vmatprep.subr.mxu0 0.0
    %1554 = vmatpush1.msra.mxu0 0.0
    %1555 = vmatprep.subr.mxu0 0.0
    %1556 = vmatpush1.msra.mxu0 0.0
    %1557 = vmatprep.subr.mxu0 0.0
    %1558 = vmatpush1.msra.mxu0 0.0
    %1559 = vmatprep.subr.mxu0 0.0
    %1560 = vmatpush1.msra.mxu0 0.0
    %1561 = vmatprep.subr.mxu0 0.0
    %1562 = vmatpush1.msra.mxu0 0.0
    %1563 = vmatprep.subr.mxu0 0.0
    %1564 = vmatpush1.msra.mxu0 0.0
    %1565 = vmatprep.subr.mxu0 0.0
    %1566 = vmatpush1.msra.mxu0 0.0
    %1567 = vmatprep.subr.mxu0 0.0
    %1568 = vmatpush1.msra.mxu0 0.0
    %1569 = vmatprep.subr.mxu0 0.0
    %1570 = vmatpush1.msra.mxu0 0.0
    %1571 = vmatprep.subr.mxu0 0.0
    %1572 = vmatpush1.msra.mxu0 0.0
    %1573 = vmatprep.subr.mxu0 0.0
    %1574 = vmatpush1.msra.mxu0 0.0
    %1575 = vmatprep.subr.mxu0 0.0
    %1576 = vmatpush1.msra.mxu0 0.0
    %1577 = vmatprep.subr.mxu0 0.0
    %1578 = vmatpush1.msra.mxu0 0.0
    %1579 = vmatprep.mubr.f32.mxu0 0.0
    %1580 = vmatmul.mubr.f32.gmra.mrb[0].mxu0 %v1426
    %v1581 = vpop.f32.mrb[0].mxu0
    %v1582 = vadd.f32 %v1511, %v1581
    %v1583 = vpop.f32.mrb[0].mxu0
    %v1584 = vadd.f32 %v1512, %v1583
    %1585 = vdwg.mxu0
    %v1586 = vsel %vm323, %v1582, -inf
    %1587 = vmax.xlane.f32.xlu0 %v1586
    %v1588 = vpop.xlane.xlu0 %1587
    %v1589 = vsub.f32 %v1582, %v1588
    %v1590 = vmul.f32 %v1589, 1.442695
    %v1591 = vpow.pop %v1590
    %1593 = vrot.lane.b32.xlu0 %v1591, 96
    %v1594 = vpop.permute.xlu0 %1593
    %v1596 = vsel %vm334, %v1594, 0.0
    %1597 = vadd.xlane.f32.xlu0 %v1596
    %v1598 = vpop.xlane.xlu0 %1597
    %v1599 = vrcp.pop %v1598
    %v1600 = vmul.f32 %v1591, %v1599
    %1602 = vrot.lane.b32.xlu0 %v1600, 96
    %v1603 = vpop.permute.xlu0 %1602
    %v1604 = vsel %vm343, %v1603, 0
    %1606 = vmatprep.subr.mxu0 0.0
    %1607 = vmatpush1.msra.mxu0 %v225
    %1608 = vmatprep.subr.mxu0 0.0
    %1609 = vmatpush1.msra.mxu0 %v226
    %1610 = vmatprep.subr.mxu0 0.0
    %1611 = vmatpush1.msra.mxu0 0.0
    %1612 = vmatprep.subr.mxu0 0.0
    %1613 = vmatpush1.msra.mxu0 0.0
    %1614 = vmatprep.subr.mxu0 0.0
    %1615 = vmatpush1.msra.mxu0 0.0
    %1616 = vmatprep.subr.mxu0 0.0
    %1617 = vmatpush1.msra.mxu0 0.0
    %1618 = vmatprep.subr.mxu0 0.0
    %1619 = vmatpush1.msra.mxu0 0.0
    %1620 = vmatprep.subr.mxu0 0.0
    %1621 = vmatpush1.msra.mxu0 0.0
    %1622 = vmatprep.subr.mxu0 0.0
    %1623 = vmatpush1.msra.mxu0 0.0
    %1624 = vmatprep.subr.mxu0 0.0
    %1625 = vmatpush1.msra.mxu0 0.0
    %1626 = vmatprep.subr.mxu0 0.0
    %1627 = vmatpush1.msra.mxu0 0.0
    %1628 = vmatprep.subr.mxu0 0.0
    %1629 = vmatpush1.msra.mxu0 0.0
    %1630 = vmatprep.subr.mxu0 0.0
    %1631 = vmatpush1.msra.mxu0 0.0
    %1632 = vmatprep.subr.mxu0 0.0
    %1633 = vmatpush1.msra.mxu0 0.0
    %1634 = vmatprep.subr.mxu0 0.0
    %1635 = vmatpush1.msra.mxu0 0.0
    %1636 = vmatprep.subr.mxu0 0.0
    %1637 = vmatpush1.msra.mxu0 0.0
    %1638 = vmatprep.subr.mxu0 0.0
    %1639 = vmatpush1.msra.mxu0 0.0
    %1640 = vmatprep.subr.mxu0 0.0
    %1641 = vmatpush1.msra.mxu0 0.0
    %1642 = vmatprep.subr.mxu0 0.0
    %1643 = vmatpush1.msra.mxu0 0.0
    %1644 = vmatprep.subr.mxu0 0.0
    %1645 = vmatpush1.msra.mxu0 0.0
    %1646 = vmatprep.subr.mxu0 0.0
    %1647 = vmatpush1.msra.mxu0 0.0
    %1648 = vmatprep.subr.mxu0 0.0
    %1649 = vmatpush1.msra.mxu0 0.0
    %1650 = vmatprep.subr.mxu0 0.0
    %1651 = vmatpush1.msra.mxu0 0.0
    %1652 = vmatprep.subr.mxu0 0.0
    %1653 = vmatpush1.msra.mxu0 0.0
    %1654 = vmatprep.subr.mxu0 0.0
    %1655 = vmatpush1.msra.mxu0 0.0
    %1656 = vmatprep.subr.mxu0 0.0
    %1657 = vmatpush1.msra.mxu0 0.0
    %1658 = vmatprep.subr.mxu0 0.0
    %1659 = vmatpush1.msra.mxu0 0.0
    %1660 = vmatprep.subr.mxu0 0.0
    %1661 = vmatpush1.msra.mxu0 0.0
    %1662 = vmatprep.subr.mxu0 0.0
    %1663 = vmatpush1.msra.mxu0 0.0
    %1664 = vmatprep.subr.mxu0 0.0
    %1665 = vmatpush1.msra.mxu0 0.0
    %1666 = vmatprep.subr.mxu0 0.0
    %1667 = vmatpush1.msra.mxu0 0.0
    %1668 = vmatprep.subr.mxu0 0.0
    %1669 = vmatpush1.msra.mxu0 0.0
    %1670 = vmatprep.mubr.f32.mxu0 0.0
    %1671 = vmatmul.mubr.f32.gmra.mrb[0].mxu0 %v1604
    %v1672 = vpop.f32.mrb[0].mxu0
    %v1673 = vadd.f32 0.0, %v1672
    %v1674 = vpop.f32.mrb[0].mxu0
    %1675 = vdwg.mxu0
    %v1677 = vsel %vm150, %v1673, 0
    %1679 = vmatprep.subr.mxu0 0.0
    %1680 = vmatpush1.msra.mxu0 %v235
    %1681 = vmatprep.subr.mxu0 0.0
    %1682 = vmatpush1.msra.mxu0 %v236
    %1683 = vmatprep.subr.mxu0 0.0
    %1684 = vmatpush1.msra.mxu0 %v237
    %1685 = vmatprep.subr.mxu0 0.0
    %1686 = vmatpush1.msra.mxu0 %v238
    %1687 = vmatprep.subr.mxu0 0.0
    %1688 = vmatpush1.msra.mxu0 0.0
    %1689 = vmatprep.subr.mxu0 0.0
    %1690 = vmatpush1.msra.mxu0 0.0
    %1691 = vmatprep.subr.mxu0 0.0
    %1692 = vmatpush1.msra.mxu0 0.0
    %1693 = vmatprep.subr.mxu0 0.0
    %1694 = vmatpush1.msra.mxu0 0.0
    %1695 = vmatprep.subr.mxu0 0.0
    %1696 = vmatpush1.msra.mxu0 0.0
    %1697 = vmatprep.subr.mxu0 0.0
    %1698 = vmatpush1.msra.mxu0 0.0
    %1699 = vmatprep.subr.mxu0 0.0
    %1700 = vmatpush1.msra.mxu0 0.0
    %1701 = vmatprep.subr.mxu0 0.0
    %1702 = vmatpush1.msra.mxu0 0.0
    %1703 = vmatprep.subr.mxu0 0.0
    %1704 = vmatpush1.msra.mxu0 0.0
    %1705 = vmatprep.subr.mxu0 0.0
    %1706 = vmatpush1.msra.mxu0 0.0
    %1707 = vmatprep.subr.mxu0 0.0
    %1708 = vmatpush1.msra.mxu0 0.0
    %1709 = vmatprep.subr.mxu0 0.0
    %1710 = vmatpush1.msra.mxu0 0.0
    %1711 = vmatprep.subr.mxu0 0.0
    %1712 = vmatpush1.msra.mxu0 0.0
    %1713 = vmatprep.subr.mxu0 0.0
    %1714 = vmatpush1.msra.mxu0 0.0
    %1715 = vmatprep.subr.mxu0 0.0
    %1716 = vmatpush1.msra.mxu0 0.0
    %1717 = vmatprep.subr.mxu0 0.0
    %1718 = vmatpush1.msra.mxu0 0.0
    %1719 = vmatprep.subr.mxu0 0.0
    %1720 = vmatpush1.msra.mxu0 0.0
    %1721 = vmatprep.subr.mxu0 0.0
    %1722 = vmatpush1.msra.mxu0 0.0
    %1723 = vmatprep.subr.mxu0 0.0
    %1724 = vmatpush1.msra.mxu0 0.0
    %1725 = vmatprep.subr.mxu0 0.0
    %1726 = vmatpush1.msra.mxu0 0.0
    %1727 = vmatprep.subr.mxu0 0.0
    %1728 = vmatpush1.msra.mxu0 0.0
    %1729 = vmatprep.subr.mxu0 0.0
    %1730 = vmatpush1.msra.mxu0 0.0
    %1731 = vmatprep.subr.mxu0 0.0
    %1732 = vmatpush1.msra.mxu0 0.0
    %1733 = vmatprep.subr.mxu0 0.0
    %1734 = vmatpush1.msra.mxu0 0.0
    %1735 = vmatprep.subr.mxu0 0.0
    %1736 = vmatpush1.msra.mxu0 0.0
    %1737 = vmatprep.subr.mxu0 0.0
    %1738 = vmatpush1.msra.mxu0 0.0
    %1739 = vmatprep.subr.mxu0 0.0
    %1740 = vmatpush1.msra.mxu0 0.0
    %1741 = vmatprep.subr.mxu0 0.0
    %1742 = vmatpush1.msra.mxu0 0.0
    %1743 = vmatprep.mubr.f32.mxu0 0.0
    %1744 = vmatmul.mubr.f32.gmra.mrb[0].mxu0 %v1677
    %v1745 = vpop.f32.mrb[0].mxu0
    %v1746 = vadd.f32 0.0, %v1745
    %v1747 = vpop.f32.mrb[0].mxu0
    %1748 = vdwg.mxu0
    %v1749 = vadd.f32 %v1582, %v1746
    %v1750 = vmax.f32 %v1749, 0.0
    %v1752 = vsel %vm150, %v1750, 0
    %1754 = vmatprep.subr.mxu0 0.0
    %1755 = vmatpush1.msra.mxu0 %v239
    %1756 = vmatprep.subr.mxu0 0.0
    %1757 = vmatpush1.msra.mxu0 %v240
    %1758 = vmatprep.subr.mxu0 0.0
    %1759 = vmatpush1.msra.mxu0 %v241
    %1760 = vmatprep.subr.mxu0 0.0
    %1761 = vmatpush1.msra.mxu0 %v242
    %1762 = vmatprep.subr.mxu0 0.0
    %1763 = vmatpush1.msra.mxu0 0.0
    %1764 = vmatprep.subr.mxu0 0.0
    %1765 = vmatpush1.msra.mxu0 0.0
    %1766 = vmatprep.subr.mxu0 0.0
    %1767 = vmatpush1.msra.mxu0 0.0
    %1768 = vmatprep.subr.mxu0 0.0
    %1769 = vmatpush1.msra.mxu0 0.0
    %1770 = vmatprep.subr.mxu0 0.0
    %1771 = vmatpush1.msra.mxu0 0.0
    %1772 = vmatprep.subr.mxu0 0.0
    %1773 = vmatpush1.msra.mxu0 0.0
    %1774 = vmatprep.subr.mxu0 0.0
    %1775 = vmatpush1.msra.mxu0 0.0
    %1776 = vmatprep.subr.mxu0 0.0
    %1777 = vmatpush1.msra.mxu0 0.0
    %1778 = vmatprep.subr.mxu0 0.0
    %1779 = vmatpush1.msra.mxu0 0.0
    %1780 = vmatprep.subr.mxu0 0.0
    %1781 = vmatpush1.msra.mxu0 0.0
    %1782 = vmatprep.subr.mxu0 0.0
    %1783 = vmatpush1.msra.mxu0 0.0
    %1784 = vmatprep.subr.mxu0 0.0
    %1785 = vmatpush1.msra.mxu0 0.0
    %1786 = vmatprep.subr.mxu0 0.0
    %1787 = vmatpush1.msra.mxu0 0.0
    %1788 = vmatprep.subr.mxu0 0.0
    %1789 = vmatpush1.msra.mxu0 0.0
    %1790 = vmatprep.subr.mxu0 0.0
    %1791 = vmatpush1.msra.mxu0 0.0
    %1792 = vmatprep.subr.mxu0 0.0
    %1793 = vmatpush1.msra.mxu0 0.0
    %1794 = vmatprep.subr.mxu0 0.0
    %1795 = vmatpush1.msra.mxu0 0.0
    %1796 = vmatprep.subr.mxu0 0.0
    %1797 = vmatpush1.msra.mxu0 0.0
    %1798 = vmatprep.subr.mxu0 0.0
    %1799 = vmatpush1.msra.mxu0 0.0
    %1800 = vmatprep.subr.mxu0 0.0
    %1801 = vmatpush1.msra.mxu0 0.0
    %1802 = vmatprep.subr.mxu0 0.0
    %1803 = vmatpush1.msra.mxu0 0.0
    %1804 = vmatprep.subr.mxu0 0.0
    %1805 = vmatpush1.msra.mxu0 0.0
    %1806 = vmatprep.subr.mxu0 0.0
    %1807 = vmatpush1.msra.mxu0 0.0
    %1808 = vmatprep.subr.mxu0 0.0
    %1809 = vmatpush1.msra.mxu0 0.0
    %1810 = vmatprep.subr.mxu0 0.0
    %1811 = vmatpush1.msra.mxu0 0.0
    %1812 = vmatprep.subr.mxu0 0.0
    %1813 = vmatpush1.msra.mxu0 0.0
    %1814 = vmatprep.subr.mxu0 0.0
    %1815 = vmatpush1.msra.mxu0 0.0
    %1816 = vmatprep.subr.mxu0 0.0
    %1817 = vmatpush1.msra.mxu0 0.0
    %1818 = vmatprep.mubr.f32.mxu0 0.0
    %1819 = vmatmul.mubr.f32.gmra.mrb[0].mxu0 %v1752
    %v1820 = vpop.f32.mrb[0].mxu0
    %v1821 = vadd.f32 %v1584, %v1820
    %v1822 = vpop.f32.mrb[0].mxu0
    %1823 = vdwg.mxu0
    %v1824 = vxor.u32 %v1821, 2147483648
    %v1825 = vmul.f32 %v1824, 1.442695
    %v1826 = vpow.pop %v1825
    %v1827 = vadd.f32 %v1826, 1.0
    %v1828 = vrcp.pop %v1827
    %v1829 = vmul.f32 1.0, %v1828
    %v1830 = vtanh.pop %v1821
    %1832 = vrot.lane.b32.xlu0 %v1830, 64
    %v1833 = vpop.permute.xlu0 %1832
    %v1835 = vmul.f32 %v1829, %v1833
    %v1836 = vtanh.pop %v1835
    %1838 = vrot.lane.b32.xlu0 %v1836, 32
    %v1839 = vpop.permute.xlu0 %1838
    %v1841 = vmul.f32 %v1829, %v1839
    %1843 = vrot.lane.b32.xlu0 %v1841, 96
    %v1844 = vpop.permute.xlu0 %1843
    %v1845 = vsel %vm150, %v1844, 0
    %1847 = vmatprep.subr.mxu0 0.0
    %1848 = vmatpush1.msra.mxu0 %v243
    %1849 = vmatprep.subr.mxu0 0.0
    %1850 = vmatpush1.msra.mxu0 %v244
    %1851 = vmatprep.subr.mxu0 0.0
    %1852 = vmatpush1.msra.mxu0 %v245
    %1853 = vmatprep.subr.mxu0 0.0
    %1854 = vmatpush1.msra.mxu0 %v246
    %1855 = vmatprep.subr.mxu0 0.0
    %1856 = vmatpush1.msra.mxu0 0.0
    %1857 = vmatprep.subr.mxu0 0.0
    %1858 = vmatpush1.msra.mxu0 0.0
    %1859 = vmatprep.subr.mxu0 0.0
    %1860 = vmatpush1.msra.mxu0 0.0
    %1861 = vmatprep.subr.mxu0 0.0
    %1862 = vmatpush1.msra.mxu0 0.0
    %1863 = vmatprep.subr.mxu0 0.0
    %1864 = vmatpush1.msra.mxu0 0.0
    %1865 = vmatprep.subr.mxu0 0.0
    %1866 = vmatpush1.msra.mxu0 0.0
    %1867 = vmatprep.subr.mxu0 0.0
    %1868 = vmatpush1.msra.mxu0 0.0
    %1869 = vmatprep.subr.mxu0 0.0
    %1870 = vmatpush1.msra.mxu0 0.0
    %1871 = vmatprep.subr.mxu0 0.0
    %1872 = vmatpush1.msra.mxu0 0.0
    %1873 = vmatprep.subr.mxu0 0.0
    %1874 = vmatpush1.msra.mxu0 0.0
    %1875 = vmatprep.subr.mxu0 0.0
    %1876 = vmatpush1.msra.mxu0 0.0
    %1877 = vmatprep.subr.mxu0 0.0
    %1878 = vmatpush1.msra.mxu0 0.0
    %1879 = vmatprep.subr.mxu0 0.0
    %1880 = vmatpush1.msra.mxu0 0.0
    %1881 = vmatprep.subr.mxu0 0.0
    %1882 = vmatpush1.msra.mxu0 0.0
    %1883 = vmatprep.subr.mxu0 0.0
    %1884 = vmatpush1.msra.mxu0 0.0
    %1885 = vmatprep.subr.mxu0 0.0
    %1886 = vmatpush1.msra.mxu0 0.0
    %1887 = vmatprep.subr.mxu0 0.0
    %1888 = vmatpush1.msra.mxu0 0.0
    %1889 = vmatprep.subr.mxu0 0.0
    %1890 = vmatpush1.msra.mxu0 0.0
    %1891 = vmatprep.subr.mxu0 0.0
    %1892 = vmatpush1.msra.mxu0 0.0
    %1893 = vmatprep.subr.mxu0 0.0
    %1894 = vmatpush1.msra.mxu0 0.0
    %1895 = vmatprep.subr.mxu0 0.0
    %1896 = vmatpush1.msra.mxu0 0.0
    %1897 = vmatprep.subr.mxu0 0.0
    %1898 = vmatpush1.msra.mxu0 0.0
    %1899 = vmatprep.subr.mxu0 0.0
    %1900 = vmatpush1.msra.mxu0 0.0
    %1901 = vmatprep.subr.mxu0 0.0
    %1902 = vmatpush1.msra.mxu0 0.0
    %1903 = vmatprep.subr.mxu0 0.0
    %1904 = vmatpush1.msra.mxu0 0.0
    %1905 = vmatprep.subr.mxu0 0.0
    %1906 = vmatpush1.msra.mxu0 0.0
    %1907 = vmatprep.subr.mxu0 0.0
    %1908 = vmatpush1.msra.mxu0 0.0
    %1909 = vmatprep.subr.mxu0 0.0
    %1910 = vmatpush1.msra.mxu0 0.0
    %1911 = vmatprep.mubr.f32.mxu0 0.0
    %1912 = vmatmul.mubr.f32.gmra.mrb[0].mxu0 %v1845
    %v1913 = vpop.f32.mrb[0].mxu0
    %v1914 = vadd.f32 %v247, %v1913
    %v1915 = vpop.f32.mrb[0].mxu0
    %1916 = vdwg.mxu0
    %v1917 = vsel %vm657, %v1914, -inf
    %1918 = vmax.xlane.f32.xlu0 %v1917
    %v1919 = vpop.xlane.xlu0 %1918
    %v1920 = vsub.f32 %v1914, %v1919
    %v1921 = vmul.f32 %v1920, 1.442695
    %v1922 = vpow.pop %v1921
    %v1923 = vsel %vm657, %v1922, 0.0
    %1924 = vadd.xlane.f32.xlu0 %v1923
    %v1925 = vpop.xlane.xlu0 %1924
    %v1926 = vlog2.pop %v1925
    %v1927 = vmul.f32 %v1926, 0.6931472
    %v1928 = vadd.f32 %v1927, %v1919
    %v1929 = vsub.f32 %v1914, %v1928
    %v1930 = vrot.slane %v221, 4
    %v1931 = vrot.slane %v223, 4
    %1934 = vmatprep.subr.mxu0 %v228
    %1935 = vmatpush1.msra.mxu0 %v227
    %1936 = vmatprep.subr.mxu0 %v230
    %1937 = vmatpush1.msra.mxu0 %v229
    %1938 = vmatprep.subr.mxu0 %v232
    %1939 = vmatpush1.msra.mxu0 %v231
    %1940 = vmatprep.subr.mxu0 %v234
    %1941 = vmatpush1.msra.mxu0 %v233
    %1942 = vmatprep.subr.mxu0 0.0
    %1943 = vmatpush1.msra.mxu0 0.0
    %1944 = vmatprep.subr.mxu0 0.0
    %1945 = vmatpush1.msra.mxu0 0.0
    %1946 = vmatprep.subr.mxu0 0.0
    %1947 = vmatpush1.msra.mxu0 0.0
    %1948 = vmatprep.subr.mxu0 0.0
    %1949 = vmatpush1.msra.mxu0 0.0
    %1950 = vmatprep.subr.mxu0 0.0
    %1951 = vmatpush1.msra.mxu0 0.0
    %1952 = vmatprep.subr.mxu0 0.0
    %1953 = vmatpush1.msra.mxu0 0.0
    %1954 = vmatprep.subr.mxu0 0.0
    %1955 = vmatpush1.msra.mxu0 0.0
    %1956 = vmatprep.subr.mxu0 0.0
    %1957 = vmatpush1.msra.mxu0 0.0
    %1958 = vmatprep.subr.mxu0 0.0
    %1959 = vmatpush1.msra.mxu0 0.0
    %1960 = vmatprep.subr.mxu0 0.0
    %1961 = vmatpush1.msra.mxu0 0.0
    %1962 = vmatprep.subr.mxu0 0.0
    %1963 = vmatpush1.msra.mxu0 0.0
    %1964 = vmatprep.subr.mxu0 0.0
    %1965 = vmatpush1.msra.mxu0 0.0
    %1966 = vmatprep.subr.mxu0 0.0
    %1967 = vmatpush1.msra.mxu0 0.0
    %1968 = vmatprep.subr.mxu0 0.0
    %1969 = vmatpush1.msra.mxu0 0.0
    %1970 = vmatprep.subr.mxu0 0.0
    %1971 = vmatpush1.msra.mxu0 0.0
    %1972 = vmatprep.subr.mxu0 0.0
    %1973 = vmatpush1.msra.mxu0 0.0
    %1974 = vmatprep.subr.mxu0 0.0
    %1975 = vmatpush1.msra.mxu0 0.0
    %1976 = vmatprep.subr.mxu0 0.0
    %1977 = vmatpush1.msra.mxu0 0.0
    %1978 = vmatprep.subr.mxu0 0.0
    %1979 = vmatpush1.msra.mxu0 0.0
    %1980 = vmatprep.subr.mxu0 0.0
    %1981 = vmatpush1.msra.mxu0 0.0
    %1982 = vmatprep.subr.mxu0 0.0
    %1983 = vmatpush1.msra.mxu0 0.0
    %1984 = vmatprep.subr.mxu0 0.0
    %1985 = vmatpush1.msra.mxu0 0.0
    %1986 = vmatprep.subr.mxu0 0.0
    %1987 = vmatpush1.msra.mxu0 0.0
    %1988 = vmatprep.subr.mxu0 0.0
    %1989 = vmatpush1.msra.mxu0 0.0
    %1990 = vmatprep.subr.mxu0 0.0
    %1991 = vmatpush1.msra.mxu0 0.0
    %1992 = vmatprep.subr.mxu0 0.0
    %1993 = vmatpush1.msra.mxu0 0.0
    %1994 = vmatprep.subr.mxu0 0.0
    %1995 = vmatpush1.msra.mxu0 0.0
    %1996 = vmatprep.subr.mxu0 0.0
    %1997 = vmatpush1.msra.mxu0 0.0
    %1998 = vmatprep.mubr.f32.mxu0 0.0
    %1999 = vmatmul.mubr.f32.gmra.mrb[0].mxu0 %v1845
    %v2000 = vpop.f32.mrb[0].mxu0
    %v2001 = vadd.f32 %v1930, %v2000
    %v2002 = vpop.f32.mrb[0].mxu0
    %v2003 = vadd.f32 %v1931, %v2002
    %2004 = vdwg.mxu0
    %v2005 = vsel %vm323, %v2001, -inf
    %2006 = vmax.xlane.f32.xlu0 %v2005
    %v2007 = vpop.xlane.xlu0 %2006
    %v2008 = vsub.f32 %v2001, %v2007
    %v2009 = vmul.f32 %v2008, 1.442695
    %v2010 = vpow.pop %v2009
    %2012 = vrot.lane.b32.xlu0 %v2010, 96
    %v2013 = vpop.permute.xlu0 %2012
    %v2015 = vsel %vm334, %v2013, 0.0
    %2016 = vadd.xlane.f32.xlu0 %v2015
    %v2017 = vpop.xlane.xlu0 %2016
    %v2018 = vrcp.pop %v2017
    %v2019 = vmul.f32 %v2010, %v2018
    %2021 = vrot.lane.b32.xlu0 %v2019, 96
    %v2022 = vpop.permute.xlu0 %2021
    %v2023 = vsel %vm343, %v2022, 0
    %2025 = vmatprep.subr.mxu0 0.0
    %2026 = vmatpush1.msra.mxu0 %v225
    %2027 = vmatprep.subr.mxu0 0.0
    %2028 = vmatpush1.msra.mxu0 %v226
    %2029 = vmatprep.subr.mxu0 0.0
    %2030 = vmatpush1.msra.mxu0 0.0
    %2031 = vmatprep.subr.mxu0 0.0
    %2032 = vmatpush1.msra.mxu0 0.0
    %2033 = vmatprep.subr.mxu0 0.0
    %2034 = vmatpush1.msra.mxu0 0.0
    %2035 = vmatprep.subr.mxu0 0.0
    %2036 = vmatpush1.msra.mxu0 0.0
    %2037 = vmatprep.subr.mxu0 0.0
    %2038 = vmatpush1.msra.mxu0 0.0
    %2039 = vmatprep.subr.mxu0 0.0
    %2040 = vmatpush1.msra.mxu0 0.0
    %2041 = vmatprep.subr.mxu0 0.0
    %2042 = vmatpush1.msra.mxu0 0.0
    %2043 = vmatprep.subr.mxu0 0.0
    %2044 = vmatpush1.msra.mxu0 0.0
    %2045 = vmatprep.subr.mxu0 0.0
    %2046 = vmatpush1.msra.mxu0 0.0
    %2047 = vmatprep.subr.mxu0 0.0
    %2048 = vmatpush1.msra.mxu0 0.0
    %2049 = vmatprep.subr.mxu0 0.0
    %2050 = vmatpush1.msra.mxu0 0.0
    %2051 = vmatprep.subr.mxu0 0.0
    %2052 = vmatpush1.msra.mxu0 0.0
    %2053 = vmatprep.subr.mxu0 0.0
    %2054 = vmatpush1.msra.mxu0 0.0
    %2055 = vmatprep.subr.mxu0 0.0
    %2056 = vmatpush1.msra.mxu0 0.0
    %2057 = vmatprep.subr.mxu0 0.0
    %2058 = vmatpush1.msra.mxu0 0.0
    %2059 = vmatprep.subr.mxu0 0.0
    %2060 = vmatpush1.msra.mxu0 0.0
    %2061 = vmatprep.subr.mxu0 0.0
    %2062 = vmatpush1.msra.mxu0 0.0
    %2063 = vmatprep.subr.mxu0 0.0
    %2064 = vmatpush1.msra.mxu0 0.0
    %2065 = vmatprep.subr.mxu0 0.0
    %2066 = vmatpush1.msra.mxu0 0.0
    %2067 = vmatprep.subr.mxu0 0.0
    %2068 = vmatpush1.msra.mxu0 0.0
    %2069 = vmatprep.subr.mxu0 0.0
    %2070 = vmatpush1.msra.mxu0 0.0
    %2071 = vmatprep.subr.mxu0 0.0
    %2072 = vmatpush1.msra.mxu0 0.0
    %2073 = vmatprep.subr.mxu0 0.0
    %2074 = vmatpush1.msra.mxu0 0.0
    %2075 = vmatprep.subr.mxu0 0.0
    %2076 = vmatpush1.msra.mxu0 0.0
    %2077 = vmatprep.subr.mxu0 0.0
    %2078 = vmatpush1.msra.mxu0 0.0
    %2079 = vmatprep.subr.mxu0 0.0
    %2080 = vmatpush1.msra.mxu0 0.0
    %2081 = vmatprep.subr.mxu0 0.0
    %2082 = vmatpush1.msra.mxu0 0.0
    %2083 = vmatprep.subr.mxu0 0.0
    %2084 = vmatpush1.msra.mxu0 0.0
    %2085 = vmatprep.subr.mxu0 0.0
    %2086 = vmatpush1.msra.mxu0 0.0
    %2087 = vmatprep.subr.mxu0 0.0
    %2088 = vmatpush1.msra.mxu0 0.0
    %2089 = vmatprep.mubr.f32.mxu0 0.0
    %2090 = vmatmul.mubr.f32.gmra.mrb[0].mxu0 %v2023
    %v2091 = vpop.f32.mrb[0].mxu0
    %v2092 = vadd.f32 0.0, %v2091
    %v2093 = vpop.f32.mrb[0].mxu0
    %2094 = vdwg.mxu0
    %v2096 = vsel %vm150, %v2092, 0
    %2098 = vmatprep.subr.mxu0 0.0
    %2099 = vmatpush1.msra.mxu0 %v235
    %2100 = vmatprep.subr.mxu0 0.0
    %2101 = vmatpush1.msra.mxu0 %v236
    %2102 = vmatprep.subr.mxu0 0.0
    %2103 = vmatpush1.msra.mxu0 %v237
    %2104 = vmatprep.subr.mxu0 0.0
    %2105 = vmatpush1.msra.mxu0 %v238
    %2106 = vmatprep.subr.mxu0 0.0
    %2107 = vmatpush1.msra.mxu0 0.0
    %2108 = vmatprep.subr.mxu0 0.0
    %2109 = vmatpush1.msra.mxu0 0.0
    %2110 = vmatprep.subr.mxu0 0.0
    %2111 = vmatpush1.msra.mxu0 0.0
    %2112 = vmatprep.subr.mxu0 0.0
    %2113 = vmatpush1.msra.mxu0 0.0
    %2114 = vmatprep.subr.mxu0 0.0
    %2115 = vmatpush1.msra.mxu0 0.0
    %2116 = vmatprep.subr.mxu0 0.0
    %2117 = vmatpush1.msra.mxu0 0.0
    %2118 = vmatprep.subr.mxu0 0.0
    %2119 = vmatpush1.msra.mxu0 0.0
    %2120 = vmatprep.subr.mxu0 0.0
    %2121 = vmatpush1.msra.mxu0 0.0
    %2122 = vmatprep.subr.mxu0 0.0
    %2123 = vmatpush1.msra.mxu0 0.0
    %2124 = vmatprep.subr.mxu0 0.0
    %2125 = vmatpush1.msra.mxu0 0.0
    %2126 = vmatprep.subr.mxu0 0.0
    %2127 = vmatpush1.msra.mxu0 0.0
    %2128 = vmatprep.subr.mxu0 0.0
    %2129 = vmatpush1.msra.mxu0 0.0
    %2130 = vmatprep.subr.mxu0 0.0
    %2131 = vmatpush1.msra.mxu0 0.0
    %2132 = vmatprep.subr.mxu0 0.0
    %2133 = vmatpush1.msra.mxu0 0.0
    %2134 = vmatprep.subr.mxu0 0.0
    %2135 = vmatpush1.msra.mxu0 0.0
    %2136 = vmatprep.subr.mxu0 0.0
    %2137 = vmatpush1.msra.mxu0 0.0
    %2138 = vmatprep.subr.mxu0 0.0
    %2139 = vmatpush1.msra.mxu0 0.0
    %2140 = vmatprep.subr.mxu0 0.0
    %2141 = vmatpush1.msra.mxu0 0.0
    %2142 = vmatprep.subr.mxu0 0.0
    %2143 = vmatpush1.msra.mxu0 0.0
    %2144 = vmatprep.subr.mxu0 0.0
    %2145 = vmatpush1.msra.mxu0 0.0
    %2146 = vmatprep.subr.mxu0 0.0
    %2147 = vmatpush1.msra.mxu0 0.0
    %2148 = vmatprep.subr.mxu0 0.0
    %2149 = vmatpush1.msra.mxu0 0.0
    %2150 = vmatprep.subr.mxu0 0.0
    %2151 = vmatpush1.msra.mxu0 0.0
    %2152 = vmatprep.subr.mxu0 0.0
    %2153 = vmatpush1.msra.mxu0 0.0
    %2154 = vmatprep.subr.mxu0 0.0
    %2155 = vmatpush1.msra.mxu0 0.0
    %2156 = vmatprep.subr.mxu0 0.0
    %2157 = vmatpush1.msra.mxu0 0.0
    %2158 = vmatprep.subr.mxu0 0.0
    %2159 = vmatpush1.msra.mxu0 0.0
    %2160 = vmatprep.subr.mxu0 0.0
    %2161 = vmatpush1.msra.mxu0 0.0
    %2162 = vmatprep.mubr.f32.mxu0 0.0
    %2163 = vmatmul.mubr.f32.gmra.mrb[0].mxu0 %v2096
    %v2164 = vpop.f32.mrb[0].mxu0
    %v2165 = vadd.f32 0.0, %v2164
    %v2166 = vpop.f32.mrb[0].mxu0
    %2167 = vdwg.mxu0
    %v2168 = vadd.f32 %v2001, %v2165
    %v2169 = vmax.f32 %v2168, 0.0
    %v2171 = vsel %vm150, %v2169, 0
    %2173 = vmatprep.subr.mxu0 0.0
    %2174 = vmatpush1.msra.mxu0 %v239
    %2175 = vmatprep.subr.mxu0 0.0
    %2176 = vmatpush1.msra.mxu0 %v240
    %2177 = vmatprep.subr.mxu0 0.0
    %2178 = vmatpush1.msra.mxu0 %v241
    %2179 = vmatprep.subr.mxu0 0.0
    %2180 = vmatpush1.msra.mxu0 %v242
    %2181 = vmatprep.subr.mxu0 0.0
    %2182 = vmatpush1.msra.mxu0 0.0
    %2183 = vmatprep.subr.mxu0 0.0
    %2184 = vmatpush1.msra.mxu0 0.0
    %2185 = vmatprep.subr.mxu0 0.0
    %2186 = vmatpush1.msra.mxu0 0.0
    %2187 = vmatprep.subr.mxu0 0.0
    %2188 = vmatpush1.msra.mxu0 0.0
    %2189 = vmatprep.subr.mxu0 0.0
    %2190 = vmatpush1.msra.mxu0 0.0
    %2191 = vmatprep.subr.mxu0 0.0
    %2192 = vmatpush1.msra.mxu0 0.0
    %2193 = vmatprep.subr.mxu0 0.0
    %2194 = vmatpush1.msra.mxu0 0.0
    %2195 = vmatprep.subr.mxu0 0.0
    %2196 = vmatpush1.msra.mxu0 0.0
    %2197 = vmatprep.subr.mxu0 0.0
    %2198 = vmatpush1.msra.mxu0 0.0
    %2199 = vmatprep.subr.mxu0 0.0
    %2200 = vmatpush1.msra.mxu0 0.0
    %2201 = vmatprep.subr.mxu0 0.0
    %2202 = vmatpush1.msra.mxu0 0.0
    %2203 = vmatprep.subr.mxu0 0.0
    %2204 = vmatpush1.msra.mxu0 0.0
    %2205 = vmatprep.subr.mxu0 0.0
    %2206 = vmatpush1.msra.mxu0 0.0
    %2207 = vmatprep.subr.mxu0 0.0
    %2208 = vmatpush1.msra.mxu0 0.0
    %2209 = vmatprep.subr.mxu0 0.0
    %2210 = vmatpush1.msra.mxu0 0.0
    %2211 = vmatprep.subr.mxu0 0.0
    %2212 = vmatpush1.msra.mxu0 0.0
    %2213 = vmatprep.subr.mxu0 0.0
    %2214 = vmatpush1.msra.mxu0 0.0
    %2215 = vmatprep.subr.mxu0 0.0
    %2216 = vmatpush1.msra.mxu0 0.0
    %2217 = vmatprep.subr.mxu0 0.0
    %2218 = vmatpush1.msra.mxu0 0.0
    %2219 = vmatprep.subr.mxu0 0.0
    %2220 = vmatpush1.msra.mxu0 0.0
    %2221 = vmatprep.subr.mxu0 0.0
    %2222 = vmatpush1.msra.mxu0 0.0
    %2223 = vmatprep.subr.mxu0 0.0
    %2224 = vmatpush1.msra.mxu0 0.0
    %2225 = vmatprep.subr.mxu0 0.0
    %2226 = vmatpush1.msra.mxu0 0.0
    %2227 = vmatprep.subr.mxu0 0.0
    %2228 = vmatpush1.msra.mxu0 0.0
    %2229 = vmatprep.subr.mxu0 0.0
    %2230 = vmatpush1.msra.mxu0 0.0
    %2231 = vmatprep.subr.mxu0 0.0
    %2232 = vmatpush1.msra.mxu0 0.0
    %2233 = vmatprep.subr.mxu0 0.0
    %2234 = vmatpush1.msra.mxu0 0.0
    %2235 = vmatprep.subr.mxu0 0.0
    %2236 = vmatpush1.msra.mxu0 0.0
    %2237 = vmatprep.mubr.f32.mxu0 0.0
    %2238 = vmatmul.mubr.f32.gmra.mrb[0].mxu0 %v2171
    %v2239 = vpop.f32.mrb[0].mxu0
    %v2240 = vadd.f32 %v2003, %v2239
    %v2241 = vpop.f32.mrb[0].mxu0
    %2242 = vdwg.mxu0
    %v2243 = vxor.u32 %v2240, 2147483648
    %v2244 = vmul.f32 %v2243, 1.442695
    %v2245 = vpow.pop %v2244
    %v2246 = vadd.f32 %v2245, 1.0
    %v2247 = vrcp.pop %v2246
    %v2248 = vmul.f32 1.0, %v2247
    %v2249 = vtanh.pop %v2240
    %2251 = vrot.lane.b32.xlu0 %v2249, 64
    %v2252 = vpop.permute.xlu0 %2251
    %v2254 = vmul.f32 %v2248, %v2252
    %v2255 = vtanh.pop %v2254
    %2257 = vrot.lane.b32.xlu0 %v2255, 32
    %v2258 = vpop.permute.xlu0 %2257
    %v2260 = vmul.f32 %v2248, %v2258
    %2262 = vrot.lane.b32.xlu0 %v2260, 96
    %v2263 = vpop.permute.xlu0 %2262
    %v2264 = vsel %vm150, %v2263, 0
    %2266 = vmatprep.subr.mxu0 0.0
    %2267 = vmatpush1.msra.mxu0 %v243
    %2268 = vmatprep.subr.mxu0 0.0
    %2269 = vmatpush1.msra.mxu0 %v244
    %2270 = vmatprep.subr.mxu0 0.0
    %2271 = vmatpush1.msra.mxu0 %v245
    %2272 = vmatprep.subr.mxu0 0.0
    %2273 = vmatpush1.msra.mxu0 %v246
    %2274 = vmatprep.subr.mxu0 0.0
    %2275 = vmatpush1.msra.mxu0 0.0
    %2276 = vmatprep.subr.mxu0 0.0
    %2277 = vmatpush1.msra.mxu0 0.0
    %2278 = vmatprep.subr.mxu0 0.0
    %2279 = vmatpush1.msra.mxu0 0.0
    %2280 = vmatprep.subr.mxu0 0.0
    %2281 = vmatpush1.msra.mxu0 0.0
    %2282 = vmatprep.subr.mxu0 0.0
    %2283 = vmatpush1.msra.mxu0 0.0
    %2284 = vmatprep.subr.mxu0 0.0
    %2285 = vmatpush1.msra.mxu0 0.0
    %2286 = vmatprep.subr.mxu0 0.0
    %2287 = vmatpush1.msra.mxu0 0.0
    %2288 = vmatprep.subr.mxu0 0.0
    %2289 = vmatpush1.msra.mxu0 0.0
    %2290 = vmatprep.subr.mxu0 0.0
    %2291 = vmatpush1.msra.mxu0 0.0
    %2292 = vmatprep.subr.mxu0 0.0
    %2293 = vmatpush1.msra.mxu0 0.0
    %2294 = vmatprep.subr.mxu0 0.0
    %2295 = vmatpush1.msra.mxu0 0.0
    %2296 = vmatprep.subr.mxu0 0.0
    %2297 = vmatpush1.msra.mxu0 0.0
    %2298 = vmatprep.subr.mxu0 0.0
    %2299 = vmatpush1.msra.mxu0 0.0
    %2300 = vmatprep.subr.mxu0 0.0
    %2301 = vmatpush1.msra.mxu0 0.0
    %2302 = vmatprep.subr.mxu0 0.0
    %2303 = vmatpush1.msra.mxu0 0.0
    %2304 = vmatprep.subr.mxu0 0.0
    %2305 = vmatpush1.msra.mxu0 0.0
    %2306 = vmatprep.subr.mxu0 0.0
    %2307 = vmatpush1.msra.mxu0 0.0
    %2308 = vmatprep.subr.mxu0 0.0
    %2309 = vmatpush1.msra.mxu0 0.0
    %2310 = vmatprep.subr.mxu0 0.0
    %2311 = vmatpush1.msra.mxu0 0.0
    %2312 = vmatprep.subr.mxu0 0.0
    %2313 = vmatpush1.msra.mxu0 0.0
    %2314 = vmatprep.subr.mxu0 0.0
    %2315 = vmatpush1.msra.mxu0 0.0
    %2316 = vmatprep.subr.mxu0 0.0
    %2317 = vmatpush1.msra.mxu0 0.0
    %2318 = vmatprep.subr.mxu0 0.0
    %2319 = vmatpush1.msra.mxu0 0.0
    %2320 = vmatprep.subr.mxu0 0.0
    %2321 = vmatpush1.msra.mxu0 0.0
    %2322 = vmatprep.subr.mxu0 0.0
    %2323 = vmatpush1.msra.mxu0 0.0
    %2324 = vmatprep.subr.mxu0 0.0
    %2325 = vmatpush1.msra.mxu0 0.0
    %2326 = vmatprep.subr.mxu0 0.0
    %2327 = vmatpush1.msra.mxu0 0.0
    %2328 = vmatprep.subr.mxu0 0.0
    %2329 = vmatpush1.msra.mxu0 0.0
    %2330 = vmatprep.mubr.f32.mxu0 0.0
    %2331 = vmatmul.mubr.f32.gmra.mrb[0].mxu0 %v2264
    %v2332 = vpop.f32.mrb[0].mxu0
    %v2333 = vadd.f32 %v247, %v2332
    %v2334 = vpop.f32.mrb[0].mxu0
    %2335 = vdwg.mxu0
    %v2336 = vsel %vm657, %v2333, -inf
    %2337 = vmax.xlane.f32.xlu0 %v2336
    %v2338 = vpop.xlane.xlu0 %2337
    %v2339 = vsub.f32 %v2333, %v2338
    %v2340 = vmul.f32 %v2339, 1.442695
    %v2341 = vpow.pop %v2340
    %v2342 = vsel %vm657, %v2341, 0.0
    %2343 = vadd.xlane.f32.xlu0 %v2342
    %v2344 = vpop.xlane.xlu0 %2343
    %v2345 = vlog2.pop %v2344
    %v2346 = vmul.f32 %v2345, 0.6931472
    %v2347 = vadd.f32 %v2346, %v2338
    %v2348 = vsub.f32 %v2333, %v2347
    %v2349 = vrot.slane %v221, 5
    %v2350 = vrot.slane %v223, 5
    %2353 = vmatprep.subr.mxu0 %v228
    %2354 = vmatpush1.msra.mxu0 %v227
    %2355 = vmatprep.subr.mxu0 %v230
    %2356 = vmatpush1.msra.mxu0 %v229
    %2357 = vmatprep.subr.mxu0 %v232
    %2358 = vmatpush1.msra.mxu0 %v231
    %2359 = vmatprep.subr.mxu0 %v234
    %2360 = vmatpush1.msra.mxu0 %v233
    %2361 = vmatprep.subr.mxu0 0.0
    %2362 = vmatpush1.msra.mxu0 0.0
    %2363 = vmatprep.subr.mxu0 0.0
    %2364 = vmatpush1.msra.mxu0 0.0
    %2365 = vmatprep.subr.mxu0 0.0
    %2366 = vmatpush1.msra.mxu0 0.0
    %2367 = vmatprep.subr.mxu0 0.0
    %2368 = vmatpush1.msra.mxu0 0.0
    %2369 = vmatprep.subr.mxu0 0.0
    %2370 = vmatpush1.msra.mxu0 0.0
    %2371 = vmatprep.subr.mxu0 0.0
    %2372 = vmatpush1.msra.mxu0 0.0
    %2373 = vmatprep.subr.mxu0 0.0
    %2374 = vmatpush1.msra.mxu0 0.0
    %2375 = vmatprep.subr.mxu0 0.0
    %2376 = vmatpush1.msra.mxu0 0.0
    %2377 = vmatprep.subr.mxu0 0.0
    %2378 = vmatpush1.msra.mxu0 0.0
    %2379 = vmatprep.subr.mxu0 0.0
    %2380 = vmatpush1.msra.mxu0 0.0
    %2381 = vmatprep.subr.mxu0 0.0
    %2382 = vmatpush1.msra.mxu0 0.0
    %2383 = vmatprep.subr.mxu0 0.0
    %2384 = vmatpush1.msra.mxu0 0.0
    %2385 = vmatprep.subr.mxu0 0.0
    %2386 = vmatpush1.msra.mxu0 0.0
    %2387 = vmatprep.subr.mxu0 0.0
    %2388 = vmatpush1.msra.mxu0 0.0
    %2389 = vmatprep.subr.mxu0 0.0
    %2390 = vmatpush1.msra.mxu0 0.0
    %2391 = vmatprep.subr.mxu0 0.0
    %2392 = vmatpush1.msra.mxu0 0.0
    %2393 = vmatprep.subr.mxu0 0.0
    %2394 = vmatpush1.msra.mxu0 0.0
    %2395 = vmatprep.subr.mxu0 0.0
    %2396 = vmatpush1.msra.mxu0 0.0
    %2397 = vmatprep.subr.mxu0 0.0
    %2398 = vmatpush1.msra.mxu0 0.0
    %2399 = vmatprep.subr.mxu0 0.0
    %2400 = vmatpush1.msra.mxu0 0.0
    %2401 = vmatprep.subr.mxu0 0.0
    %2402 = vmatpush1.msra.mxu0 0.0
    %2403 = vmatprep.subr.mxu0 0.0
    %2404 = vmatpush1.msra.mxu0 0.0
    %2405 = vmatprep.subr.mxu0 0.0
    %2406 = vmatpush1.msra.mxu0 0.0
    %2407 = vmatprep.subr.mxu0 0.0
    %2408 = vmatpush1.msra.mxu0 0.0
    %2409 = vmatprep.subr.mxu0 0.0
    %2410 = vmatpush1.msra.mxu0 0.0
    %2411 = vmatprep.subr.mxu0 0.0
    %2412 = vmatpush1.msra.mxu0 0.0
    %2413 = vmatprep.subr.mxu0 0.0
    %2414 = vmatpush1.msra.mxu0 0.0
    %2415 = vmatprep.subr.mxu0 0.0
    %2416 = vmatpush1.msra.mxu0 0.0
    %2417 = vmatprep.mubr.f32.mxu0 0.0
    %2418 = vmatmul.mubr.f32.gmra.mrb[0].mxu0 %v2264
    %v2419 = vpop.f32.mrb[0].mxu0
    %v2420 = vadd.f32 %v2349, %v2419
    %v2421 = vpop.f32.mrb[0].mxu0
    %v2422 = vadd.f32 %v2350, %v2421
    %2423 = vdwg.mxu0
    %v2424 = vsel %vm323, %v2420, -inf
    %2425 = vmax.xlane.f32.xlu0 %v2424
    %v2426 = vpop.xlane.xlu0 %2425
    %v2427 = vsub.f32 %v2420, %v2426
    %v2428 = vmul.f32 %v2427, 1.442695
    %v2429 = vpow.pop %v2428
    %2431 = vrot.lane.b32.xlu0 %v2429, 96
    %v2432 = vpop.permute.xlu0 %2431
    %v2434 = vsel %vm334, %v2432, 0.0
    %2435 = vadd.xlane.f32.xlu0 %v2434
    %v2436 = vpop.xlane.xlu0 %2435
    %v2437 = vrcp.pop %v2436
    %v2438 = vmul.f32 %v2429, %v2437
    %2440 = vrot.lane.b32.xlu0 %v2438, 96
    %v2441 = vpop.permute.xlu0 %2440
    %v2442 = vsel %vm343, %v2441, 0
    %2444 = vmatprep.subr.mxu0 0.0
    %2445 = vmatpush1.msra.mxu0 %v225
    %2446 = vmatprep.subr.mxu0 0.0
    %2447 = vmatpush1.msra.mxu0 %v226
    %2448 = vmatprep.subr.mxu0 0.0
    %2449 = vmatpush1.msra.mxu0 0.0
    %2450 = vmatprep.subr.mxu0 0.0
    %2451 = vmatpush1.msra.mxu0 0.0
    %2452 = vmatprep.subr.mxu0 0.0
    %2453 = vmatpush1.msra.mxu0 0.0
    %2454 = vmatprep.subr.mxu0 0.0
    %2455 = vmatpush1.msra.mxu0 0.0
    %2456 = vmatprep.subr.mxu0 0.0
    %2457 = vmatpush1.msra.mxu0 0.0
    %2458 = vmatprep.subr.mxu0 0.0
    %2459 = vmatpush1.msra.mxu0 0.0
    %2460 = vmatprep.subr.mxu0 0.0
    %2461 = vmatpush1.msra.mxu0 0.0
    %2462 = vmatprep.subr.mxu0 0.0
    %2463 = vmatpush1.msra.mxu0 0.0
    %2464 = vmatprep.subr.mxu0 0.0
    %2465 = vmatpush1.msra.mxu0 0.0
    %2466 = vmatprep.subr.mxu0 0.0
    %2467 = vmatpush1.msra.mxu0 0.0
    %2468 = vmatprep.subr.mxu0 0.0
    %2469 = vmatpush1.msra.mxu0 0.0
    %2470 = vmatprep.subr.mxu0 0.0
    %2471 = vmatpush1.msra.mxu0 0.0
    %2472 = vmatprep.subr.mxu0 0.0
    %2473 = vmatpush1.msra.mxu0 0.0
    %2474 = vmatprep.subr.mxu0 0.0
    %2475 = vmatpush1.msra.mxu0 0.0
    %2476 = vmatprep.subr.mxu0 0.0
    %2477 = vmatpush1.msra.mxu0 0.0
    %2478 = vmatprep.subr.mxu0 0.0
    %2479 = vmatpush1.msra.mxu0 0.0
    %2480 = vmatprep.subr.mxu0 0.0
    %2481 = vmatpush1.msra.mxu0 0.0
    %2482 = vmatprep.subr.mxu0 0.0
    %2483 = vmatpush1.msra.mxu0 0.0
    %2484 = vmatprep.subr.mxu0 0.0
    %2485 = vmatpush1.msra.mxu0 0.0
    %2486 = vmatprep.subr.mxu0 0.0
    %2487 = vmatpush1.msra.mxu0 0.0
    %2488 = vmatprep.subr.mxu0 0.0
    %2489 = vmatpush1.msra.mxu0 0.0
    %2490 = vmatprep.subr.mxu0 0.0
    %2491 = vmatpush1.msra.mxu0 0.0
    %2492 = vmatprep.subr.mxu0 0.0
    %2493 = vmatpush1.msra.mxu0 0.0
    %2494 = vmatprep.subr.mxu0 0.0
    %2495 = vmatpush1.msra.mxu0 0.0
    %2496 = vmatprep.subr.mxu0 0.0
    %2497 = vmatpush1.msra.mxu0 0.0
    %2498 = vmatprep.subr.mxu0 0.0
    %2499 = vmatpush1.msra.mxu0 0.0
    %2500 = vmatprep.subr.mxu0 0.0
    %2501 = vmatpush1.msra.mxu0 0.0
    %2502 = vmatprep.subr.mxu0 0.0
    %2503 = vmatpush1.msra.mxu0 0.0
    %2504 = vmatprep.subr.mxu0 0.0
    %2505 = vmatpush1.msra.mxu0 0.0
    %2506 = vmatprep.subr.mxu0 0.0
    %2507 = vmatpush1.msra.mxu0 0.0
    %2508 = vmatprep.mubr.f32.mxu0 0.0
    %2509 = vmatmul.mubr.f32.gmra.mrb[0].mxu0 %v2442
    %v2510 = vpop.f32.mrb[0].mxu0
    %v2511 = vadd.f32 0.0, %v2510
    %v2512 = vpop.f32.mrb[0].mxu0
    %2513 = vdwg.mxu0
    %v2515 = vsel %vm150, %v2511, 0
    %2517 = vmatprep.subr.mxu0 0.0
    %2518 = vmatpush1.msra.mxu0 %v235
    %2519 = vmatprep.subr.mxu0 0.0
    %2520 = vmatpush1.msra.mxu0 %v236
    %2521 = vmatprep.subr.mxu0 0.0
    %2522 = vmatpush1.msra.mxu0 %v237
    %2523 = vmatprep.subr.mxu0 0.0
    %2524 = vmatpush1.msra.mxu0 %v238
    %2525 = vmatprep.subr.mxu0 0.0
    %2526 = vmatpush1.msra.mxu0 0.0
    %2527 = vmatprep.subr.mxu0 0.0
    %2528 = vmatpush1.msra.mxu0 0.0
    %2529 = vmatprep.subr.mxu0 0.0
    %2530 = vmatpush1.msra.mxu0 0.0
    %2531 = vmatprep.subr.mxu0 0.0
    %2532 = vmatpush1.msra.mxu0 0.0
    %2533 = vmatprep.subr.mxu0 0.0
    %2534 = vmatpush1.msra.mxu0 0.0
    %2535 = vmatprep.subr.mxu0 0.0
    %2536 = vmatpush1.msra.mxu0 0.0
    %2537 = vmatprep.subr.mxu0 0.0
    %2538 = vmatpush1.msra.mxu0 0.0
    %2539 = vmatprep.subr.mxu0 0.0
    %2540 = vmatpush1.msra.mxu0 0.0
    %2541 = vmatprep.subr.mxu0 0.0
    %2542 = vmatpush1.msra.mxu0 0.0
    %2543 = vmatprep.subr.mxu0 0.0
    %2544 = vmatpush1.msra.mxu0 0.0
    %2545 = vmatprep.subr.mxu0 0.0
    %2546 = vmatpush1.msra.mxu0 0.0
    %2547 = vmatprep.subr.mxu0 0.0
    %2548 = vmatpush1.msra.mxu0 0.0
    %2549 = vmatprep.subr.mxu0 0.0
    %2550 = vmatpush1.msra.mxu0 0.0
    %2551 = vmatprep.subr.mxu0 0.0
    %2552 = vmatpush1.msra.mxu0 0.0
    %2553 = vmatprep.subr.mxu0 0.0
    %2554 = vmatpush1.msra.mxu0 0.0
    %2555 = vmatprep.subr.mxu0 0.0
    %2556 = vmatpush1.msra.mxu0 0.0
    %2557 = vmatprep.subr.mxu0 0.0
    %2558 = vmatpush1.msra.mxu0 0.0
    %2559 = vmatprep.subr.mxu0 0.0
    %2560 = vmatpush1.msra.mxu0 0.0
    %2561 = vmatprep.subr.mxu0 0.0
    %2562 = vmatpush1.msra.mxu0 0.0
    %2563 = vmatprep.subr.mxu0 0.0
    %2564 = vmatpush1.msra.mxu0 0.0
    %2565 = vmatprep.subr.mxu0 0.0
    %2566 = vmatpush1.msra.mxu0 0.0
    %2567 = vmatprep.subr.mxu0 0.0
    %2568 = vmatpush1.msra.mxu0 0.0
    %2569 = vmatprep.subr.mxu0 0.0
    %2570 = vmatpush1.msra.mxu0 0.0
    %2571 = vmatprep.subr.mxu0 0.0
    %2572 = vmatpush1.msra.mxu0 0.0
    %2573 = vmatprep.subr.mxu0 0.0
    %2574 = vmatpush1.msra.mxu0 0.0
    %2575 = vmatprep.subr.mxu0 0.0
    %2576 = vmatpush1.msra.mxu0 0.0
    %2577 = vmatprep.subr.mxu0 0.0
    %2578 = vmatpush1.msra.mxu0 0.0
    %2579 = vmatprep.subr.mxu0 0.0
    %2580 = vmatpush1.msra.mxu0 0.0
    %2581 = vmatprep.mubr.f32.mxu0 0.0
    %2582 = vmatmul.mubr.f32.gmra.mrb[0].mxu0 %v2515
    %v2583 = vpop.f32.mrb[0].mxu0
    %v2584 = vadd.f32 0.0, %v2583
    %v2585 = vpop.f32.mrb[0].mxu0
    %2586 = vdwg.mxu0
    %v2587 = vadd.f32 %v2420, %v2584
    %v2588 = vmax.f32 %v2587, 0.0
    %v2590 = vsel %vm150, %v2588, 0
    %2592 = vmatprep.subr.mxu0 0.0
    %2593 = vmatpush1.msra.mxu0 %v239
    %2594 = vmatprep.subr.mxu0 0.0
    %2595 = vmatpush1.msra.mxu0 %v240
    %2596 = vmatprep.subr.mxu0 0.0
    %2597 = vmatpush1.msra.mxu0 %v241
    %2598 = vmatprep.subr.mxu0 0.0
    %2599 = vmatpush1.msra.mxu0 %v242
    %2600 = vmatprep.subr.mxu0 0.0
    %2601 = vmatpush1.msra.mxu0 0.0
    %2602 = vmatprep.subr.mxu0 0.0
    %2603 = vmatpush1.msra.mxu0 0.0
    %2604 = vmatprep.subr.mxu0 0.0
    %2605 = vmatpush1.msra.mxu0 0.0
    %2606 = vmatprep.subr.mxu0 0.0
    %2607 = vmatpush1.msra.mxu0 0.0
    %2608 = vmatprep.subr.mxu0 0.0
    %2609 = vmatpush1.msra.mxu0 0.0
    %2610 = vmatprep.subr.mxu0 0.0
    %2611 = vmatpush1.msra.mxu0 0.0
    %2612 = vmatprep.subr.mxu0 0.0
    %2613 = vmatpush1.msra.mxu0 0.0
    %2614 = vmatprep.subr.mxu0 0.0
    %2615 = vmatpush1.msra.mxu0 0.0
    %2616 = vmatprep.subr.mxu0 0.0
    %2617 = vmatpush1.msra.mxu0 0.0
    %2618 = vmatprep.subr.mxu0 0.0
    %2619 = vmatpush1.msra.mxu0 0.0
    %2620 = vmatprep.subr.mxu0 0.0
    %2621 = vmatpush1.msra.mxu0 0.0
    %2622 = vmatprep.subr.mxu0 0.0
    %2623 = vmatpush1.msra.mxu0 0.0
    %2624 = vmatprep.subr.mxu0 0.0
    %2625 = vmatpush1.msra.mxu0 0.0
    %2626 = vmatprep.subr.mxu0 0.0
    %2627 = vmatpush1.msra.mxu0 0.0
    %2628 = vmatprep.subr.mxu0 0.0
    %2629 = vmatpush1.msra.mxu0 0.0
    %2630 = vmatprep.subr.mxu0 0.0
    %2631 = vmatpush1.msra.mxu0 0.0
    %2632 = vmatprep.subr.mxu0 0.0
    %2633 = vmatpush1.msra.mxu0 0.0
    %2634 = vmatprep.subr.mxu0 0.0
    %2635 = vmatpush1.msra.mxu0 0.0
    %2636 = vmatprep.subr.mxu0 0.0
    %2637 = vmatpush1.msra.mxu0 0.0
    %2638 = vmatprep.subr.mxu0 0.0
    %2639 = vmatpush1.msra.mxu0 0.0
    %2640 = vmatprep.subr.mxu0 0.0
    %2641 = vmatpush1.msra.mxu0 0.0
    %2642 = vmatprep.subr.mxu0 0.0
    %2643 = vmatpush1.msra.mxu0 0.0
    %2644 = vmatprep.subr.mxu0 0.0
    %2645 = vmatpush1.msra.mxu0 0.0
    %2646 = vmatprep.subr.mxu0 0.0
    %2647 = vmatpush1.msra.mxu0 0.0
    %2648 = vmatprep.subr.mxu0 0.0
    %2649 = vmatpush1.msra.mxu0 0.0
    %2650 = vmatprep.subr.mxu0 0.0
    %2651 = vmatpush1.msra.mxu0 0.0
    %2652 = vmatprep.subr.mxu0 0.0
    %2653 = vmatpush1.msra.mxu0 0.0
    %2654 = vmatprep.subr.mxu0 0.0
    %2655 = vmatpush1.msra.mxu0 0.0
    %2656 = vmatprep.mubr.f32.mxu0 0.0
    %2657 = vmatmul.mubr.f32.gmra.mrb[0].mxu0 %v2590
    %v2658 = vpop.f32.mrb[0].mxu0
    %v2659 = vadd.f32 %v2422, %v2658
    %v2660 = vpop.f32.mrb[0].mxu0
    %2661 = vdwg.mxu0
    %v2662 = vxor.u32 %v2659, 2147483648
    %v2663 = vmul.f32 %v2662, 1.442695
    %v2664 = vpow.pop %v2663
    %v2665 = vadd.f32 %v2664, 1.0
    %v2666 = vrcp.pop %v2665
    %v2667 = vmul.f32 1.0, %v2666
    %v2668 = vtanh.pop %v2659
    %2670 = vrot.lane.b32.xlu0 %v2668, 64
    %v2671 = vpop.permute.xlu0 %2670
    %v2673 = vmul.f32 %v2667, %v2671
    %v2674 = vtanh.pop %v2673
    %2676 = vrot.lane.b32.xlu0 %v2674, 32
    %v2677 = vpop.permute.xlu0 %2676
    %v2679 = vmul.f32 %v2667, %v2677
    %2681 = vrot.lane.b32.xlu0 %v2679, 96
    %v2682 = vpop.permute.xlu0 %2681
    %v2683 = vsel %vm150, %v2682, 0
    %2685 = vmatprep.subr.mxu0 0.0
    %2686 = vmatpush1.msra.mxu0 %v243
    %2687 = vmatprep.subr.mxu0 0.0
    %2688 = vmatpush1.msra.mxu0 %v244
    %2689 = vmatprep.subr.mxu0 0.0
    %2690 = vmatpush1.msra.mxu0 %v245
    %2691 = vmatprep.subr.mxu0 0.0
    %2692 = vmatpush1.msra.mxu0 %v246
    %2693 = vmatprep.subr.mxu0 0.0
    %2694 = vmatpush1.msra.mxu0 0.0
    %2695 = vmatprep.subr.mxu0 0.0
    %2696 = vmatpush1.msra.mxu0 0.0
    %2697 = vmatprep.subr.mxu0 0.0
    %2698 = vmatpush1.msra.mxu0 0.0
    %2699 = vmatprep.subr.mxu0 0.0
    %2700 = vmatpush1.msra.mxu0 0.0
    %2701 = vmatprep.subr.mxu0 0.0
    %2702 = vmatpush1.msra.mxu0 0.0
    %2703 = vmatprep.subr.mxu0 0.0
    %2704 = vmatpush1.msra.mxu0 0.0
    %2705 = vmatprep.subr.mxu0 0.0
    %2706 = vmatpush1.msra.mxu0 0.0
    %2707 = vmatprep.subr.mxu0 0.0
    %2708 = vmatpush1.msra.mxu0 0.0
    %2709 = vmatprep.subr.mxu0 0.0
    %2710 = vmatpush1.msra.mxu0 0.0
    %2711 = vmatprep.subr.mxu0 0.0
    %2712 = vmatpush1.msra.mxu0 0.0
    %2713 = vmatprep.subr.mxu0 0.0
    %2714 = vmatpush1.msra.mxu0 0.0
    %2715 = vmatprep.subr.mxu0 0.0
    %2716 = vmatpush1.msra.mxu0 0.0
    %2717 = vmatprep.subr.mxu0 0.0
    %2718 = vmatpush1.msra.mxu0 0.0
    %2719 = vmatprep.subr.mxu0 0.0
    %2720 = vmatpush1.msra.mxu0 0.0
    %2721 = vmatprep.subr.mxu0 0.0
    %2722 = vmatpush1.msra.mxu0 0.0
    %2723 = vmatprep.subr.mxu0 0.0
    %2724 = vmatpush1.msra.mxu0 0.0
    %2725 = vmatprep.subr.mxu0 0.0
    %2726 = vmatpush1.msra.mxu0 0.0
    %2727 = vmatprep.subr.mxu0 0.0
    %2728 = vmatpush1.msra.mxu0 0.0
    %2729 = vmatprep.subr.mxu0 0.0
    %2730 = vmatpush1.msra.mxu0 0.0
    %2731 = vmatprep.subr.mxu0 0.0
    %2732 = vmatpush1.msra.mxu0 0.0
    %2733 = vmatprep.subr.mxu0 0.0
    %2734 = vmatpush1.msra.mxu0 0.0
    %2735 = vmatprep.subr.mxu0 0.0
    %2736 = vmatpush1.msra.mxu0 0.0
    %2737 = vmatprep.subr.mxu0 0.0
    %2738 = vmatpush1.msra.mxu0 0.0
    %2739 = vmatprep.subr.mxu0 0.0
    %2740 = vmatpush1.msra.mxu0 0.0
    %2741 = vmatprep.subr.mxu0 0.0
    %2742 = vmatpush1.msra.mxu0 0.0
    %2743 = vmatprep.subr.mxu0 0.0
    %2744 = vmatpush1.msra.mxu0 0.0
    %2745 = vmatprep.subr.mxu0 0.0
    %2746 = vmatpush1.msra.mxu0 0.0
    %2747 = vmatprep.subr.mxu0 0.0
    %2748 = vmatpush1.msra.mxu0 0.0
    %2749 = vmatprep.mubr.f32.mxu0 0.0
    %2750 = vmatmul.mubr.f32.gmra.mrb[0].mxu0 %v2683
    %v2751 = vpop.f32.mrb[0].mxu0
    %v2752 = vadd.f32 %v247, %v2751
    %v2753 = vpop.f32.mrb[0].mxu0
    %2754 = vdwg.mxu0
    %v2755 = vsel %vm657, %v2752, -inf
    %2756 = vmax.xlane.f32.xlu0 %v2755
    %v2757 = vpop.xlane.xlu0 %2756
    %v2758 = vsub.f32 %v2752, %v2757
    %v2759 = vmul.f32 %v2758, 1.442695
    %v2760 = vpow.pop %v2759
    %v2761 = vsel %vm657, %v2760, 0.0
    %2762 = vadd.xlane.f32.xlu0 %v2761
    %v2763 = vpop.xlane.xlu0 %2762
    %v2764 = vlog2.pop %v2763
    %v2765 = vmul.f32 %v2764, 0.6931472
    %v2766 = vadd.f32 %v2765, %v2757
    %v2767 = vsub.f32 %v2752, %v2766
    %v2768 = vrot.slane %v221, 6
    %v2769 = vrot.slane %v223, 6
    %2772 = vmatprep.subr.mxu0 %v228
    %2773 = vmatpush1.msra.mxu0 %v227
    %2774 = vmatprep.subr.mxu0 %v230
    %2775 = vmatpush1.msra.mxu0 %v229
    %2776 = vmatprep.subr.mxu0 %v232
    %2777 = vmatpush1.msra.mxu0 %v231
    %2778 = vmatprep.subr.mxu0 %v234
    %2779 = vmatpush1.msra.mxu0 %v233
    %2780 = vmatprep.subr.mxu0 0.0
    %2781 = vmatpush1.msra.mxu0 0.0
    %2782 = vmatprep.subr.mxu0 0.0
    %2783 = vmatpush1.msra.mxu0 0.0
    %2784 = vmatprep.subr.mxu0 0.0
    %2785 = vmatpush1.msra.mxu0 0.0
    %2786 = vmatprep.subr.mxu0 0.0
    %2787 = vmatpush1.msra.mxu0 0.0
    %2788 = vmatprep.subr.mxu0 0.0
    %2789 = vmatpush1.msra.mxu0 0.0
    %2790 = vmatprep.subr.mxu0 0.0
    %2791 = vmatpush1.msra.mxu0 0.0
    %2792 = vmatprep.subr.mxu0 0.0
    %2793 = vmatpush1.msra.mxu0 0.0
    %2794 = vmatprep.subr.mxu0 0.0
    %2795 = vmatpush1.msra.mxu0 0.0
    %2796 = vmatprep.subr.mxu0 0.0
    %2797 = vmatpush1.msra.mxu0 0.0
    %2798 = vmatprep.subr.mxu0 0.0
    %2799 = vmatpush1.msra.mxu0 0.0
    %2800 = vmatprep.subr.mxu0 0.0
    %2801 = vmatpush1.msra.mxu0 0.0
    %2802 = vmatprep.subr.mxu0 0.0
    %2803 = vmatpush1.msra.mxu0 0.0
    %2804 = vmatprep.subr.mxu0 0.0
    %2805 = vmatpush1.msra.mxu0 0.0
    %2806 = vmatprep.subr.mxu0 0.0
    %2807 = vmatpush1.msra.mxu0 0.0
    %2808 = vmatprep.subr.mxu0 0.0
    %2809 = vmatpush1.msra.mxu0 0.0
    %2810 = vmatprep.subr.mxu0 0.0
    %2811 = vmatpush1.msra.mxu0 0.0
    %2812 = vmatprep.subr.mxu0 0.0
    %2813 = vmatpush1.msra.mxu0 0.0
    %2814 = vmatprep.subr.mxu0 0.0
    %2815 = vmatpush1.msra.mxu0 0.0
    %2816 = vmatprep.subr.mxu0 0.0
    %2817 = vmatpush1.msra.mxu0 0.0
    %2818 = vmatprep.subr.mxu0 0.0
    %2819 = vmatpush1.msra.mxu0 0.0
    %2820 = vmatprep.subr.mxu0 0.0
    %2821 = vmatpush1.msra.mxu0 0.0
    %2822 = vmatprep.subr.mxu0 0.0
    %2823 = vmatpush1.msra.mxu0 0.0
    %2824 = vmatprep.subr.mxu0 0.0
    %2825 = vmatpush1.msra.mxu0 0.0
    %2826 = vmatprep.subr.mxu0 0.0
    %2827 = vmatpush1.msra.mxu0 0.0
    %2828 = vmatprep.subr.mxu0 0.0
    %2829 = vmatpush1.msra.mxu0 0.0
    %2830 = vmatprep.subr.mxu0 0.0
    %2831 = vmatpush1.msra.mxu0 0.0
    %2832 = vmatprep.subr.mxu0 0.0
    %2833 = vmatpush1.msra.mxu0 0.0
    %2834 = vmatprep.subr.mxu0 0.0
    %2835 = vmatpush1.msra.mxu0 0.0
    %2836 = vmatprep.mubr.f32.mxu0 0.0
    %2837 = vmatmul.mubr.f32.gmra.mrb[0].mxu0 %v2683
    %v2838 = vpop.f32.mrb[0].mxu0
    %v2839 = vadd.f32 %v2768, %v2838
    %v2840 = vpop.f32.mrb[0].mxu0
    %v2841 = vadd.f32 %v2769, %v2840
    %2842 = vdwg.mxu0
    %v2843 = vsel %vm323, %v2839, -inf
    %2844 = vmax.xlane.f32.xlu0 %v2843
    %v2845 = vpop.xlane.xlu0 %2844
    %v2846 = vsub.f32 %v2839, %v2845
    %v2847 = vmul.f32 %v2846, 1.442695
    %v2848 = vpow.pop %v2847
    %2850 = vrot.lane.b32.xlu0 %v2848, 96
    %v2851 = vpop.permute.xlu0 %2850
    %v2853 = vsel %vm334, %v2851, 0.0
    %2854 = vadd.xlane.f32.xlu0 %v2853
    %v2855 = vpop.xlane.xlu0 %2854
    %v2856 = vrcp.pop %v2855
    %v2857 = vmul.f32 %v2848, %v2856
    %2859 = vrot.lane.b32.xlu0 %v2857, 96
    %v2860 = vpop.permute.xlu0 %2859
    %v2861 = vsel %vm343, %v2860, 0
    %2863 = vmatprep.subr.mxu0 0.0
    %2864 = vmatpush1.msra.mxu0 %v225
    %2865 = vmatprep.subr.mxu0 0.0
    %2866 = vmatpush1.msra.mxu0 %v226
    %2867 = vmatprep.subr.mxu0 0.0
    %2868 = vmatpush1.msra.mxu0 0.0
    %2869 = vmatprep.subr.mxu0 0.0
    %2870 = vmatpush1.msra.mxu0 0.0
    %2871 = vmatprep.subr.mxu0 0.0
    %2872 = vmatpush1.msra.mxu0 0.0
    %2873 = vmatprep.subr.mxu0 0.0
    %2874 = vmatpush1.msra.mxu0 0.0
    %2875 = vmatprep.subr.mxu0 0.0
    %2876 = vmatpush1.msra.mxu0 0.0
    %2877 = vmatprep.subr.mxu0 0.0
    %2878 = vmatpush1.msra.mxu0 0.0
    %2879 = vmatprep.subr.mxu0 0.0
    %2880 = vmatpush1.msra.mxu0 0.0
    %2881 = vmatprep.subr.mxu0 0.0
    %2882 = vmatpush1.msra.mxu0 0.0
    %2883 = vmatprep.subr.mxu0 0.0
    %2884 = vmatpush1.msra.mxu0 0.0
    %2885 = vmatprep.subr.mxu0 0.0
    %2886 = vmatpush1.msra.mxu0 0.0
    %2887 = vmatprep.subr.mxu0 0.0
    %2888 = vmatpush1.msra.mxu0 0.0
    %2889 = vmatprep.subr.mxu0 0.0
    %2890 = vmatpush1.msra.mxu0 0.0
    %2891 = vmatprep.subr.mxu0 0.0
    %2892 = vmatpush1.msra.mxu0 0.0
    %2893 = vmatprep.subr.mxu0 0.0
    %2894 = vmatpush1.msra.mxu0 0.0
    %2895 = vmatprep.subr.mxu0 0.0
    %2896 = vmatpush1.msra.mxu0 0.0
    %2897 = vmatprep.subr.mxu0 0.0
    %2898 = vmatpush1.msra.mxu0 0.0
    %2899 = vmatprep.subr.mxu0 0.0
    %2900 = vmatpush1.msra.mxu0 0.0
    %2901 = vmatprep.subr.mxu0 0.0
    %2902 = vmatpush1.msra.mxu0 0.0
    %2903 = vmatprep.subr.mxu0 0.0
    %2904 = vmatpush1.msra.mxu0 0.0
    %2905 = vmatprep.subr.mxu0 0.0
    %2906 = vmatpush1.msra.mxu0 0.0
    %2907 = vmatprep.subr.mxu0 0.0
    %2908 = vmatpush1.msra.mxu0 0.0
    %2909 = vmatprep.subr.mxu0 0.0
    %2910 = vmatpush1.msra.mxu0 0.0
    %2911 = vmatprep.subr.mxu0 0.0
    %2912 = vmatpush1.msra.mxu0 0.0
    %2913 = vmatprep.subr.mxu0 0.0
    %2914 = vmatpush1.msra.mxu0 0.0
    %2915 = vmatprep.subr.mxu0 0.0
    %2916 = vmatpush1.msra.mxu0 0.0
    %2917 = vmatprep.subr.mxu0 0.0
    %2918 = vmatpush1.msra.mxu0 0.0
    %2919 = vmatprep.subr.mxu0 0.0
    %2920 = vmatpush1.msra.mxu0 0.0
    %2921 = vmatprep.subr.mxu0 0.0
    %2922 = vmatpush1.msra.mxu0 0.0
    %2923 = vmatprep.subr.mxu0 0.0
    %2924 = vmatpush1.msra.mxu0 0.0
    %2925 = vmatprep.subr.mxu0 0.0
    %2926 = vmatpush1.msra.mxu0 0.0
    %2927 = vmatprep.mubr.f32.mxu0 0.0
    %2928 = vmatmul.mubr.f32.gmra.mrb[0].mxu0 %v2861
    %v2929 = vpop.f32.mrb[0].mxu0
    %v2930 = vadd.f32 0.0, %v2929
    %v2931 = vpop.f32.mrb[0].mxu0
    %2932 = vdwg.mxu0
    %v2934 = vsel %vm150, %v2930, 0
    %2936 = vmatprep.subr.mxu0 0.0
    %2937 = vmatpush1.msra.mxu0 %v235
    %2938 = vmatprep.subr.mxu0 0.0
    %2939 = vmatpush1.msra.mxu0 %v236
    %2940 = vmatprep.subr.mxu0 0.0
    %2941 = vmatpush1.msra.mxu0 %v237
    %2942 = vmatprep.subr.mxu0 0.0
    %2943 = vmatpush1.msra.mxu0 %v238
    %2944 = vmatprep.subr.mxu0 0.0
    %2945 = vmatpush1.msra.mxu0 0.0
    %2946 = vmatprep.subr.mxu0 0.0
    %2947 = vmatpush1.msra.mxu0 0.0
    %2948 = vmatprep.subr.mxu0 0.0
    %2949 = vmatpush1.msra.mxu0 0.0
    %2950 = vmatprep.subr.mxu0 0.0
    %2951 = vmatpush1.msra.mxu0 0.0
    %2952 = vmatprep.subr.mxu0 0.0
    %2953 = vmatpush1.msra.mxu0 0.0
    %2954 = vmatprep.subr.mxu0 0.0
    %2955 = vmatpush1.msra.mxu0 0.0
    %2956 = vmatprep.subr.mxu0 0.0
    %2957 = vmatpush1.msra.mxu0 0.0
    %2958 = vmatprep.subr.mxu0 0.0
    %2959 = vmatpush1.msra.mxu0 0.0
    %2960 = vmatprep.subr.mxu0 0.0
    %2961 = vmatpush1.msra.mxu0 0.0
    %2962 = vmatprep.subr.mxu0 0.0
    %2963 = vmatpush1.msra.mxu0 0.0
    %2964 = vmatprep.subr.mxu0 0.0
    %2965 = vmatpush1.msra.mxu0 0.0
    %2966 = vmatprep.subr.mxu0 0.0
    %2967 = vmatpush1.msra.mxu0 0.0
    %2968 = vmatprep.subr.mxu0 0.0
    %2969 = vmatpush1.msra.mxu0 0.0
    %2970 = vmatprep.subr.mxu0 0.0
    %2971 = vmatpush1.msra.mxu0 0.0
    %2972 = vmatprep.subr.mxu0 0.0
    %2973 = vmatpush1.msra.mxu0 0.0
    %2974 = vmatprep.subr.mxu0 0.0
    %2975 = vmatpush1.msra.mxu0 0.0
    %2976 = vmatprep.subr.mxu0 0.0
    %2977 = vmatpush1.msra.mxu0 0.0
    %2978 = vmatprep.subr.mxu0 0.0
    %2979 = vmatpush1.msra.mxu0 0.0
    %2980 = vmatprep.subr.mxu0 0.0
    %2981 = vmatpush1.msra.mxu0 0.0
    %2982 = vmatprep.subr.mxu0 0.0
    %2983 = vmatpush1.msra.mxu0 0.0
    %2984 = vmatprep.subr.mxu0 0.0
    %2985 = vmatpush1.msra.mxu0 0.0
    %2986 = vmatprep.subr.mxu0 0.0
    %2987 = vmatpush1.msra.mxu0 0.0
    %2988 = vmatprep.subr.mxu0 0.0
    %2989 = vmatpush1.msra.mxu0 0.0
    %2990 = vmatprep.subr.mxu0 0.0
    %2991 = vmatpush1.msra.mxu0 0.0
    %2992 = vmatprep.subr.mxu0 0.0
    %2993 = vmatpush1.msra.mxu0 0.0
    %2994 = vmatprep.subr.mxu0 0.0
    %2995 = vmatpush1.msra.mxu0 0.0
    %2996 = vmatprep.subr.mxu0 0.0
    %2997 = vmatpush1.msra.mxu0 0.0
    %2998 = vmatprep.subr.mxu0 0.0
    %2999 = vmatpush1.msra.mxu0 0.0
    %3000 = vmatprep.mubr.f32.mxu0 0.0
    %3001 = vmatmul.mubr.f32.gmra.mrb[0].mxu0 %v2934
    %v3002 = vpop.f32.mrb[0].mxu0
    %v3003 = vadd.f32 0.0, %v3002
    %v3004 = vpop.f32.mrb[0].mxu0
    %3005 = vdwg.mxu0
    %v3006 = vadd.f32 %v2839, %v3003
    %v3007 = vmax.f32 %v3006, 0.0
    %v3009 = vsel %vm150, %v3007, 0
    %3011 = vmatprep.subr.mxu0 0.0
    %3012 = vmatpush1.msra.mxu0 %v239
    %3013 = vmatprep.subr.mxu0 0.0
    %3014 = vmatpush1.msra.mxu0 %v240
    %3015 = vmatprep.subr.mxu0 0.0
    %3016 = vmatpush1.msra.mxu0 %v241
    %3017 = vmatprep.subr.mxu0 0.0
    %3018 = vmatpush1.msra.mxu0 %v242
    %3019 = vmatprep.subr.mxu0 0.0
    %3020 = vmatpush1.msra.mxu0 0.0
    %3021 = vmatprep.subr.mxu0 0.0
    %3022 = vmatpush1.msra.mxu0 0.0
    %3023 = vmatprep.subr.mxu0 0.0
    %3024 = vmatpush1.msra.mxu0 0.0
    %3025 = vmatprep.subr.mxu0 0.0
    %3026 = vmatpush1.msra.mxu0 0.0
    %3027 = vmatprep.subr.mxu0 0.0
    %3028 = vmatpush1.msra.mxu0 0.0
    %3029 = vmatprep.subr.mxu0 0.0
    %3030 = vmatpush1.msra.mxu0 0.0
    %3031 = vmatprep.subr.mxu0 0.0
    %3032 = vmatpush1.msra.mxu0 0.0
    %3033 = vmatprep.subr.mxu0 0.0
    %3034 = vmatpush1.msra.mxu0 0.0
    %3035 = vmatprep.subr.mxu0 0.0
    %3036 = vmatpush1.msra.mxu0 0.0
    %3037 = vmatprep.subr.mxu0 0.0
    %3038 = vmatpush1.msra.mxu0 0.0
    %3039 = vmatprep.subr.mxu0 0.0
    %3040 = vmatpush1.msra.mxu0 0.0
    %3041 = vmatprep.subr.mxu0 0.0
    %3042 = vmatpush1.msra.mxu0 0.0
    %3043 = vmatprep.subr.mxu0 0.0
    %3044 = vmatpush1.msra.mxu0 0.0
    %3045 = vmatprep.subr.mxu0 0.0
    %3046 = vmatpush1.msra.mxu0 0.0
    %3047 = vmatprep.subr.mxu0 0.0
    %3048 = vmatpush1.msra.mxu0 0.0
    %3049 = vmatprep.subr.mxu0 0.0
    %3050 = vmatpush1.msra.mxu0 0.0
    %3051 = vmatprep.subr.mxu0 0.0
    %3052 = vmatpush1.msra.mxu0 0.0
    %3053 = vmatprep.subr.mxu0 0.0
    %3054 = vmatpush1.msra.mxu0 0.0
    %3055 = vmatprep.subr.mxu0 0.0
    %3056 = vmatpush1.msra.mxu0 0.0
    %3057 = vmatprep.subr.mxu0 0.0
    %3058 = vmatpush1.msra.mxu0 0.0
    %3059 = vmatprep.subr.mxu0 0.0
    %3060 = vmatpush1.msra.mxu0 0.0
    %3061 = vmatprep.subr.mxu0 0.0
    %3062 = vmatpush1.msra.mxu0 0.0
    %3063 = vmatprep.subr.mxu0 0.0
    %3064 = vmatpush1.msra.mxu0 0.0
    %3065 = vmatprep.subr.mxu0 0.0
    %3066 = vmatpush1.msra.mxu0 0.0
    %3067 = vmatprep.subr.mxu0 0.0
    %3068 = vmatpush1.msra.mxu0 0.0
    %3069 = vmatprep.subr.mxu0 0.0
    %3070 = vmatpush1.msra.mxu0 0.0
    %3071 = vmatprep.subr.mxu0 0.0
    %3072 = vmatpush1.msra.mxu0 0.0
    %3073 = vmatprep.subr.mxu0 0.0
    %3074 = vmatpush1.msra.mxu0 0.0
    %3075 = vmatprep.mubr.f32.mxu0 0.0
    %3076 = vmatmul.mubr.f32.gmra.mrb[0].mxu0 %v3009
    %v3077 = vpop.f32.mrb[0].mxu0
    %v3078 = vadd.f32 %v2841, %v3077
    %v3079 = vpop.f32.mrb[0].mxu0
    %3080 = vdwg.mxu0
    %v3081 = vxor.u32 %v3078, 2147483648
    %v3082 = vmul.f32 %v3081, 1.442695
    %v3083 = vpow.pop %v3082
    %v3084 = vadd.f32 %v3083, 1.0
    %v3085 = vrcp.pop %v3084
    %v3086 = vmul.f32 1.0, %v3085
    %v3087 = vtanh.pop %v3078
    %3089 = vrot.lane.b32.xlu0 %v3087, 64
    %v3090 = vpop.permute.xlu0 %3089
    %v3092 = vmul.f32 %v3086, %v3090
    %v3093 = vtanh.pop %v3092
    %3095 = vrot.lane.b32.xlu0 %v3093, 32
    %v3096 = vpop.permute.xlu0 %3095
    %v3098 = vmul.f32 %v3086, %v3096
    %3100 = vrot.lane.b32.xlu0 %v3098, 96
    %v3101 = vpop.permute.xlu0 %3100
    %v3102 = vsel %vm150, %v3101, 0
    %3104 = vmatprep.subr.mxu0 0.0
    %3105 = vmatpush1.msra.mxu0 %v243
    %3106 = vmatprep.subr.mxu0 0.0
    %3107 = vmatpush1.msra.mxu0 %v244
    %3108 = vmatprep.subr.mxu0 0.0
    %3109 = vmatpush1.msra.mxu0 %v245
    %3110 = vmatprep.subr.mxu0 0.0
    %3111 = vmatpush1.msra.mxu0 %v246
    %3112 = vmatprep.subr.mxu0 0.0
    %3113 = vmatpush1.msra.mxu0 0.0
    %3114 = vmatprep.subr.mxu0 0.0
    %3115 = vmatpush1.msra.mxu0 0.0
    %3116 = vmatprep.subr.mxu0 0.0
    %3117 = vmatpush1.msra.mxu0 0.0
    %3118 = vmatprep.subr.mxu0 0.0
    %3119 = vmatpush1.msra.mxu0 0.0
    %3120 = vmatprep.subr.mxu0 0.0
    %3121 = vmatpush1.msra.mxu0 0.0
    %3122 = vmatprep.subr.mxu0 0.0
    %3123 = vmatpush1.msra.mxu0 0.0
    %3124 = vmatprep.subr.mxu0 0.0
    %3125 = vmatpush1.msra.mxu0 0.0
    %3126 = vmatprep.subr.mxu0 0.0
    %3127 = vmatpush1.msra.mxu0 0.0
    %3128 = vmatprep.subr.mxu0 0.0
    %3129 = vmatpush1.msra.mxu0 0.0
    %3130 = vmatprep.subr.mxu0 0.0
    %3131 = vmatpush1.msra.mxu0 0.0
    %3132 = vmatprep.subr.mxu0 0.0
    %3133 = vmatpush1.msra.mxu0 0.0
    %3134 = vmatprep.subr.mxu0 0.0
    %3135 = vmatpush1.msra.mxu0 0.0
    %3136 = vmatprep.subr.mxu0 0.0
    %3137 = vmatpush1.msra.mxu0 0.0
    %3138 = vmatprep.subr.mxu0 0.0
    %3139 = vmatpush1.msra.mxu0 0.0
    %3140 = vmatprep.subr.mxu0 0.0
    %3141 = vmatpush1.msra.mxu0 0.0
    %3142 = vmatprep.subr.mxu0 0.0
    %3143 = vmatpush1.msra.mxu0 0.0
    %3144 = vmatprep.subr.mxu0 0.0
    %3145 = vmatpush1.msra.mxu0 0.0
    %3146 = vmatprep.subr.mxu0 0.0
    %3147 = vmatpush1.msra.mxu0 0.0
    %3148 = vmatprep.subr.mxu0 0.0
    %3149 = vmatpush1.msra.mxu0 0.0
    %3150 = vmatprep.subr.mxu0 0.0
    %3151 = vmatpush1.msra.mxu0 0.0
    %3152 = vmatprep.subr.mxu0 0.0
    %3153 = vmatpush1.msra.mxu0 0.0
    %3154 = vmatprep.subr.mxu0 0.0
    %3155 = vmatpush1.msra.mxu0 0.0
    %3156 = vmatprep.subr.mxu0 0.0
    %3157 = vmatpush1.msra.mxu0 0.0
    %3158 = vmatprep.subr.mxu0 0.0
    %3159 = vmatpush1.msra.mxu0 0.0
    %3160 = vmatprep.subr.mxu0 0.0
    %3161 = vmatpush1.msra.mxu0 0.0
    %3162 = vmatprep.subr.mxu0 0.0
    %3163 = vmatpush1.msra.mxu0 0.0
    %3164 = vmatprep.subr.mxu0 0.0
    %3165 = vmatpush1.msra.mxu0 0.0
    %3166 = vmatprep.subr.mxu0 0.0
    %3167 = vmatpush1.msra.mxu0 0.0
    %3168 = vmatprep.mubr.f32.mxu0 0.0
    %3169 = vmatmul.mubr.f32.gmra.mrb[0].mxu0 %v3102
    %v3170 = vpop.f32.mrb[0].mxu0
    %v3171 = vadd.f32 %v247, %v3170
    %v3172 = vpop.f32.mrb[0].mxu0
    %3173 = vdwg.mxu0
    %v3174 = vsel %vm657, %v3171, -inf
    %3175 = vmax.xlane.f32.xlu0 %v3174
    %v3176 = vpop.xlane.xlu0 %3175
    %v3177 = vsub.f32 %v3171, %v3176
    %v3178 = vmul.f32 %v3177, 1.442695
    %v3179 = vpow.pop %v3178
    %v3180 = vsel %vm657, %v3179, 0.0
    %3181 = vadd.xlane.f32.xlu0 %v3180
    %v3182 = vpop.xlane.xlu0 %3181
    %v3183 = vlog2.pop %v3182
    %v3184 = vmul.f32 %v3183, 0.6931472
    %v3185 = vadd.f32 %v3184, %v3176
    %v3186 = vsub.f32 %v3171, %v3185
    %v3187 = vrot.slane %v221, 7
    %v3188 = vrot.slane %v223, 7
    %3191 = vmatprep.subr.mxu0 %v228
    %3192 = vmatpush1.msra.mxu0 %v227
    %3193 = vmatprep.subr.mxu0 %v230
    %3194 = vmatpush1.msra.mxu0 %v229
    %3195 = vmatprep.subr.mxu0 %v232
    %3196 = vmatpush1.msra.mxu0 %v231
    %3197 = vmatprep.subr.mxu0 %v234
    %3198 = vmatpush1.msra.mxu0 %v233
    %3199 = vmatprep.subr.mxu0 0.0
    %3200 = vmatpush1.msra.mxu0 0.0
    %3201 = vmatprep.subr.mxu0 0.0
    %3202 = vmatpush1.msra.mxu0 0.0
    %3203 = vmatprep.subr.mxu0 0.0
    %3204 = vmatpush1.msra.mxu0 0.0
    %3205 = vmatprep.subr.mxu0 0.0
    %3206 = vmatpush1.msra.mxu0 0.0
    %3207 = vmatprep.subr.mxu0 0.0
    %3208 = vmatpush1.msra.mxu0 0.0
    %3209 = vmatprep.subr.mxu0 0.0
    %3210 = vmatpush1.msra.mxu0 0.0
    %3211 = vmatprep.subr.mxu0 0.0
    %3212 = vmatpush1.msra.mxu0 0.0
    %3213 = vmatprep.subr.mxu0 0.0
    %3214 = vmatpush1.msra.mxu0 0.0
    %3215 = vmatprep.subr.mxu0 0.0
    %3216 = vmatpush1.msra.mxu0 0.0
    %3217 = vmatprep.subr.mxu0 0.0
    %3218 = vmatpush1.msra.mxu0 0.0
    %3219 = vmatprep.subr.mxu0 0.0
    %3220 = vmatpush1.msra.mxu0 0.0
    %3221 = vmatprep.subr.mxu0 0.0
    %3222 = vmatpush1.msra.mxu0 0.0
    %3223 = vmatprep.subr.mxu0 0.0
    %3224 = vmatpush1.msra.mxu0 0.0
    %3225 = vmatprep.subr.mxu0 0.0
    %3226 = vmatpush1.msra.mxu0 0.0
    %3227 = vmatprep.subr.mxu0 0.0
    %3228 = vmatpush1.msra.mxu0 0.0
    %3229 = vmatprep.subr.mxu0 0.0
    %3230 = vmatpush1.msra.mxu0 0.0
    %3231 = vmatprep.subr.mxu0 0.0
    %3232 = vmatpush1.msra.mxu0 0.0
    %3233 = vmatprep.subr.mxu0 0.0
    %3234 = vmatpush1.msra.mxu0 0.0
    %3235 = vmatprep.subr.mxu0 0.0
    %3236 = vmatpush1.msra.mxu0 0.0
    %3237 = vmatprep.subr.mxu0 0.0
    %3238 = vmatpush1.msra.mxu0 0.0
    %3239 = vmatprep.subr.mxu0 0.0
    %3240 = vmatpush1.msra.mxu0 0.0
    %3241 = vmatprep.subr.mxu0 0.0
    %3242 = vmatpush1.msra.mxu0 0.0
    %3243 = vmatprep.subr.mxu0 0.0
    %3244 = vmatpush1.msra.mxu0 0.0
    %3245 = vmatprep.subr.mxu0 0.0
    %3246 = vmatpush1.msra.mxu0 0.0
    %3247 = vmatprep.subr.mxu0 0.0
    %3248 = vmatpush1.msra.mxu0 0.0
    %3249 = vmatprep.subr.mxu0 0.0
    %3250 = vmatpush1.msra.mxu0 0.0
    %3251 = vmatprep.subr.mxu0 0.0
    %3252 = vmatpush1.msra.mxu0 0.0
    %3253 = vmatprep.subr.mxu0 0.0
    %3254 = vmatpush1.msra.mxu0 0.0
    %3255 = vmatprep.mubr.f32.mxu0 0.0
    %3256 = vmatmul.mubr.f32.gmra.mrb[0].mxu0 %v3102
    %v3257 = vpop.f32.mrb[0].mxu0
    %v3258 = vadd.f32 %v3187, %v3257
    %v3259 = vpop.f32.mrb[0].mxu0
    %v3260 = vadd.f32 %v3188, %v3259
    %3261 = vdwg.mxu0
    %v3262 = vsel %vm323, %v3258, -inf
    %3263 = vmax.xlane.f32.xlu0 %v3262
    %v3264 = vpop.xlane.xlu0 %3263
    %v3265 = vsub.f32 %v3258, %v3264
    %v3266 = vmul.f32 %v3265, 1.442695
    %v3267 = vpow.pop %v3266
    %3269 = vrot.lane.b32.xlu0 %v3267, 96
    %v3270 = vpop.permute.xlu0 %3269
    %v3272 = vsel %vm334, %v3270, 0.0
    %3273 = vadd.xlane.f32.xlu0 %v3272
    %v3274 = vpop.xlane.xlu0 %3273
    %v3275 = vrcp.pop %v3274
    %v3276 = vmul.f32 %v3267, %v3275
    %3278 = vrot.lane.b32.xlu0 %v3276, 96
    %v3279 = vpop.permute.xlu0 %3278
    %v3280 = vsel %vm343, %v3279, 0
    %3282 = vmatprep.subr.mxu0 0.0
    %3283 = vmatpush1.msra.mxu0 %v225
    %3284 = vmatprep.subr.mxu0 0.0
    %3285 = vmatpush1.msra.mxu0 %v226
    %3286 = vmatprep.subr.mxu0 0.0
    %3287 = vmatpush1.msra.mxu0 0.0
    %3288 = vmatprep.subr.mxu0 0.0
    %3289 = vmatpush1.msra.mxu0 0.0
    %3290 = vmatprep.subr.mxu0 0.0
    %3291 = vmatpush1.msra.mxu0 0.0
    %3292 = vmatprep.subr.mxu0 0.0
    %3293 = vmatpush1.msra.mxu0 0.0
    %3294 = vmatprep.subr.mxu0 0.0
    %3295 = vmatpush1.msra.mxu0 0.0
    %3296 = vmatprep.subr.mxu0 0.0
    %3297 = vmatpush1.msra.mxu0 0.0
    %3298 = vmatprep.subr.mxu0 0.0
    %3299 = vmatpush1.msra.mxu0 0.0
    %3300 = vmatprep.subr.mxu0 0.0
    %3301 = vmatpush1.msra.mxu0 0.0
    %3302 = vmatprep.subr.mxu0 0.0
    %3303 = vmatpush1.msra.mxu0 0.0
    %3304 = vmatprep.subr.mxu0 0.0
    %3305 = vmatpush1.msra.mxu0 0.0
    %3306 = vmatprep.subr.mxu0 0.0
    %3307 = vmatpush1.msra.mxu0 0.0
    %3308 = vmatprep.subr.mxu0 0.0
    %3309 = vmatpush1.msra.mxu0 0.0
    %3310 = vmatprep.subr.mxu0 0.0
    %3311 = vmatpush1.msra.mxu0 0.0
    %3312 = vmatprep.subr.mxu0 0.0
    %3313 = vmatpush1.msra.mxu0 0.0
    %3314 = vmatprep.subr.mxu0 0.0
    %3315 = vmatpush1.msra.mxu0 0.0
    %3316 = vmatprep.subr.mxu0 0.0
    %3317 = vmatpush1.msra.mxu0 0.0
    %3318 = vmatprep.subr.mxu0 0.0
    %3319 = vmatpush1.msra.mxu0 0.0
    %3320 = vmatprep.subr.mxu0 0.0
    %3321 = vmatpush1.msra.mxu0 0.0
    %3322 = vmatprep.subr.mxu0 0.0
    %3323 = vmatpush1.msra.mxu0 0.0
    %3324 = vmatprep.subr.mxu0 0.0
    %3325 = vmatpush1.msra.mxu0 0.0
    %3326 = vmatprep.subr.mxu0 0.0
    %3327 = vmatpush1.msra.mxu0 0.0
    %3328 = vmatprep.subr.mxu0 0.0
    %3329 = vmatpush1.msra.mxu0 0.0
    %3330 = vmatprep.subr.mxu0 0.0
    %3331 = vmatpush1.msra.mxu0 0.0
    %3332 = vmatprep.subr.mxu0 0.0
    %3333 = vmatpush1.msra.mxu0 0.0
    %3334 = vmatprep.subr.mxu0 0.0
    %3335 = vmatpush1.msra.mxu0 0.0
    %3336 = vmatprep.subr.mxu0 0.0
    %3337 = vmatpush1.msra.mxu0 0.0
    %3338 = vmatprep.subr.mxu0 0.0
    %3339 = vmatpush1.msra.mxu0 0.0
    %3340 = vmatprep.subr.mxu0 0.0
    %3341 = vmatpush1.msra.mxu0 0.0
    %3342 = vmatprep.subr.mxu0 0.0
    %3343 = vmatpush1.msra.mxu0 0.0
    %3344 = vmatprep.subr.mxu0 0.0
    %3345 = vmatpush1.msra.mxu0 0.0
    %3346 = vmatprep.mubr.f32.mxu0 0.0
    %3347 = vmatmul.mubr.f32.gmra.mrb[0].mxu0 %v3280
    %v3348 = vpop.f32.mrb[0].mxu0
    %v3349 = vadd.f32 0.0, %v3348
    %v3350 = vpop.f32.mrb[0].mxu0
    %3351 = vdwg.mxu0
    %v3353 = vsel %vm150, %v3349, 0
    %3355 = vmatprep.subr.mxu0 0.0
    %3356 = vmatpush1.msra.mxu0 %v235
    %3357 = vmatprep.subr.mxu0 0.0
    %3358 = vmatpush1.msra.mxu0 %v236
    %3359 = vmatprep.subr.mxu0 0.0
    %3360 = vmatpush1.msra.mxu0 %v237
    %3361 = vmatprep.subr.mxu0 0.0
    %3362 = vmatpush1.msra.mxu0 %v238
    %3363 = vmatprep.subr.mxu0 0.0
    %3364 = vmatpush1.msra.mxu0 0.0
    %3365 = vmatprep.subr.mxu0 0.0
    %3366 = vmatpush1.msra.mxu0 0.0
    %3367 = vmatprep.subr.mxu0 0.0
    %3368 = vmatpush1.msra.mxu0 0.0
    %3369 = vmatprep.subr.mxu0 0.0
    %3370 = vmatpush1.msra.mxu0 0.0
    %3371 = vmatprep.subr.mxu0 0.0
    %3372 = vmatpush1.msra.mxu0 0.0
    %3373 = vmatprep.subr.mxu0 0.0
    %3374 = vmatpush1.msra.mxu0 0.0
    %3375 = vmatprep.subr.mxu0 0.0
    %3376 = vmatpush1.msra.mxu0 0.0
    %3377 = vmatprep.subr.mxu0 0.0
    %3378 = vmatpush1.msra.mxu0 0.0
    %3379 = vmatprep.subr.mxu0 0.0
    %3380 = vmatpush1.msra.mxu0 0.0
    %3381 = vmatprep.subr.mxu0 0.0
    %3382 = vmatpush1.msra.mxu0 0.0
    %3383 = vmatprep.subr.mxu0 0.0
    %3384 = vmatpush1.msra.mxu0 0.0
    %3385 = vmatprep.subr.mxu0 0.0
    %3386 = vmatpush1.msra.mxu0 0.0
    %3387 = vmatprep.subr.mxu0 0.0
    %3388 = vmatpush1.msra.mxu0 0.0
    %3389 = vmatprep.subr.mxu0 0.0
    %3390 = vmatpush1.msra.mxu0 0.0
    %3391 = vmatprep.subr.mxu0 0.0
    %3392 = vmatpush1.msra.mxu0 0.0
    %3393 = vmatprep.subr.mxu0 0.0
    %3394 = vmatpush1.msra.mxu0 0.0
    %3395 = vmatprep.subr.mxu0 0.0
    %3396 = vmatpush1.msra.mxu0 0.0
    %3397 = vmatprep.subr.mxu0 0.0
    %3398 = vmatpush1.msra.mxu0 0.0
    %3399 = vmatprep.subr.mxu0 0.0
    %3400 = vmatpush1.msra.mxu0 0.0
    %3401 = vmatprep.subr.mxu0 0.0
    %3402 = vmatpush1.msra.mxu0 0.0
    %3403 = vmatprep.subr.mxu0 0.0
    %3404 = vmatpush1.msra.mxu0 0.0
    %3405 = vmatprep.subr.mxu0 0.0
    %3406 = vmatpush1.msra.mxu0 0.0
    %3407 = vmatprep.subr.mxu0 0.0
    %3408 = vmatpush1.msra.mxu0 0.0
    %3409 = vmatprep.subr.mxu0 0.0
    %3410 = vmatpush1.msra.mxu0 0.0
    %3411 = vmatprep.subr.mxu0 0.0
    %3412 = vmatpush1.msra.mxu0 0.0
    %3413 = vmatprep.subr.mxu0 0.0
    %3414 = vmatpush1.msra.mxu0 0.0
    %3415 = vmatprep.subr.mxu0 0.0
    %3416 = vmatpush1.msra.mxu0 0.0
    %3417 = vmatprep.subr.mxu0 0.0
    %3418 = vmatpush1.msra.mxu0 0.0
    %3419 = vmatprep.mubr.f32.mxu0 0.0
    %3420 = vmatmul.mubr.f32.gmra.mrb[0].mxu0 %v3353
    %v3421 = vpop.f32.mrb[0].mxu0
    %v3422 = vadd.f32 0.0, %v3421
    %v3423 = vpop.f32.mrb[0].mxu0
    %3424 = vdwg.mxu0
    %v3425 = vadd.f32 %v3258, %v3422
    %v3426 = vmax.f32 %v3425, 0.0
    %v3428 = vsel %vm150, %v3426, 0
    %3430 = vmatprep.subr.mxu0 0.0
    %3431 = vmatpush1.msra.mxu0 %v239
    %3432 = vmatprep.subr.mxu0 0.0
    %3433 = vmatpush1.msra.mxu0 %v240
    %3434 = vmatprep.subr.mxu0 0.0
    %3435 = vmatpush1.msra.mxu0 %v241
    %3436 = vmatprep.subr.mxu0 0.0
    %3437 = vmatpush1.msra.mxu0 %v242
    %3438 = vmatprep.subr.mxu0 0.0
    %3439 = vmatpush1.msra.mxu0 0.0
    %3440 = vmatprep.subr.mxu0 0.0
    %3441 = vmatpush1.msra.mxu0 0.0
    %3442 = vmatprep.subr.mxu0 0.0
    %3443 = vmatpush1.msra.mxu0 0.0
    %3444 = vmatprep.subr.mxu0 0.0
    %3445 = vmatpush1.msra.mxu0 0.0
    %3446 = vmatprep.subr.mxu0 0.0
    %3447 = vmatpush1.msra.mxu0 0.0
    %3448 = vmatprep.subr.mxu0 0.0
    %3449 = vmatpush1.msra.mxu0 0.0
    %3450 = vmatprep.subr.mxu0 0.0
    %3451 = vmatpush1.msra.mxu0 0.0
    %3452 = vmatprep.subr.mxu0 0.0
    %3453 = vmatpush1.msra.mxu0 0.0
    %3454 = vmatprep.subr.mxu0 0.0
    %3455 = vmatpush1.msra.mxu0 0.0
    %3456 = vmatprep.subr.mxu0 0.0
    %3457 = vmatpush1.msra.mxu0 0.0
    %3458 = vmatprep.subr.mxu0 0.0
    %3459 = vmatpush1.msra.mxu0 0.0
    %3460 = vmatprep.subr.mxu0 0.0
    %3461 = vmatpush1.msra.mxu0 0.0
    %3462 = vmatprep.subr.mxu0 0.0
    %3463 = vmatpush1.msra.mxu0 0.0
    %3464 = vmatprep.subr.mxu0 0.0
    %3465 = vmatpush1.msra.mxu0 0.0
    %3466 = vmatprep.subr.mxu0 0.0
    %3467 = vmatpush1.msra.mxu0 0.0
    %3468 = vmatprep.subr.mxu0 0.0
    %3469 = vmatpush1.msra.mxu0 0.0
    %3470 = vmatprep.subr.mxu0 0.0
    %3471 = vmatpush1.msra.mxu0 0.0
    %3472 = vmatprep.subr.mxu0 0.0
    %3473 = vmatpush1.msra.mxu0 0.0
    %3474 = vmatprep.subr.mxu0 0.0
    %3475 = vmatpush1.msra.mxu0 0.0
    %3476 = vmatprep.subr.mxu0 0.0
    %3477 = vmatpush1.msra.mxu0 0.0
    %3478 = vmatprep.subr.mxu0 0.0
    %3479 = vmatpush1.msra.mxu0 0.0
    %3480 = vmatprep.subr.mxu0 0.0
    %3481 = vmatpush1.msra.mxu0 0.0
    %3482 = vmatprep.subr.mxu0 0.0
    %3483 = vmatpush1.msra.mxu0 0.0
    %3484 = vmatprep.subr.mxu0 0.0
    %3485 = vmatpush1.msra.mxu0 0.0
    %3486 = vmatprep.subr.mxu0 0.0
    %3487 = vmatpush1.msra.mxu0 0.0
    %3488 = vmatprep.subr.mxu0 0.0
    %3489 = vmatpush1.msra.mxu0 0.0
    %3490 = vmatprep.subr.mxu0 0.0
    %3491 = vmatpush1.msra.mxu0 0.0
    %3492 = vmatprep.subr.mxu0 0.0
    %3493 = vmatpush1.msra.mxu0 0.0
    %3494 = vmatprep.mubr.f32.mxu0 0.0
    %3495 = vmatmul.mubr.f32.gmra.mrb[0].mxu0 %v3428
    %v3496 = vpop.f32.mrb[0].mxu0
    %v3497 = vadd.f32 %v3260, %v3496
    %v3498 = vpop.f32.mrb[0].mxu0
    %3499 = vdwg.mxu0
    %v3500 = vxor.u32 %v3497, 2147483648
    %v3501 = vmul.f32 %v3500, 1.442695
    %v3502 = vpow.pop %v3501
    %v3503 = vadd.f32 %v3502, 1.0
    %v3504 = vrcp.pop %v3503
    %v3505 = vmul.f32 1.0, %v3504
    %v3506 = vtanh.pop %v3497
    %3508 = vrot.lane.b32.xlu0 %v3506, 64
    %v3509 = vpop.permute.xlu0 %3508
    %v3511 = vmul.f32 %v3505, %v3509
    %v3512 = vtanh.pop %v3511
    %3514 = vrot.lane.b32.xlu0 %v3512, 32
    %v3515 = vpop.permute.xlu0 %3514
    %v3517 = vmul.f32 %v3505, %v3515
    %3519 = vrot.lane.b32.xlu0 %v3517, 96
    %v3520 = vpop.permute.xlu0 %3519
    %v3521 = vsel %vm150, %v3520, 0
    %3523 = vmatprep.subr.mxu0 0.0
    %3524 = vmatpush1.msra.mxu0 %v243
    %3525 = vmatprep.subr.mxu0 0.0
    %3526 = vmatpush1.msra.mxu0 %v244
    %3527 = vmatprep.subr.mxu0 0.0
    %3528 = vmatpush1.msra.mxu0 %v245
    %3529 = vmatprep.subr.mxu0 0.0
    %3530 = vmatpush1.msra.mxu0 %v246
    %3531 = vmatprep.subr.mxu0 0.0
    %3532 = vmatpush1.msra.mxu0 0.0
    %3533 = vmatprep.subr.mxu0 0.0
    %3534 = vmatpush1.msra.mxu0 0.0
    %3535 = vmatprep.subr.mxu0 0.0
    %3536 = vmatpush1.msra.mxu0 0.0
    %3537 = vmatprep.subr.mxu0 0.0
    %3538 = vmatpush1.msra.mxu0 0.0
    %3539 = vmatprep.subr.mxu0 0.0
    %3540 = vmatpush1.msra.mxu0 0.0
    %3541 = vmatprep.subr.mxu0 0.0
    %3542 = vmatpush1.msra.mxu0 0.0
    %3543 = vmatprep.subr.mxu0 0.0
    %3544 = vmatpush1.msra.mxu0 0.0
    %3545 = vmatprep.subr.mxu0 0.0
    %3546 = vmatpush1.msra.mxu0 0.0
    %3547 = vmatprep.subr.mxu0 0.0
    %3548 = vmatpush1.msra.mxu0 0.0
    %3549 = vmatprep.subr.mxu0 0.0
    %3550 = vmatpush1.msra.mxu0 0.0
    %3551 = vmatprep.subr.mxu0 0.0
    %3552 = vmatpush1.msra.mxu0 0.0
    %3553 = vmatprep.subr.mxu0 0.0
    %3554 = vmatpush1.msra.mxu0 0.0
    %3555 = vmatprep.subr.mxu0 0.0
    %3556 = vmatpush1.msra.mxu0 0.0
    %3557 = vmatprep.subr.mxu0 0.0
    %3558 = vmatpush1.msra.mxu0 0.0
    %3559 = vmatprep.subr.mxu0 0.0
    %3560 = vmatpush1.msra.mxu0 0.0
    %3561 = vmatprep.subr.mxu0 0.0
    %3562 = vmatpush1.msra.mxu0 0.0
    %3563 = vmatprep.subr.mxu0 0.0
    %3564 = vmatpush1.msra.mxu0 0.0
    %3565 = vmatprep.subr.mxu0 0.0
    %3566 = vmatpush1.msra.mxu0 0.0
    %3567 = vmatprep.subr.mxu0 0.0
    %3568 = vmatpush1.msra.mxu0 0.0
    %3569 = vmatprep.subr.mxu0 0.0
    %3570 = vmatpush1.msra.mxu0 0.0
    %3571 = vmatprep.subr.mxu0 0.0
    %3572 = vmatpush1.msra.mxu0 0.0
    %3573 = vmatprep.subr.mxu0 0.0
    %3574 = vmatpush1.msra.mxu0 0.0
    %3575 = vmatprep.subr.mxu0 0.0
    %3576 = vmatpush1.msra.mxu0 0.0
    %3577 = vmatprep.subr.mxu0 0.0
    %3578 = vmatpush1.msra.mxu0 0.0
    %3579 = vmatprep.subr.mxu0 0.0
    %3580 = vmatpush1.msra.mxu0 0.0
    %3581 = vmatprep.subr.mxu0 0.0
    %3582 = vmatpush1.msra.mxu0 0.0
    %3583 = vmatprep.subr.mxu0 0.0
    %3584 = vmatpush1.msra.mxu0 0.0
    %3585 = vmatprep.subr.mxu0 0.0
    %3586 = vmatpush1.msra.mxu0 0.0
    %3587 = vmatprep.mubr.f32.mxu0 0.0
    %3588 = vmatmul.mubr.f32.gmra.mrb[0].mxu0 %v3521
    %v3589 = vpop.f32.mrb[0].mxu0
    %v3590 = vadd.f32 %v247, %v3589
    %v3591 = vpop.f32.mrb[0].mxu0
    %3592 = vdwg.mxu0
    %v3593 = vsel %vm657, %v3590, -inf
    %3594 = vmax.xlane.f32.xlu0 %v3593
    %v3595 = vpop.xlane.xlu0 %3594
    %v3596 = vsub.f32 %v3590, %v3595
    %v3597 = vmul.f32 %v3596, 1.442695
    %v3598 = vpow.pop %v3597
    %v3599 = vsel %vm657, %v3598, 0.0
    %3600 = vadd.xlane.f32.xlu0 %v3599
    %v3601 = vpop.xlane.xlu0 %3600
    %v3602 = vlog2.pop %v3601
    %v3603 = vmul.f32 %v3602, 0.6931472
    %v3604 = vadd.f32 %v3603, %v3595
    %v3605 = vsub.f32 %v3590, %v3604
    %v3607 = vrot.slane %v1091, 7
    %v3610 = vrot.slane %v1510, 6
    %v3613 = vrot.slane %v1929, 5
    %v3616 = vrot.slane %v2348, 4
    %v3619 = vrot.slane %v2767, 3
    %v3622 = vrot.slane %v3186, 2
    %v3625 = vrot.slane %v3605, 1
    %vm3627 = vcmask 1040384
    %v3628 = vsel %vm3627, %v670, %v3607
    %vm3629 = vcmask 1041408
    %v3630 = vsel %vm3629, %v3628, %v3610
    %vm3631 = vcmask 1042432
    %v3632 = vsel %vm3631, %v3630, %v3613
    %vm3633 = vcmask 1043456
    %v3634 = vsel %vm3633, %v3632, %v3616
    %vm3635 = vcmask 1044480
    %v3636 = vsel %vm3635, %v3634, %v3619
    %vm3637 = vcmask 1045504
    %v3638 = vsel %vm3637, %v3636, %v3622
    %vm3639 = vcmask 1046528
    %v3640 = vsel %vm3639, %v3638, %v3625
    %v3641 = vrot.slane %v1003, 7
    %v3643 = vrot.slane %v1422, 6
    %v3645 = vrot.slane %v1841, 5
    %v3647 = vrot.slane %v2260, 4
    %v3649 = vrot.slane %v2679, 3
    %v3651 = vrot.slane %v3098, 2
    %v3653 = vrot.slane %v3517, 1
    %v3655 = vsel %vm3627, %v581, %v3641
    %v3656 = vsel %vm3629, %v3655, %v3643
    %v3657 = vsel %vm3631, %v3656, %v3645
    %v3658 = vsel %vm3633, %v3657, %v3647
    %v3659 = vsel %vm3635, %v3658, %v3649
    %v3660 = vsel %vm3637, %v3659, %v3651
    %v3661 = vsel %vm3639, %v3660, %v3653
    %v3662 = vrot.slane %v762, 7
    %v3664 = vrot.slane %v1181, 6
    %v3666 = vrot.slane %v1600, 5
    %v3668 = vrot.slane %v2019, 4
    %v3670 = vrot.slane %v2438, 3
    %v3672 = vrot.slane %v2857, 2
    %v3674 = vrot.slane %v3276, 1
    %v3676 = vsel %vm3627, %v339, %v3662
    %v3677 = vsel %vm3629, %v3676, %v3664
    %v3678 = vsel %vm3631, %v3677, %v3666
    %v3679 = vsel %vm3633, %v3678, %v3668
    %v3680 = vsel %vm3635, %v3679, %v3670
    %v3681 = vsel %vm3637, %v3680, %v3672
    %v3682 = vsel %vm3639, %v3681, %v3674
    %3684 = vrot.lane.b32.xlu0 %v3661, 32
    %v3685 = vpop.permute.xlu0 %3684
    %3688 = vrot.lane.b32.xlu0 %v3682, 64
    %v3689 = vpop.permute.xlu0 %3688
    %vm3691 = vcmask 523264
    %v3692 = vsel %vm3691, %v3640, %v3685
    %vm3693 = vcmask 785408
    %v3694 = vsel %vm3693, %v3692, %v3689
    %vm3695 = vcmask 916480
    %v3696 = vsel %vm3695, %v3694, 0.0
    %3697 = vst [vmem:[#allocation14] sm:$0xff] %v3696
    // Predicated region
    $region70: #{tpu_custom_call.1} parent=1 // pred_check
      _
    $region71: #{tpu_custom_call.1} parent=1 // pred_check_branch
      %3699 = sbr.rel (0) target = $region73
    $region72: #{tpu_custom_call.1} parent=1 // pred_region
      %s3701 = ssub.s32 128, 128
      %3702 = vsyncadd [#allocation4], %s3701
      %s3704 = sshll.u32 [#allocation14], 4
      %s3705 = int_to_ptr.vmem [resolvable:$true] %s3704
      %3707 = dma.vmem_to_hbm [thread:$0]  %s3705, 128, %s10, [#allocation4]
    $region73: #{tpu_custom_call.1} parent=1 // pred_fallthru
      _
    // Predicated region
    $region74: #{tpu_custom_call.1} parent=1 // pred_check
      _
    $region75: #{tpu_custom_call.1} parent=1 // pred_check_branch
      %3709 = sbr.rel (0) target = $region77
    $region76: #{tpu_custom_call.1} parent=1 // pred_region
      %3710 = dma.done [#allocation4], 128
    $region77: #{tpu_custom_call.1} parent=1 // pred_fallthru
      _
    %3711 = vsyncpa [#allocation3], 1
    %3712 = vsyncpa [#allocation6], 1
    %3713 = vsyncpa [#allocation9], 1
    %3714 = vsyncpa [#allocation12], 1
    %3715 = vsyncpa [#allocation4], 1

</llo_original>
